<compile_context>
chip_gen: v5e
topology: v5e:2x2
jax: 0.10.0
libtpu: 0.0.40
codegen_flags: <defaults>
</compile_context>

<pallas_src>
import functools

import jax
import jax.numpy as jnp
from jax.experimental import pallas as pl
from jax.experimental.pallas import tpu as pltpu

LANES = 128          # padded channel width (lane-dense everywhere)
NEG_BIG = 1e30       # additive softmax mask magnitude


# --------------------------------------------------------------------------- #
# Kernel
# --------------------------------------------------------------------------- #
def encoder_kernel(x1_ref, adj_ref, ea_ref, w1_ref, w2_ref, sm_ref, out_ref,
                   *, heads, negative_slope=0.2):
    """Fused forward: GATv2Conv -> GATv2Conv -> PReLU (single invocation).

    Shapes (all f32, channel/lane dim padded to LANES=128):
      x1_ref : (N, F1P)         node features + constant-1 column (bias trick)
      adj_ref: (N, N)           dense adjacency mask, adj[dst, src] in {0,1}
      ea_ref : (N, N, 3)        dense edge attributes (dst, src, edge_dim)
      w1_ref : (2H, F1P, 128)   stacked [lin_l heads | lin_r heads], bias row folded in
      w2_ref : (2H, 128, 128)   same for layer 2 (bias row at lane index C)
      sm_ref : (S, 1, 1, 128)   packed small params: per layer [we (3H rows) | att (H)],
                                then bias1(+1.0 marker at lane C), bias2, PReLU weight
      out_ref: (N, 128)         lane-dense output; first C lanes carry the result
    """
    H = heads

    adj = adj_ref[...]                                   # (N, N)
    ea = ea_ref[...]                                     # (N, N, 3)
    sm = sm_ref[...]                                     # (S, 1, 1, 128)
    adj_b = adj[None, :, :]                              # (1, N, N)
    # Additive mask (computed once, shared by both layers); the later `* adj`
    # already zeroes masked terms, so exp-underflow here is enough.
    neg_b = ((adj - 1.0) * jnp.float32(NEG_BIG))[None, :, :]

    def gat_layer(xin, w, sm_off):
        # ---- stacked linear projections (lin_l / lin_r biases folded into matmul) --
        xb = jnp.broadcast_to(xin[None], (2 * H,) + xin.shape)          # (2H, N, F)
        proj = jnp.einsum('snf,sfc->snc', xb, w,
                          preferred_element_type=jnp.float32)           # (2H, N, 128)
        xl = proj[:H]                        # source-side  x_j   (H, N, 128)
        xr = proj[H:]                        # target-side  x_i   (H, N, 128)

        # ---- z = x_i + x_j + lin_edge(e_ij);  edge proj = 3 broadcast VPU FMAs -----
        z = xr[:, :, None, :] + xl[:, None, :, :]                       # (H, N, N, 128)
        for k in range(3):
            we_k = sm[sm_off + k * H: sm_off + (k + 1) * H]             # (H, 1, 1, 128)
            z = z + ea[None, :, :, k:k + 1] * we_k
        z = jnp.where(z > 0, z, negative_slope * z)                     # LeakyReLU

        # ---- per-head scores + masked softmax over source nodes j ------------------
        att = sm[sm_off + 3 * H: sm_off + 4 * H]                        # (H, 1, 1, 128)
        score = jnp.sum(z * att, axis=-1)                               # (H, N, N)
        score = score + neg_b
        score = score - jnp.max(score, axis=-1, keepdims=True)
        p = jnp.exp(score) * adj_b
        denom = jnp.maximum(jnp.sum(p, axis=-1, keepdims=True),
                            jnp.float32(1e-30))                         # NaN guard
        alpha = p * pl.reciprocal(denom, approx=True)                   # EUP reciprocal

        # ---- aggregate messages, mean over heads (concat=False) --------------------
        agg = jnp.einsum('hij,hjc->hic', alpha, xl,
                         preferred_element_type=jnp.float32)            # (H, N, 128)
        return jnp.mean(agg, axis=0)                                    # (N, 128)

    base = 8 * H                         # rows [0, 8H) are the two per-layer blocks
    # Layer 1 (+ bias; lane C of bias1 row holds the constant 1.0 used as the
    # layer-2 "bias input column").
    h = gat_layer(x1_ref[...], w1_ref[...], 0) + sm[base, 0]
    # Layer 2 (+ bias) and PReLU.
    out = gat_layer(h, w2_ref[...], 4 * H) + sm[base + 1, 0]
    a = sm[base + 2, 0]                                                 # PReLU weight
    out_ref[...] = jnp.where(out > 0, out, a * out)


# --------------------------------------------------------------------------- #
# Parameter / input packing (pure JAX glue; in a real model done once at load)
# --------------------------------------------------------------------------- #
def _pad_lanes(v, lanes=LANES):
    v = jnp.asarray(v, jnp.float32).reshape(-1)
    return jnp.zeros((lanes,), jnp.float32).at[:v.shape[0]].set(v)


def _pack_layer_weights(p, fin, bias_row, fp, heads, C):
    """(2H, fp, LANES): rows [0,fin) = head-major weights, row `bias_row` = bias."""
    wl = p['wl'].reshape(fin, heads, C).transpose(1, 0, 2)   # (H, fin, C)
    wr = p['wr'].reshape(fin, heads, C).transpose(1, 0, 2)
    bl = p['bl'].reshape(heads, C)
    br = p['br'].reshape(heads, C)
    w = jnp.zeros((2 * heads, fp, LANES), jnp.float32)
    w = w.at[:heads, :fin, :C].set(wl)
    w = w.at[heads:, :fin, :C].set(wr)
    w = w.at[:heads, bias_row, :C].set(bl)
    w = w.at[heads:, bias_row, :C].set(br)
    return w


def _pack_smalls(p1, p2, prelu_w, heads, C):
    """(S,1,1,LANES) slab; per layer: we rows (k-major, head-minor) then att rows."""
    rows = []
    for p in (p1, p2):
        we = p['we'].reshape(3, heads, C)
        for k in range(3):
            for h in range(heads):
                rows.append(_pad_lanes(we[k, h]))
        att = p['att'].reshape(heads, C)
        for h in range(heads):
            rows.append(_pad_lanes(att[h]))
    rows.append(_pad_lanes(p1['bias']).at[C].set(1.0))   # bias1 + constant-1 marker
    rows.append(_pad_lanes(p2['bias']))                  # bias2
    rows.append(_pad_lanes(prelu_w))                     # PReLU weight
    s = len(rows)
    s_pad = -(-s // 8) * 8
    slab = jnp.zeros((s_pad, LANES), jnp.float32).at[:s].set(jnp.stack(rows))
    return slab.reshape(s_pad, 1, 1, LANES)


def build_dense_graph(edge_index, edge_attr, num_nodes):
    """Dense adjacency + dense edge attrs with PyG-style self loops (fill='mean')."""
    src, dst = edge_index[0], edge_index[1]
    N = num_nodes
    adj = jnp.zeros((N, N), jnp.float32).at[dst, src].set(1.0)
    ea = jnp.zeros((N, N, 3), jnp.float32).at[dst, src].set(edge_attr)
    sum_in = jnp.zeros((N, 3), jnp.float32).at[dst].add(edge_attr)
    cnt_in = jnp.zeros((N,), jnp.float32).at[dst].add(1.0)
    mean_in = sum_in / jnp.maximum(cnt_in, 1.0)[:, None]
    diag = jnp.arange(N)
    adj = adj.at[diag, diag].set(1.0)
    ea = ea.at[diag, diag].set(mean_in)
    return adj, ea


def encoder_forward(x, edge_index, edge_attr, params1, params2, prelu_w,
                    *, heads, hidden):
    """Two-layer GATv2 Encoder forward as a single fused Pallas kernel."""
    N, fin = x.shape
    C, H = hidden, heads
    assert C + 1 <= LANES and fin + 1 <= LANES
    f1p = -(-(fin + 1) // 8) * 8

    adj, ea = build_dense_graph(edge_index, edge_attr, N)

    # x with a constant-1 column (layer-1 bias trick) padded to a multiple of 8.
    x1 = jnp.zeros((N, f1p), jnp.float32).at[:, :fin].set(x).at[:, fin].set(1.0)
    w1 = _pack_layer_weights(params1, fin, fin, f1p, H, C)
    w2 = _pack_layer_weights(params2, C, C, LANES, H, C)
    sm = _pack_smalls(params1, params2, prelu_w, H, C)

    kernel = functools.partial(encoder_kernel, heads=H)
    vmem = pl.BlockSpec(memory_space=pltpu.MemorySpace.VMEM)
    out = pl.pallas_call(
        kernel,
        out_shape=jax.ShapeDtypeStruct((N, LANES), jnp.float32),
        in_specs=[vmem] * 6,
        out_specs=vmem,
    )(x1, adj, ea, w1, w2, sm)
    return out[:, :C]


# --------------------------------------------------------------------------- #
# Synthetic params + pure-JAX reference (for numerical validation)
# --------------------------------------------------------------------------- #
def init_gat_params(key, f_in, hidden, heads, edge_dim=3):
    hc = heads * hidden
    k0, k1, k2, k3, k4, k5, k6 = jax.random.split(key, 7)
    s = lambda fan: 1.0 / jnp.sqrt(jnp.float32(fan))
    return dict(
        wl=jax.random.normal(k0, (f_in, hc), jnp.float32) * s(f_in),          # lin_l
        bl=jax.random.normal(k4, (hc,), jnp.float32) * 0.1,
        wr=jax.random.normal(k1, (f_in, hc), jnp.float32) * s(f_in),          # lin_r
        br=jax.random.normal(k5, (hc,), jnp.float32) * 0.1,
        we=jax.random.normal(k2, (edge_dim, hc), jnp.float32) * s(edge_dim),  # lin_edge
        att=jax.random.normal(k3, (heads, hidden), jnp.float32) * s(hidden),  # att
        bias=jax.random.normal(k6, (hidden,), jnp.float32) * 0.1,             # out bias
    )


def gatv2_dense_ref(x, adj, ea, p, heads, C, negative_slope=0.2):
    N = x.shape[0]
    xl = x @ p['wl'] + p['bl']
    xr = x @ p['wr'] + p['br']
    ep = ea.reshape(N * N, 3) @ p['we']
    out = jnp.zeros((N, C), jnp.float32)
    for h in range(heads):
        xlh = xl[:, h * C:(h + 1) * C]
        xrh = xr[:, h * C:(h + 1) * C]
        eph = ep[:, h * C:(h + 1) * C].reshape(N, N, C)
        z = xrh[:, None, :] + xlh[None, :, :] + eph
        z = jnp.where(z > 0, z, negative_slope * z)
        s = jnp.sum(z * p['att'][h], axis=-1)
        s = jnp.where(adj > 0, s, -jnp.inf)
        s = s - jnp.max(s, axis=1, keepdims=True)
        e = jnp.exp(s) * adj
        alpha = e / jnp.sum(e, axis=1, keepdims=True)
        out = out + alpha @ xlh
    return out / heads + p['bias']


def encoder_ref(x, edge_index, edge_attr, p1, p2, prelu_w, *, heads, hidden):
    adj, ea = build_dense_graph(edge_index, edge_attr, x.shape[0])
    h = gatv2_dense_ref(x, adj, ea, p1, heads, hidden)
    o = gatv2_dense_ref(h, adj, ea, p2, heads, hidden)
    return jnp.where(o > 0, o, prelu_w * o)


# --------------------------------------------------------------------------- #
# Self-contained test
# --------------------------------------------------------------------------- #
if __name__ == "__main__":
    key = jax.random.PRNGKey(0)
    N, in_channels, hidden_channels, heads = 16, 4, 32, 2

    # Deterministic small graph: node i -> (i+1)%N and i -> (i+3)%N
    # (no self loops, no duplicate edges, so the dense formulation is exact).
    src = jnp.concatenate([jnp.arange(N), jnp.arange(N)])
    dst = jnp.concatenate([(jnp.arange(N) + 1) % N, (jnp.arange(N) + 3) % N])
    edge_index = jnp.stack([src, dst]).astype(jnp.int32)      # (2, E), E = 32

    kx, ke, kp1, kp2 = jax.random.split(key, 4)
    x = jax.random.normal(kx, (N, in_channels), jnp.float32)
    edge_attr = jax.random.normal(ke, (edge_index.shape[1], 3), jnp.float32)

    params1 = init_gat_params(kp1, in_channels, hidden_channels, heads)
    params2 = init_gat_params(kp2, hidden_channels, hidden_channels, heads)
    prelu_w = 0.25 * jnp.ones((hidden_channels,), jnp.float32)  # nn.PReLU default init

    fwd = jax.jit(functools.partial(encoder_forward, heads=heads,
                                    hidden=hidden_channels))
    out = jax.block_until_ready(fwd(x, edge_index, edge_attr,
                                    params1, params2, prelu_w))
    assert out.shape == (N, hidden_channels)

    # Pure-JAX dense reference (loose tolerance covers the approx reciprocal).
    ref = encoder_ref(x, edge_index, edge_attr, params1, params2, prelu_w,
                      heads=heads, hidden=hidden_channels)
    err = float(jnp.max(jnp.abs(out - ref)))
    assert err < 5e-2, f"max abs error vs reference: {err}"

    print("KERNEL_OK")
</pallas_src>

<mosaic_0001>
module attributes {stable_mosaic.version = 11 : i64} {
  func.func @encoder_kernel(%arg0: memref<16x8xf32, #tpu.memory_space<vmem>>, %arg1: memref<16x16xf32, #tpu.memory_space<vmem>>, %arg2: memref<16x16x3xf32, #tpu.memory_space<vmem>>, %arg3: memref<4x8x128xf32, #tpu.memory_space<vmem>>, %arg4: memref<4x128x128xf32, #tpu.memory_space<vmem>>, %arg5: memref<24x1x1x128xf32, #tpu.memory_space<vmem>>, %arg6: memref<16x128xf32, #tpu.memory_space<vmem>>) attributes {dimension_semantics = [], scalar_prefetch = 0 : i64, scratch_operands = 0 : i64, tpu.core_type = #tpu.core_type<tc>} {
    %c0 = arith.constant 0 : index
    %c0_0 = arith.constant 0 : index
    %0 = vector.load %arg1[%c0, %c0_0] : memref<16x16xf32, #tpu.memory_space<vmem>>, vector<16x16xf32>
    %c0_1 = arith.constant 0 : index
    %c0_2 = arith.constant 0 : index
    %c0_3 = arith.constant 0 : index
    %1 = vector.load %arg2[%c0_1, %c0_2, %c0_3] : memref<16x16x3xf32, #tpu.memory_space<vmem>>, vector<16x16x3xf32>
    %c0_4 = arith.constant 0 : index
    %c0_5 = arith.constant 0 : index
    %c0_6 = arith.constant 0 : index
    %c0_7 = arith.constant 0 : index
    %2 = vector.load %arg5[%c0_4, %c0_5, %c0_6, %c0_7] : memref<24x1x1x128xf32, #tpu.memory_space<vmem>>, vector<24x1x1x128xf32>
    %3 = vector.shape_cast %0 : vector<16x16xf32> to vector<1x16x16xf32>
    %cst = arith.constant 1.000000e+00 : f32
    %4 = vector.broadcast %cst : f32 to vector<16x16xf32>
    %5 = arith.subf %0, %4 : vector<16x16xf32>
    %cst_8 = arith.constant 1.000000e+30 : f32
    %6 = vector.broadcast %cst_8 : f32 to vector<16x16xf32>
    %7 = arith.mulf %5, %6 : vector<16x16xf32>
    %8 = vector.shape_cast %7 : vector<16x16xf32> to vector<1x16x16xf32>
    %c0_9 = arith.constant 0 : index
    %c0_10 = arith.constant 0 : index
    %9 = vector.load %arg0[%c0_9, %c0_10] : memref<16x8xf32, #tpu.memory_space<vmem>>, vector<16x8xf32>
    %c0_11 = arith.constant 0 : index
    %c0_12 = arith.constant 0 : index
    %c0_13 = arith.constant 0 : index
    %10 = vector.load %arg3[%c0_11, %c0_12, %c0_13] : memref<4x8x128xf32, #tpu.memory_space<vmem>>, vector<4x8x128xf32>
    %11 = vector.shape_cast %9 : vector<16x8xf32> to vector<1x16x8xf32>
    %12 = vector.shape_cast %11 : vector<1x16x8xf32> to vector<1x16x8xf32>
    %13 = vector.broadcast %12 : vector<1x16x8xf32> to vector<4x16x8xf32>
    "tpu.trace_start"() <{level = 10 : i32, message = "snf,sfc->snc"}> : () -> ()
    %cst_14 = arith.constant dense<0.000000e+00> : vector<4x16x128xf32>
    %14 = tpu.matmul %13, %10, %cst_14 {dimension_numbers = #tpu.dot_dimension_numbers<[2], [1], [1], [2], [0, 0, 0, 1, 1, 2], [0], [0]>} : vector<4x16x8xf32>, vector<4x8x128xf32>, vector<4x16x128xf32> -> vector<4x16x128xf32>
    "tpu.trace_stop"() : () -> ()
    %15 = vector.extract_strided_slice %14 {offsets = [0, 0, 0], sizes = [2, 16, 128], strides = [1, 1, 1]} : vector<4x16x128xf32> to vector<2x16x128xf32>
    %16 = vector.extract_strided_slice %14 {offsets = [2, 0, 0], sizes = [2, 16, 128], strides = [1, 1, 1]} : vector<4x16x128xf32> to vector<2x16x128xf32>
    %17 = vector.shape_cast %16 : vector<2x16x128xf32> to vector<2x16x1x128xf32>
    %18 = vector.shape_cast %15 : vector<2x16x128xf32> to vector<2x1x16x128xf32>
    %19 = vector.broadcast %17 : vector<2x16x1x128xf32> to vector<2x16x16x128xf32>
    %20 = vector.broadcast %18 : vector<2x1x16x128xf32> to vector<2x16x16x128xf32>
    %21 = arith.addf %19, %20 : vector<2x16x16x128xf32>
    %22 = vector.extract_strided_slice %2 {offsets = [0, 0, 0, 0], sizes = [2, 1, 1, 128], strides = [1, 1, 1, 1]} : vector<24x1x1x128xf32> to vector<2x1x1x128xf32>
    %23 = vector.extract_strided_slice %1 {offsets = [0, 0, 0], sizes = [16, 16, 1], strides = [1, 1, 1]} : vector<16x16x3xf32> to vector<16x16x1xf32>
    %24 = vector.shape_cast %23 : vector<16x16x1xf32> to vector<1x16x16x1xf32>
    %25 = vector.broadcast %24 : vector<1x16x16x1xf32> to vector<2x16x16x128xf32>
    %26 = vector.broadcast %22 : vector<2x1x1x128xf32> to vector<2x16x16x128xf32>
    %27 = arith.mulf %25, %26 : vector<2x16x16x128xf32>
    %28 = arith.addf %21, %27 : vector<2x16x16x128xf32>
    %29 = vector.extract_strided_slice %2 {offsets = [2, 0, 0, 0], sizes = [2, 1, 1, 128], strides = [1, 1, 1, 1]} : vector<24x1x1x128xf32> to vector<2x1x1x128xf32>
    %30 = vector.extract_strided_slice %1 {offsets = [0, 0, 1], sizes = [16, 16, 1], strides = [1, 1, 1]} : vector<16x16x3xf32> to vector<16x16x1xf32>
    %31 = vector.shape_cast %30 : vector<16x16x1xf32> to vector<1x16x16x1xf32>
    %32 = vector.broadcast %31 : vector<1x16x16x1xf32> to vector<2x16x16x128xf32>
    %33 = vector.broadcast %29 : vector<2x1x1x128xf32> to vector<2x16x16x128xf32>
    %34 = arith.mulf %32, %33 : vector<2x16x16x128xf32>
    %35 = arith.addf %28, %34 : vector<2x16x16x128xf32>
    %36 = vector.extract_strided_slice %2 {offsets = [4, 0, 0, 0], sizes = [2, 1, 1, 128], strides = [1, 1, 1, 1]} : vector<24x1x1x128xf32> to vector<2x1x1x128xf32>
    %37 = vector.extract_strided_slice %1 {offsets = [0, 0, 2], sizes = [16, 16, 1], strides = [1, 1, 1]} : vector<16x16x3xf32> to vector<16x16x1xf32>
    %38 = vector.shape_cast %37 : vector<16x16x1xf32> to vector<1x16x16x1xf32>
    %39 = vector.broadcast %38 : vector<1x16x16x1xf32> to vector<2x16x16x128xf32>
    %40 = vector.broadcast %36 : vector<2x1x1x128xf32> to vector<2x16x16x128xf32>
    %41 = arith.mulf %39, %40 : vector<2x16x16x128xf32>
    %42 = arith.addf %35, %41 : vector<2x16x16x128xf32>
    %cst_15 = arith.constant 0.000000e+00 : f32
    %43 = vector.broadcast %cst_15 : f32 to vector<2x16x16x128xf32>
    %44 = arith.cmpf ogt, %42, %43 : vector<2x16x16x128xf32>
    %cst_16 = arith.constant 2.000000e-01 : f32
    %45 = vector.broadcast %cst_16 : f32 to vector<2x16x16x128xf32>
    %46 = arith.mulf %45, %42 : vector<2x16x16x128xf32>
    %47 = arith.select %44, %42, %46 : vector<2x16x16x128xi1>, vector<2x16x16x128xf32>
    %48 = vector.extract_strided_slice %2 {offsets = [6, 0, 0, 0], sizes = [2, 1, 1, 128], strides = [1, 1, 1, 1]} : vector<24x1x1x128xf32> to vector<2x1x1x128xf32>
    %49 = vector.broadcast %48 : vector<2x1x1x128xf32> to vector<2x16x16x128xf32>
    %50 = arith.mulf %47, %49 : vector<2x16x16x128xf32>
    %cst_17 = arith.constant dense<0.000000e+00> : vector<2x16x16xf32>
    %51 = vector.multi_reduction <add>, %50, %cst_17 [3] : vector<2x16x16x128xf32> to vector<2x16x16xf32>
    %52 = vector.broadcast %8 : vector<1x16x16xf32> to vector<2x16x16xf32>
    %53 = arith.addf %51, %52 : vector<2x16x16xf32>
    %cst_18 = arith.constant dense<0xFF800000> : vector<2x16xf32>
    %54 = vector.multi_reduction <maximumf>, %53, %cst_18 [2] : vector<2x16x16xf32> to vector<2x16xf32>
    %55 = vector.shape_cast %54 : vector<2x16xf32> to vector<2x16x1xf32>
    %56 = vector.broadcast %55 : vector<2x16x1xf32> to vector<2x16x16xf32>
    %57 = arith.subf %53, %56 : vector<2x16x16xf32>
    %58 = math.exp %57 : vector<2x16x16xf32>
    %59 = vector.broadcast %3 : vector<1x16x16xf32> to vector<2x16x16xf32>
    %60 = arith.mulf %58, %59 : vector<2x16x16xf32>
    %cst_19 = arith.constant dense<0.000000e+00> : vector<2x16xf32>
    %61 = vector.multi_reduction <add>, %60, %cst_19 [2] : vector<2x16x16xf32> to vector<2x16xf32>
    %62 = vector.shape_cast %61 : vector<2x16xf32> to vector<2x16x1xf32>
    %cst_20 = arith.constant 1.000000e-30 : f32
    %63 = vector.broadcast %cst_20 : f32 to vector<2x16x1xf32>
    %64 = arith.maximumf %62, %63 : vector<2x16x1xf32>
    %65 = tpu.reciprocal %64 {approx = true} : vector<2x16x1xf32> -> vector<2x16x1xf32>
    %66 = vector.broadcast %65 : vector<2x16x1xf32> to vector<2x16x16xf32>
    %67 = arith.mulf %60, %66 : vector<2x16x16xf32>
    "tpu.trace_start"() <{level = 10 : i32, message = "hij,hjc->hic"}> : () -> ()
    %cst_21 = arith.constant dense<0.000000e+00> : vector<2x16x128xf32>
    %68 = tpu.matmul %67, %15, %cst_21 {dimension_numbers = #tpu.dot_dimension_numbers<[2], [1], [1], [2], [0, 0, 0, 1, 1, 2], [0], [0]>} : vector<2x16x16xf32>, vector<2x16x128xf32>, vector<2x16x128xf32> -> vector<2x16x128xf32>
    "tpu.trace_stop"() : () -> ()
    %cst_22 = arith.constant dense<0.000000e+00> : vector<16x128xf32>
    %69 = vector.multi_reduction <add>, %68, %cst_22 [0] : vector<2x16x128xf32> to vector<16x128xf32>
    %cst_23 = arith.constant 2.000000e+00 : f32
    %70 = vector.broadcast %cst_23 : f32 to vector<16x128xf32>
    %71 = arith.divf %69, %70 : vector<16x128xf32>
    %72 = vector.extract_strided_slice %2 {offsets = [16, 0, 0, 0], sizes = [1, 1, 1, 128], strides = [1, 1, 1, 1]} : vector<24x1x1x128xf32> to vector<1x1x1x128xf32>
    %73 = vector.shape_cast %72 : vector<1x1x1x128xf32> to vector<1x128xf32>
    %74 = vector.broadcast %73 : vector<1x128xf32> to vector<16x128xf32>
    %75 = arith.addf %71, %74 : vector<16x128xf32>
    %c0_24 = arith.constant 0 : index
    %c0_25 = arith.constant 0 : index
    %c0_26 = arith.constant 0 : index
    %76 = vector.load %arg4[%c0_24, %c0_25, %c0_26] : memref<4x128x128xf32, #tpu.memory_space<vmem>>, vector<4x128x128xf32>
    %77 = vector.shape_cast %75 : vector<16x128xf32> to vector<1x16x128xf32>
    %78 = vector.shape_cast %77 : vector<1x16x128xf32> to vector<1x16x128xf32>
    %79 = vector.broadcast %78 : vector<1x16x128xf32> to vector<4x16x128xf32>
    "tpu.trace_start"() <{level = 10 : i32, message = "snf,sfc->snc"}> : () -> ()
    %cst_27 = arith.constant dense<0.000000e+00> : vector<4x16x128xf32>
    %80 = tpu.matmul %79, %76, %cst_27 {dimension_numbers = #tpu.dot_dimension_numbers<[2], [1], [1], [2], [0, 0, 0, 1, 1, 2], [0], [0]>} : vector<4x16x128xf32>, vector<4x128x128xf32>, vector<4x16x128xf32> -> vector<4x16x128xf32>
    "tpu.trace_stop"() : () -> ()
    %81 = vector.extract_strided_slice %80 {offsets = [0, 0, 0], sizes = [2, 16, 128], strides = [1, 1, 1]} : vector<4x16x128xf32> to vector<2x16x128xf32>
    %82 = vector.extract_strided_slice %80 {offsets = [2, 0, 0], sizes = [2, 16, 128], strides = [1, 1, 1]} : vector<4x16x128xf32> to vector<2x16x128xf32>
    %83 = vector.shape_cast %82 : vector<2x16x128xf32> to vector<2x16x1x128xf32>
    %84 = vector.shape_cast %81 : vector<2x16x128xf32> to vector<2x1x16x128xf32>
    %85 = vector.broadcast %83 : vector<2x16x1x128xf32> to vector<2x16x16x128xf32>
    %86 = vector.broadcast %84 : vector<2x1x16x128xf32> to vector<2x16x16x128xf32>
    %87 = arith.addf %85, %86 : vector<2x16x16x128xf32>
    %88 = vector.extract_strided_slice %2 {offsets = [8, 0, 0, 0], sizes = [2, 1, 1, 128], strides = [1, 1, 1, 1]} : vector<24x1x1x128xf32> to vector<2x1x1x128xf32>
    %89 = vector.extract_strided_slice %1 {offsets = [0, 0, 0], sizes = [16, 16, 1], strides = [1, 1, 1]} : vector<16x16x3xf32> to vector<16x16x1xf32>
    %90 = vector.shape_cast %89 : vector<16x16x1xf32> to vector<1x16x16x1xf32>
    %91 = vector.broadcast %90 : vector<1x16x16x1xf32> to vector<2x16x16x128xf32>
    %92 = vector.broadcast %88 : vector<2x1x1x128xf32> to vector<2x16x16x128xf32>
    %93 = arith.mulf %91, %92 : vector<2x16x16x128xf32>
    %94 = arith.addf %87, %93 : vector<2x16x16x128xf32>
    %95 = vector.extract_strided_slice %2 {offsets = [10, 0, 0, 0], sizes = [2, 1, 1, 128], strides = [1, 1, 1, 1]} : vector<24x1x1x128xf32> to vector<2x1x1x128xf32>
    %96 = vector.extract_strided_slice %1 {offsets = [0, 0, 1], sizes = [16, 16, 1], strides = [1, 1, 1]} : vector<16x16x3xf32> to vector<16x16x1xf32>
    %97 = vector.shape_cast %96 : vector<16x16x1xf32> to vector<1x16x16x1xf32>
    %98 = vector.broadcast %97 : vector<1x16x16x1xf32> to vector<2x16x16x128xf32>
    %99 = vector.broadcast %95 : vector<2x1x1x128xf32> to vector<2x16x16x128xf32>
    %100 = arith.mulf %98, %99 : vector<2x16x16x128xf32>
    %101 = arith.addf %94, %100 : vector<2x16x16x128xf32>
    %102 = vector.extract_strided_slice %2 {offsets = [12, 0, 0, 0], sizes = [2, 1, 1, 128], strides = [1, 1, 1, 1]} : vector<24x1x1x128xf32> to vector<2x1x1x128xf32>
    %103 = vector.extract_strided_slice %1 {offsets = [0, 0, 2], sizes = [16, 16, 1], strides = [1, 1, 1]} : vector<16x16x3xf32> to vector<16x16x1xf32>
    %104 = vector.shape_cast %103 : vector<16x16x1xf32> to vector<1x16x16x1xf32>
    %105 = vector.broadcast %104 : vector<1x16x16x1xf32> to vector<2x16x16x128xf32>
    %106 = vector.broadcast %102 : vector<2x1x1x128xf32> to vector<2x16x16x128xf32>
    %107 = arith.mulf %105, %106 : vector<2x16x16x128xf32>
    %108 = arith.addf %101, %107 : vector<2x16x16x128xf32>
    %cst_28 = arith.constant 0.000000e+00 : f32
    %109 = vector.broadcast %cst_28 : f32 to vector<2x16x16x128xf32>
    %110 = arith.cmpf ogt, %108, %109 : vector<2x16x16x128xf32>
    %cst_29 = arith.constant 2.000000e-01 : f32
    %111 = vector.broadcast %cst_29 : f32 to vector<2x16x16x128xf32>
    %112 = arith.mulf %111, %108 : vector<2x16x16x128xf32>
    %113 = arith.select %110, %108, %112 : vector<2x16x16x128xi1>, vector<2x16x16x128xf32>
    %114 = vector.extract_strided_slice %2 {offsets = [14, 0, 0, 0], sizes = [2, 1, 1, 128], strides = [1, 1, 1, 1]} : vector<24x1x1x128xf32> to vector<2x1x1x128xf32>
    %115 = vector.broadcast %114 : vector<2x1x1x128xf32> to vector<2x16x16x128xf32>
    %116 = arith.mulf %113, %115 : vector<2x16x16x128xf32>
    %cst_30 = arith.constant dense<0.000000e+00> : vector<2x16x16xf32>
    %117 = vector.multi_reduction <add>, %116, %cst_30 [3] : vector<2x16x16x128xf32> to vector<2x16x16xf32>
    %118 = vector.broadcast %8 : vector<1x16x16xf32> to vector<2x16x16xf32>
    %119 = arith.addf %117, %118 : vector<2x16x16xf32>
    %cst_31 = arith.constant dense<0xFF800000> : vector<2x16xf32>
    %120 = vector.multi_reduction <maximumf>, %119, %cst_31 [2] : vector<2x16x16xf32> to vector<2x16xf32>
    %121 = vector.shape_cast %120 : vector<2x16xf32> to vector<2x16x1xf32>
    %122 = vector.broadcast %121 : vector<2x16x1xf32> to vector<2x16x16xf32>
    %123 = arith.subf %119, %122 : vector<2x16x16xf32>
    %124 = math.exp %123 : vector<2x16x16xf32>
    %125 = vector.broadcast %3 : vector<1x16x16xf32> to vector<2x16x16xf32>
    %126 = arith.mulf %124, %125 : vector<2x16x16xf32>
    %cst_32 = arith.constant dense<0.000000e+00> : vector<2x16xf32>
    %127 = vector.multi_reduction <add>, %126, %cst_32 [2] : vector<2x16x16xf32> to vector<2x16xf32>
    %128 = vector.shape_cast %127 : vector<2x16xf32> to vector<2x16x1xf32>
    %cst_33 = arith.constant 1.000000e-30 : f32
    %129 = vector.broadcast %cst_33 : f32 to vector<2x16x1xf32>
    %130 = arith.maximumf %128, %129 : vector<2x16x1xf32>
    %131 = tpu.reciprocal %130 {approx = true} : vector<2x16x1xf32> -> vector<2x16x1xf32>
    %132 = vector.broadcast %131 : vector<2x16x1xf32> to vector<2x16x16xf32>
    %133 = arith.mulf %126, %132 : vector<2x16x16xf32>
    "tpu.trace_start"() <{level = 10 : i32, message = "hij,hjc->hic"}> : () -> ()
    %cst_34 = arith.constant dense<0.000000e+00> : vector<2x16x128xf32>
    %134 = tpu.matmul %133, %81, %cst_34 {dimension_numbers = #tpu.dot_dimension_numbers<[2], [1], [1], [2], [0, 0, 0, 1, 1, 2], [0], [0]>} : vector<2x16x16xf32>, vector<2x16x128xf32>, vector<2x16x128xf32> -> vector<2x16x128xf32>
    "tpu.trace_stop"() : () -> ()
    %cst_35 = arith.constant dense<0.000000e+00> : vector<16x128xf32>
    %135 = vector.multi_reduction <add>, %134, %cst_35 [0] : vector<2x16x128xf32> to vector<16x128xf32>
    %cst_36 = arith.constant 2.000000e+00 : f32
    %136 = vector.broadcast %cst_36 : f32 to vector<16x128xf32>
    %137 = arith.divf %135, %136 : vector<16x128xf32>
    %138 = vector.extract_strided_slice %2 {offsets = [17, 0, 0, 0], sizes = [1, 1, 1, 128], strides = [1, 1, 1, 1]} : vector<24x1x1x128xf32> to vector<1x1x1x128xf32>
    %139 = vector.shape_cast %138 : vector<1x1x1x128xf32> to vector<1x128xf32>
    %140 = vector.broadcast %139 : vector<1x128xf32> to vector<16x128xf32>
    %141 = arith.addf %137, %140 : vector<16x128xf32>
    %142 = vector.extract_strided_slice %2 {offsets = [18, 0, 0, 0], sizes = [1, 1, 1, 128], strides = [1, 1, 1, 1]} : vector<24x1x1x128xf32> to vector<1x1x1x128xf32>
    %143 = vector.shape_cast %142 : vector<1x1x1x128xf32> to vector<1x128xf32>
    %cst_37 = arith.constant 0.000000e+00 : f32
    %144 = vector.broadcast %cst_37 : f32 to vector<16x128xf32>
    %145 = arith.cmpf ogt, %141, %144 : vector<16x128xf32>
    %146 = vector.broadcast %143 : vector<1x128xf32> to vector<16x128xf32>
    %147 = arith.mulf %146, %141 : vector<16x128xf32>
    %148 = arith.select %145, %141, %147 : vector<16x128xi1>, vector<16x128xf32>
    %c0_38 = arith.constant 0 : index
    %c0_39 = arith.constant 0 : index
    %149 = vector.load %arg6[%c0_38, %c0_39] : memref<16x128xf32, #tpu.memory_space<vmem>>, vector<16x128xf32>
    tpu.vector_store %arg6[%c0_38, %c0_39], %148 {strides = array<i32>} : memref<16x128xf32, #tpu.memory_space<vmem>>, vector<16x128xf32>,
    return
  }
}

</mosaic_0001>

<llo_original>
// kernel: encoder_forward.1
$region0: #{encoder_forward.1}
  #allocation0 [shape = 'u32[]', space=smem, size = 0x4, offset = 0x4, fixed_abs, tag = 'smem constant byte address 0x4 - core index']
  #allocation1 [shape = 'u32[72,128]{1,0:T(1,128)}', space=vmem, size = 0x9000, scoped, tag = 'internal scratch']
  %s0 = inlined_call_operand.vmem [shape: f32[16,8], index: 0, kind: input, shape index: {}]
  %s1 = inlined_call_operand.vmem [shape: f32[16,16], index: 1, kind: input, shape index: {}]
  %s2 = inlined_call_operand.vmem [shape: f32[16,16,3], index: 2, kind: input, shape index: {}]
  %s3 = inlined_call_operand.vmem [shape: f32[4,8,128], index: 3, kind: input, shape index: {}]
  %s4 = inlined_call_operand.vmem [shape: f32[4,128,128], index: 4, kind: input, shape index: {}]
  %s5 = inlined_call_operand.vmem [shape: f32[24,1,1,128], index: 5, kind: input, shape index: {}]
  %s6 = inlined_call_operand.hbm [shape: f32[16,128], index: 6, kind: output, shape index: {}]
  %s7 = sld [smem:[#allocation0]]
  $region34: #{encoder_forward.1} parent=0
    _
  %s9 = ssub.s32 1, %s7
  %s10 = scalar_select 0, %s9, %s7
  $region1: #{encoder_forward.1} parent=0
    #allocation2 [shape = 'u8[8192]{0}', space=vmem, size = 0x2000, scoped, tag = 'output window, operand 0, single buffered']
    #allocation3 [shape = 's32[1]{0}', space=sflag, size = 0x4, scoped, tag = 'scoped memory for encoder_forward.1']
    %11 = vsyncpa [#allocation3], 0
    // Predicated region
    $region2: #{encoder_forward.1} parent=1 // pred_check
      _
    $region3: #{encoder_forward.1} parent=1 // pred_check_branch
      %13 = sbr.rel (0) target = $region5
    $region4: #{encoder_forward.1} parent=1 // pred_region
      _
    $region5: #{encoder_forward.1} parent=1 // pred_fallthru
      _
    // Predicated region
    $region6: #{encoder_forward.1} parent=1 // pred_check
      _
    $region7: #{encoder_forward.1} parent=1 // pred_check_branch
      %15 = sbr.rel (0) target = $region9
    $region8: #{encoder_forward.1} parent=1 // pred_region
      _
    $region9: #{encoder_forward.1} parent=1 // pred_fallthru
      _
    // Predicated region
    $region10: #{encoder_forward.1} parent=1 // pred_check
      _
    $region11: #{encoder_forward.1} parent=1 // pred_check_branch
      %17 = sbr.rel (0) target = $region13
    $region12: #{encoder_forward.1} parent=1 // pred_region
      _
    $region13: #{encoder_forward.1} parent=1 // pred_fallthru
      _
    // Predicated region
    $region14: #{encoder_forward.1} parent=1 // pred_check
      _
    $region15: #{encoder_forward.1} parent=1 // pred_check_branch
      %19 = sbr.rel (0) target = $region17
    $region16: #{encoder_forward.1} parent=1 // pred_region
      _
    $region17: #{encoder_forward.1} parent=1 // pred_fallthru
      _
    // Predicated region
    $region18: #{encoder_forward.1} parent=1 // pred_check
      _
    $region19: #{encoder_forward.1} parent=1 // pred_check_branch
      %21 = sbr.rel (0) target = $region21
    $region20: #{encoder_forward.1} parent=1 // pred_region
      _
    $region21: #{encoder_forward.1} parent=1 // pred_fallthru
      _
    // Predicated region
    $region22: #{encoder_forward.1} parent=1 // pred_check
      _
    $region23: #{encoder_forward.1} parent=1 // pred_check_branch
      %23 = sbr.rel (0) target = $region25
    $region24: #{encoder_forward.1} parent=1 // pred_region
      _
    $region25: #{encoder_forward.1} parent=1 // pred_fallthru
      _
    %v24 = vld [vmem:[%s1] sm:$0xff]
    %v25 = vld [vmem:[%s1 + $0x8] sm:$0xff]
    %v26 = vld [vmem:[%s2] sm:$0xff]
    %v27 = vld [vmem:[%s2 + $0x8] sm:$0xff]
    %v28 = vld [vmem:[%s2 + $0x10] sm:$0xff]
    %v29 = vld [vmem:[%s2 + $0x18] sm:$0xff]
    %v30 = vld [vmem:[%s2 + $0x20] sm:$0xff]
    %v31 = vld [vmem:[%s2 + $0x28] sm:$0xff]
    %v32 = vld [vmem:[%s2 + $0x30] sm:$0xff]
    %v33 = vld [vmem:[%s2 + $0x38] sm:$0xff]
    %v34 = vld [vmem:[%s2 + $0x40] sm:$0xff]
    %v35 = vld [vmem:[%s2 + $0x48] sm:$0xff]
    %v36 = vld [vmem:[%s2 + $0x50] sm:$0xff]
    %v37 = vld [vmem:[%s2 + $0x58] sm:$0xff]
    %v38 = vld [vmem:[%s2 + $0x60] sm:$0xff]
    %v39 = vld [vmem:[%s2 + $0x68] sm:$0xff]
    %v40 = vld [vmem:[%s2 + $0x70] sm:$0xff]
    %v41 = vld [vmem:[%s2 + $0x78] sm:$0xff]
    %v42 = vld [vmem:[%s2 + $0x80] sm:$0xff]
    %v43 = vld [vmem:[%s2 + $0x88] sm:$0xff]
    %v44 = vld [vmem:[%s2 + $0x90] sm:$0xff]
    %v45 = vld [vmem:[%s2 + $0x98] sm:$0xff]
    %v46 = vld [vmem:[%s2 + $0xa0] sm:$0xff]
    %v47 = vld [vmem:[%s2 + $0xa8] sm:$0xff]
    %v48 = vld [vmem:[%s2 + $0xb0] sm:$0xff]
    %v49 = vld [vmem:[%s2 + $0xb8] sm:$0xff]
    %v50 = vld [vmem:[%s2 + $0xc0] sm:$0xff]
    %v51 = vld [vmem:[%s2 + $0xc8] sm:$0xff]
    %v52 = vld [vmem:[%s2 + $0xd0] sm:$0xff]
    %v53 = vld [vmem:[%s2 + $0xd8] sm:$0xff]
    %v54 = vld [vmem:[%s2 + $0xe0] sm:$0xff]
    %v55 = vld [vmem:[%s2 + $0xe8] sm:$0xff]
    %v56 = vld [vmem:[%s2 + $0xf0] sm:$0xff]
    %v57 = vld [vmem:[%s2 + $0xf8] sm:$0xff]
    %v58 = vld [vmem:[%s5] sm:$0x1]
    %v59 = vld [vmem:[%s5 + $0x1] sm:$0x1]
    %v60 = vld [vmem:[%s5 + $0x2] sm:$0x1]
    %v61 = vld [vmem:[%s5 + $0x3] sm:$0x1]
    %v62 = vld [vmem:[%s5 + $0x4] sm:$0x1]
    %v63 = vld [vmem:[%s5 + $0x5] sm:$0x1]
    %v64 = vld [vmem:[%s5 + $0x6] sm:$0x1]
    %v65 = vld [vmem:[%s5 + $0x7] sm:$0x1]
    %v66 = vld [vmem:[%s5 + $0x8] sm:$0x1]
    %v67 = vld [vmem:[%s5 + $0x9] sm:$0x1]
    %v68 = vld [vmem:[%s5 + $0xa] sm:$0x1]
    %v69 = vld [vmem:[%s5 + $0xb] sm:$0x1]
    %v70 = vld [vmem:[%s5 + $0xc] sm:$0x1]
    %v71 = vld [vmem:[%s5 + $0xd] sm:$0x1]
    %v72 = vld [vmem:[%s5 + $0xe] sm:$0x1]
    %v73 = vld [vmem:[%s5 + $0xf] sm:$0x1]
    %v74 = vld [vmem:[%s5 + $0x10] sm:$0x1]
    %v75 = vld [vmem:[%s5 + $0x11] sm:$0x1]
    %v76 = vld [vmem:[%s5 + $0x12] sm:$0x1]
    %v77 = vsub.f32 %v24, 1.0
    %v78 = vsub.f32 %v25, 1.0
    %v79 = vmul.f32 %v77, 1e+30
    %v80 = vmul.f32 %v78, 1e+30
    %v81 = vld [vmem:[%s0] sm:$0xff]
    %v82 = vld [vmem:[%s0 + $0x8] sm:$0xff]
    %v83 = vld [vmem:[%s3] sm:$0xff]
    %v84 = vld [vmem:[%s3 + $0x8] sm:$0xff]
    %v85 = vld [vmem:[%s3 + $0x10] sm:$0xff]
    %v86 = vld [vmem:[%s3 + $0x18] sm:$0xff]
    %vm87 = vcmask 64512
    %v89 = vsel %vm87, %v81, 0
    %v92 = vsel %vm87, %v82, 0
    %94 = vmatpush.msra.mxu0 0.0
    %95 = vmatpush.msra.mxu0 0.0
    %96 = vmatpush.msra.mxu0 0.0
    %97 = vmatpush.msra.mxu0 0.0
    %98 = vmatpush.msra.mxu0 0.0
    %99 = vmatpush.msra.mxu0 0.0
    %100 = vmatpush.msra.mxu0 0.0
    %101 = vmatpush.msra.mxu0 0.0
    %102 = vmatpush.msra.mxu0 0.0
    %103 = vmatpush.msra.mxu0 0.0
    %104 = vmatpush.msra.mxu0 0.0
    %105 = vmatpush.msra.mxu0 0.0
    %106 = vmatpush.msra.mxu0 0.0
    %107 = vmatpush.msra.mxu0 0.0
    %108 = vmatpush.msra.mxu0 0.0
    %109 = vmatpush.msra.mxu0 %v83
    %110 = vmatmul.f32.gmra.mxu0 %v89
    %v111 = vpop.f32.mrf.mxu0
    %v112 = vadd.f32 0.0, %v111
    %113 = vmatmul.f32.gmra.mxu0 %v92
    %v114 = vpop.f32.mrf.mxu0
    %v115 = vadd.f32 0.0, %v114
    %116 = vdwg.mxu0
    %117 = vmatpush.msra.mxu0 0.0
    %118 = vmatpush.msra.mxu0 0.0
    %119 = vmatpush.msra.mxu0 0.0
    %120 = vmatpush.msra.mxu0 0.0
    %121 = vmatpush.msra.mxu0 0.0
    %122 = vmatpush.msra.mxu0 0.0
    %123 = vmatpush.msra.mxu0 0.0
    %124 = vmatpush.msra.mxu0 0.0
    %125 = vmatpush.msra.mxu0 0.0
    %126 = vmatpush.msra.mxu0 0.0
    %127 = vmatpush.msra.mxu0 0.0
    %128 = vmatpush.msra.mxu0 0.0
    %129 = vmatpush.msra.mxu0 0.0
    %130 = vmatpush.msra.mxu0 0.0
    %131 = vmatpush.msra.mxu0 0.0
    %132 = vmatpush.msra.mxu0 %v84
    %133 = vmatmul.f32.gmra.mxu0 %v89
    %v134 = vpop.f32.mrf.mxu0
    %v135 = vadd.f32 0.0, %v134
    %136 = vmatmul.f32.gmra.mxu0 %v92
    %v137 = vpop.f32.mrf.mxu0
    %v138 = vadd.f32 0.0, %v137
    %139 = vdwg.mxu0
    %140 = vmatpush.msra.mxu0 0.0
    %141 = vmatpush.msra.mxu0 0.0
    %142 = vmatpush.msra.mxu0 0.0
    %143 = vmatpush.msra.mxu0 0.0
    %144 = vmatpush.msra.mxu0 0.0
    %145 = vmatpush.msra.mxu0 0.0
    %146 = vmatpush.msra.mxu0 0.0
    %147 = vmatpush.msra.mxu0 0.0
    %148 = vmatpush.msra.mxu0 0.0
    %149 = vmatpush.msra.mxu0 0.0
    %150 = vmatpush.msra.mxu0 0.0
    %151 = vmatpush.msra.mxu0 0.0
    %152 = vmatpush.msra.mxu0 0.0
    %153 = vmatpush.msra.mxu0 0.0
    %154 = vmatpush.msra.mxu0 0.0
    %155 = vmatpush.msra.mxu0 %v85
    %156 = vmatmul.f32.gmra.mxu0 %v89
    %v157 = vpop.f32.mrf.mxu0
    %v158 = vadd.f32 0.0, %v157
    %159 = vmatmul.f32.gmra.mxu0 %v92
    %v160 = vpop.f32.mrf.mxu0
    %v161 = vadd.f32 0.0, %v160
    %162 = vdwg.mxu0
    %163 = vmatpush.msra.mxu0 0.0
    %164 = vmatpush.msra.mxu0 0.0
    %165 = vmatpush.msra.mxu0 0.0
    %166 = vmatpush.msra.mxu0 0.0
    %167 = vmatpush.msra.mxu0 0.0
    %168 = vmatpush.msra.mxu0 0.0
    %169 = vmatpush.msra.mxu0 0.0
    %170 = vmatpush.msra.mxu0 0.0
    %171 = vmatpush.msra.mxu0 0.0
    %172 = vmatpush.msra.mxu0 0.0
    %173 = vmatpush.msra.mxu0 0.0
    %174 = vmatpush.msra.mxu0 0.0
    %175 = vmatpush.msra.mxu0 0.0
    %176 = vmatpush.msra.mxu0 0.0
    %177 = vmatpush.msra.mxu0 0.0
    %178 = vmatpush.msra.mxu0 %v86
    %179 = vmatmul.f32.gmra.mxu0 %v89
    %v180 = vpop.f32.mrf.mxu0
    %v181 = vadd.f32 0.0, %v180
    %182 = vmatmul.f32.gmra.mxu0 %v92
    %v183 = vpop.f32.mrf.mxu0
    %v184 = vadd.f32 0.0, %v183
    %185 = vdwg.mxu0
    %v190 = vrot.slane %v158, 1
    %v191 = vrot.slane %v158, 2
    %v192 = vrot.slane %v158, 3
    %v193 = vrot.slane %v158, 4
    %v194 = vrot.slane %v158, 5
    %v195 = vrot.slane %v158, 6
    %v196 = vrot.slane %v158, 7
    %v197 = vrot.slane %v161, 1
    %v198 = vrot.slane %v161, 2
    %v199 = vrot.slane %v161, 3
    %v200 = vrot.slane %v161, 4
    %v201 = vrot.slane %v161, 5
    %v202 = vrot.slane %v161, 6
    %v203 = vrot.slane %v161, 7
    %v204 = vrot.slane %v181, 1
    %v205 = vrot.slane %v181, 2
    %v206 = vrot.slane %v181, 3
    %v207 = vrot.slane %v181, 4
    %v208 = vrot.slane %v181, 5
    %v209 = vrot.slane %v181, 6
    %v210 = vrot.slane %v181, 7
    %v211 = vrot.slane %v184, 1
    %v212 = vrot.slane %v184, 2
    %v213 = vrot.slane %v184, 3
    %v214 = vrot.slane %v184, 4
    %v215 = vrot.slane %v184, 5
    %v216 = vrot.slane %v184, 6
    %v217 = vrot.slane %v184, 7
    %v218 = vperm.slane %v158, 0
    %v219 = vperm.slane %v190, 0
    %v220 = vperm.slane %v191, 0
    %v221 = vperm.slane %v192, 0
    %v222 = vperm.slane %v193, 0
    %v223 = vperm.slane %v194, 0
    %v224 = vperm.slane %v195, 0
    %v225 = vperm.slane %v196, 0
    %v226 = vperm.slane %v161, 0
    %v227 = vperm.slane %v197, 0
    %v228 = vperm.slane %v198, 0
    %v229 = vperm.slane %v199, 0
    %v230 = vperm.slane %v200, 0
    %v231 = vperm.slane %v201, 0
    %v232 = vperm.slane %v202, 0
    %v233 = vperm.slane %v203, 0
    %v234 = vperm.slane %v181, 0
    %v235 = vperm.slane %v204, 0
    %v236 = vperm.slane %v205, 0
    %v237 = vperm.slane %v206, 0
    %v238 = vperm.slane %v207, 0
    %v239 = vperm.slane %v208, 0
    %v240 = vperm.slane %v209, 0
    %v241 = vperm.slane %v210, 0
    %v242 = vperm.slane %v184, 0
    %v243 = vperm.slane %v211, 0
    %v244 = vperm.slane %v212, 0
    %v245 = vperm.slane %v213, 0
    %v246 = vperm.slane %v214, 0
    %v247 = vperm.slane %v215, 0
    %v248 = vperm.slane %v216, 0
    %v249 = vperm.slane %v217, 0
    %v282 = vadd.f32 %v218, %v112
    %v283 = vadd.f32 %v218, %v115
    %v284 = vadd.f32 %v219, %v112
    %v285 = vadd.f32 %v219, %v115
    %v286 = vadd.f32 %v220, %v112
    %v287 = vadd.f32 %v220, %v115
    %v288 = vadd.f32 %v221, %v112
    %v289 = vadd.f32 %v221, %v115
    %v290 = vadd.f32 %v222, %v112
    %v291 = vadd.f32 %v222, %v115
    %v292 = vadd.f32 %v223, %v112
    %v293 = vadd.f32 %v223, %v115
    %v294 = vadd.f32 %v224, %v112
    %v295 = vadd.f32 %v224, %v115
    %v296 = vadd.f32 %v225, %v112
    %v297 = vadd.f32 %v225, %v115
    %v298 = vadd.f32 %v226, %v112
    %v299 = vadd.f32 %v226, %v115
    %v300 = vadd.f32 %v227, %v112
    %v301 = vadd.f32 %v227, %v115
    %v302 = vadd.f32 %v228, %v112
    %v303 = vadd.f32 %v228, %v115
    %v304 = vadd.f32 %v229, %v112
    %v305 = vadd.f32 %v229, %v115
    %v306 = vadd.f32 %v230, %v112
    %v307 = vadd.f32 %v230, %v115
    %v308 = vadd.f32 %v231, %v112
    %v309 = vadd.f32 %v231, %v115
    %v310 = vadd.f32 %v232, %v112
    %v311 = vadd.f32 %v232, %v115
    %v312 = vadd.f32 %v233, %v112
    %v313 = vadd.f32 %v233, %v115
    %v314 = vadd.f32 %v234, %v135
    %v315 = vadd.f32 %v234, %v138
    %v316 = vadd.f32 %v235, %v135
    %v317 = vadd.f32 %v235, %v138
    %v318 = vadd.f32 %v236, %v135
    %v319 = vadd.f32 %v236, %v138
    %v320 = vadd.f32 %v237, %v135
    %v321 = vadd.f32 %v237, %v138
    %v322 = vadd.f32 %v238, %v135
    %v323 = vadd.f32 %v238, %v138
    %v324 = vadd.f32 %v239, %v135
    %v325 = vadd.f32 %v239, %v138
    %v326 = vadd.f32 %v240, %v135
    %v327 = vadd.f32 %v240, %v138
    %v328 = vadd.f32 %v241, %v135
    %v329 = vadd.f32 %v241, %v138
    %v330 = vadd.f32 %v242, %v135
    %v331 = vadd.f32 %v242, %v138
    %v332 = vadd.f32 %v243, %v135
    %v333 = vadd.f32 %v243, %v138
    %v334 = vadd.f32 %v244, %v135
    %v335 = vadd.f32 %v244, %v138
    %v336 = vadd.f32 %v245, %v135
    %v337 = vadd.f32 %v245, %v138
    %v338 = vadd.f32 %v246, %v135
    %v339 = vadd.f32 %v246, %v138
    %v340 = vadd.f32 %v247, %v135
    %v341 = vadd.f32 %v247, %v138
    %v342 = vadd.f32 %v248, %v135
    %v343 = vadd.f32 %v248, %v138
    %v344 = vadd.f32 %v249, %v135
    %v345 = vadd.f32 %v249, %v138
    %347 = vset.pattern.permute.xlu0 0
    %348 = vperm.xlu0 %347, %v26
    %v349 = vpop.permute.xlu0 %348
    %352 = vset.pattern.permute.xlu0 0
    %353 = vperm.xlu0 %352, %v27
    %v354 = vpop.permute.xlu0 %353
    %357 = vset.pattern.permute.xlu0 0
    %358 = vperm.xlu0 %357, %v28
    %v359 = vpop.permute.xlu0 %358
    %362 = vset.pattern.permute.xlu0 0
    %363 = vperm.xlu0 %362, %v29
    %v364 = vpop.permute.xlu0 %363
    %367 = vset.pattern.permute.xlu0 0
    %368 = vperm.xlu0 %367, %v30
    %v369 = vpop.permute.xlu0 %368
    %372 = vset.pattern.permute.xlu0 0
    %373 = vperm.xlu0 %372, %v31
    %v374 = vpop.permute.xlu0 %373
    %377 = vset.pattern.permute.xlu0 0
    %378 = vperm.xlu0 %377, %v32
    %v379 = vpop.permute.xlu0 %378
    %382 = vset.pattern.permute.xlu0 0
    %383 = vperm.xlu0 %382, %v33
    %v384 = vpop.permute.xlu0 %383
    %387 = vset.pattern.permute.xlu0 0
    %388 = vperm.xlu0 %387, %v34
    %v389 = vpop.permute.xlu0 %388
    %392 = vset.pattern.permute.xlu0 0
    %393 = vperm.xlu0 %392, %v35
    %v394 = vpop.permute.xlu0 %393
    %397 = vset.pattern.permute.xlu0 0
    %398 = vperm.xlu0 %397, %v36
    %v399 = vpop.permute.xlu0 %398
    %402 = vset.pattern.permute.xlu0 0
    %403 = vperm.xlu0 %402, %v37
    %v404 = vpop.permute.xlu0 %403
    %407 = vset.pattern.permute.xlu0 0
    %408 = vperm.xlu0 %407, %v38
    %v409 = vpop.permute.xlu0 %408
    %412 = vset.pattern.permute.xlu0 0
    %413 = vperm.xlu0 %412, %v39
    %v414 = vpop.permute.xlu0 %413
    %417 = vset.pattern.permute.xlu0 0
    %418 = vperm.xlu0 %417, %v40
    %v419 = vpop.permute.xlu0 %418
    %422 = vset.pattern.permute.xlu0 0
    %423 = vperm.xlu0 %422, %v41
    %v424 = vpop.permute.xlu0 %423
    %427 = vset.pattern.permute.xlu0 0
    %428 = vperm.xlu0 %427, %v42
    %v429 = vpop.permute.xlu0 %428
    %432 = vset.pattern.permute.xlu0 0
    %433 = vperm.xlu0 %432, %v43
    %v434 = vpop.permute.xlu0 %433
    %437 = vset.pattern.permute.xlu0 0
    %438 = vperm.xlu0 %437, %v44
    %v439 = vpop.permute.xlu0 %438
    %442 = vset.pattern.permute.xlu0 0
    %443 = vperm.xlu0 %442, %v45
    %v444 = vpop.permute.xlu0 %443
    %447 = vset.pattern.permute.xlu0 0
    %448 = vperm.xlu0 %447, %v46
    %v449 = vpop.permute.xlu0 %448
    %452 = vset.pattern.permute.xlu0 0
    %453 = vperm.xlu0 %452, %v47
    %v454 = vpop.permute.xlu0 %453
    %457 = vset.pattern.permute.xlu0 0
    %458 = vperm.xlu0 %457, %v48
    %v459 = vpop.permute.xlu0 %458
    %462 = vset.pattern.permute.xlu0 0
    %463 = vperm.xlu0 %462, %v49
    %v464 = vpop.permute.xlu0 %463
    %467 = vset.pattern.permute.xlu0 0
    %468 = vperm.xlu0 %467, %v50
    %v469 = vpop.permute.xlu0 %468
    %472 = vset.pattern.permute.xlu0 0
    %473 = vperm.xlu0 %472, %v51
    %v474 = vpop.permute.xlu0 %473
    %477 = vset.pattern.permute.xlu0 0
    %478 = vperm.xlu0 %477, %v52
    %v479 = vpop.permute.xlu0 %478
    %482 = vset.pattern.permute.xlu0 0
    %483 = vperm.xlu0 %482, %v53
    %v484 = vpop.permute.xlu0 %483
    %487 = vset.pattern.permute.xlu0 0
    %488 = vperm.xlu0 %487, %v54
    %v489 = vpop.permute.xlu0 %488
    %492 = vset.pattern.permute.xlu0 0
    %493 = vperm.xlu0 %492, %v55
    %v494 = vpop.permute.xlu0 %493
    %497 = vset.pattern.permute.xlu0 0
    %498 = vperm.xlu0 %497, %v56
    %v499 = vpop.permute.xlu0 %498
    %502 = vset.pattern.permute.xlu0 0
    %503 = vperm.xlu0 %502, %v57
    %v504 = vpop.permute.xlu0 %503
    %v508 = vperm.slane %v58, 0
    %v509 = vperm.slane %v59, 0
    %v512 = vmul.f32 %v349, %v508
    %v513 = vmul.f32 %v354, %v508
    %v514 = vmul.f32 %v359, %v508
    %v515 = vmul.f32 %v364, %v508
    %v516 = vmul.f32 %v369, %v508
    %v517 = vmul.f32 %v374, %v508
    %v518 = vmul.f32 %v379, %v508
    %v519 = vmul.f32 %v384, %v508
    %v520 = vmul.f32 %v389, %v508
    %v521 = vmul.f32 %v394, %v508
    %v522 = vmul.f32 %v399, %v508
    %v523 = vmul.f32 %v404, %v508
    %v524 = vmul.f32 %v409, %v508
    %v525 = vmul.f32 %v414, %v508
    %v526 = vmul.f32 %v419, %v508
    %v527 = vmul.f32 %v424, %v508
    %v528 = vmul.f32 %v429, %v508
    %v529 = vmul.f32 %v434, %v508
    %v530 = vmul.f32 %v439, %v508
    %v531 = vmul.f32 %v444, %v508
    %v532 = vmul.f32 %v449, %v508
    %v533 = vmul.f32 %v454, %v508
    %v534 = vmul.f32 %v459, %v508
    %v535 = vmul.f32 %v464, %v508
    %v536 = vmul.f32 %v469, %v508
    %v537 = vmul.f32 %v474, %v508
    %v538 = vmul.f32 %v479, %v508
    %v539 = vmul.f32 %v484, %v508
    %v540 = vmul.f32 %v489, %v508
    %v541 = vmul.f32 %v494, %v508
    %v542 = vmul.f32 %v499, %v508
    %v543 = vmul.f32 %v504, %v508
    %v544 = vmul.f32 %v349, %v509
    %v545 = vmul.f32 %v354, %v509
    %v546 = vmul.f32 %v359, %v509
    %v547 = vmul.f32 %v364, %v509
    %v548 = vmul.f32 %v369, %v509
    %v549 = vmul.f32 %v374, %v509
    %v550 = vmul.f32 %v379, %v509
    %v551 = vmul.f32 %v384, %v509
    %v552 = vmul.f32 %v389, %v509
    %v553 = vmul.f32 %v394, %v509
    %v554 = vmul.f32 %v399, %v509
    %v555 = vmul.f32 %v404, %v509
    %v556 = vmul.f32 %v409, %v509
    %v557 = vmul.f32 %v414, %v509
    %v558 = vmul.f32 %v419, %v509
    %v559 = vmul.f32 %v424, %v509
    %v560 = vmul.f32 %v429, %v509
    %v561 = vmul.f32 %v434, %v509
    %v562 = vmul.f32 %v439, %v509
    %v563 = vmul.f32 %v444, %v509
    %v564 = vmul.f32 %v449, %v509
    %v565 = vmul.f32 %v454, %v509
    %v566 = vmul.f32 %v459, %v509
    %v567 = vmul.f32 %v464, %v509
    %v568 = vmul.f32 %v469, %v509
    %v569 = vmul.f32 %v474, %v509
    %v570 = vmul.f32 %v479, %v509
    %v571 = vmul.f32 %v484, %v509
    %v572 = vmul.f32 %v489, %v509
    %v573 = vmul.f32 %v494, %v509
    %v574 = vmul.f32 %v499, %v509
    %v575 = vmul.f32 %v504, %v509
    %v576 = vadd.f32 %v282, %v512
    %v577 = vadd.f32 %v283, %v513
    %v578 = vadd.f32 %v284, %v514
    %v579 = vadd.f32 %v285, %v515
    %v580 = vadd.f32 %v286, %v516
    %v581 = vadd.f32 %v287, %v517
    %v582 = vadd.f32 %v288, %v518
    %v583 = vadd.f32 %v289, %v519
    %v584 = vadd.f32 %v290, %v520
    %v585 = vadd.f32 %v291, %v521
    %v586 = vadd.f32 %v292, %v522
    %v587 = vadd.f32 %v293, %v523
    %v588 = vadd.f32 %v294, %v524
    %v589 = vadd.f32 %v295, %v525
    %v590 = vadd.f32 %v296, %v526
    %v591 = vadd.f32 %v297, %v527
    %v592 = vadd.f32 %v298, %v528
    %v593 = vadd.f32 %v299, %v529
    %v594 = vadd.f32 %v300, %v530
    %v595 = vadd.f32 %v301, %v531
    %v596 = vadd.f32 %v302, %v532
    %v597 = vadd.f32 %v303, %v533
    %v598 = vadd.f32 %v304, %v534
    %v599 = vadd.f32 %v305, %v535
    %v600 = vadd.f32 %v306, %v536
    %v601 = vadd.f32 %v307, %v537
    %v602 = vadd.f32 %v308, %v538
    %v603 = vadd.f32 %v309, %v539
    %v604 = vadd.f32 %v310, %v540
    %v605 = vadd.f32 %v311, %v541
    %v606 = vadd.f32 %v312, %v542
    %v607 = vadd.f32 %v313, %v543
    %v608 = vadd.f32 %v314, %v544
    %v609 = vadd.f32 %v315, %v545
    %v610 = vadd.f32 %v316, %v546
    %v611 = vadd.f32 %v317, %v547
    %v612 = vadd.f32 %v318, %v548
    %v613 = vadd.f32 %v319, %v549
    %v614 = vadd.f32 %v320, %v550
    %v615 = vadd.f32 %v321, %v551
    %v616 = vadd.f32 %v322, %v552
    %v617 = vadd.f32 %v323, %v553
    %v618 = vadd.f32 %v324, %v554
    %v619 = vadd.f32 %v325, %v555
    %v620 = vadd.f32 %v326, %v556
    %v621 = vadd.f32 %v327, %v557
    %v622 = vadd.f32 %v328, %v558
    %v623 = vadd.f32 %v329, %v559
    %v624 = vadd.f32 %v330, %v560
    %v625 = vadd.f32 %v331, %v561
    %v626 = vadd.f32 %v332, %v562
    %v627 = vadd.f32 %v333, %v563
    %v628 = vadd.f32 %v334, %v564
    %v629 = vadd.f32 %v335, %v565
    %v630 = vadd.f32 %v336, %v566
    %v631 = vadd.f32 %v337, %v567
    %v632 = vadd.f32 %v338, %v568
    %v633 = vadd.f32 %v339, %v569
    %v634 = vadd.f32 %v340, %v570
    %v635 = vadd.f32 %v341, %v571
    %v636 = vadd.f32 %v342, %v572
    %v637 = vadd.f32 %v343, %v573
    %v638 = vadd.f32 %v344, %v574
    %v639 = vadd.f32 %v345, %v575
    %640 = vset.pattern.permute.xlu0 1
    %641 = vperm.xlu0 %640, %v26
    %v642 = vpop.permute.xlu0 %641
    %644 = vset.pattern.permute.xlu0 1
    %645 = vperm.xlu0 %644, %v27
    %v646 = vpop.permute.xlu0 %645
    %648 = vset.pattern.permute.xlu0 1
    %649 = vperm.xlu0 %648, %v28
    %v650 = vpop.permute.xlu0 %649
    %652 = vset.pattern.permute.xlu0 1
    %653 = vperm.xlu0 %652, %v29
    %v654 = vpop.permute.xlu0 %653
    %656 = vset.pattern.permute.xlu0 1
    %657 = vperm.xlu0 %656, %v30
    %v658 = vpop.permute.xlu0 %657
    %660 = vset.pattern.permute.xlu0 1
    %661 = vperm.xlu0 %660, %v31
    %v662 = vpop.permute.xlu0 %661
    %664 = vset.pattern.permute.xlu0 1
    %665 = vperm.xlu0 %664, %v32
    %v666 = vpop.permute.xlu0 %665
    %668 = vset.pattern.permute.xlu0 1
    %669 = vperm.xlu0 %668, %v33
    %v670 = vpop.permute.xlu0 %669
    %672 = vset.pattern.permute.xlu0 1
    %673 = vperm.xlu0 %672, %v34
    %v674 = vpop.permute.xlu0 %673
    %676 = vset.pattern.permute.xlu0 1
    %677 = vperm.xlu0 %676, %v35
    %v678 = vpop.permute.xlu0 %677
    %680 = vset.pattern.permute.xlu0 1
    %681 = vperm.xlu0 %680, %v36
    %v682 = vpop.permute.xlu0 %681
    %684 = vset.pattern.permute.xlu0 1
    %685 = vperm.xlu0 %684, %v37
    %v686 = vpop.permute.xlu0 %685
    %688 = vset.pattern.permute.xlu0 1
    %689 = vperm.xlu0 %688, %v38
    %v690 = vpop.permute.xlu0 %689
    %692 = vset.pattern.permute.xlu0 1
    %693 = vperm.xlu0 %692, %v39
    %v694 = vpop.permute.xlu0 %693
    %696 = vset.pattern.permute.xlu0 1
    %697 = vperm.xlu0 %696, %v40
    %v698 = vpop.permute.xlu0 %697
    %700 = vset.pattern.permute.xlu0 1
    %701 = vperm.xlu0 %700, %v41
    %v702 = vpop.permute.xlu0 %701
    %704 = vset.pattern.permute.xlu0 1
    %705 = vperm.xlu0 %704, %v42
    %v706 = vpop.permute.xlu0 %705
    %708 = vset.pattern.permute.xlu0 1
    %709 = vperm.xlu0 %708, %v43
    %v710 = vpop.permute.xlu0 %709
    %712 = vset.pattern.permute.xlu0 1
    %713 = vperm.xlu0 %712, %v44
    %v714 = vpop.permute.xlu0 %713
    %716 = vset.pattern.permute.xlu0 1
    %717 = vperm.xlu0 %716, %v45
    %v718 = vpop.permute.xlu0 %717
    %720 = vset.pattern.permute.xlu0 1
    %721 = vperm.xlu0 %720, %v46
    %v722 = vpop.permute.xlu0 %721
    %724 = vset.pattern.permute.xlu0 1
    %725 = vperm.xlu0 %724, %v47
    %v726 = vpop.permute.xlu0 %725
    %728 = vset.pattern.permute.xlu0 1
    %729 = vperm.xlu0 %728, %v48
    %v730 = vpop.permute.xlu0 %729
    %732 = vset.pattern.permute.xlu0 1
    %733 = vperm.xlu0 %732, %v49
    %v734 = vpop.permute.xlu0 %733
    %736 = vset.pattern.permute.xlu0 1
    %737 = vperm.xlu0 %736, %v50
    %v738 = vpop.permute.xlu0 %737
    %740 = vset.pattern.permute.xlu0 1
    %741 = vperm.xlu0 %740, %v51
    %v742 = vpop.permute.xlu0 %741
    %744 = vset.pattern.permute.xlu0 1
    %745 = vperm.xlu0 %744, %v52
    %v746 = vpop.permute.xlu0 %745
    %748 = vset.pattern.permute.xlu0 1
    %749 = vperm.xlu0 %748, %v53
    %v750 = vpop.permute.xlu0 %749
    %752 = vset.pattern.permute.xlu0 1
    %753 = vperm.xlu0 %752, %v54
    %v754 = vpop.permute.xlu0 %753
    %756 = vset.pattern.permute.xlu0 1
    %757 = vperm.xlu0 %756, %v55
    %v758 = vpop.permute.xlu0 %757
    %760 = vset.pattern.permute.xlu0 1
    %761 = vperm.xlu0 %760, %v56
    %v762 = vpop.permute.xlu0 %761
    %764 = vset.pattern.permute.xlu0 1
    %765 = vperm.xlu0 %764, %v57
    %v766 = vpop.permute.xlu0 %765
    %v770 = vperm.slane %v60, 0
    %v771 = vperm.slane %v61, 0
    %v774 = vmul.f32 %v642, %v770
    %v775 = vmul.f32 %v646, %v770
    %v776 = vmul.f32 %v650, %v770
    %v777 = vmul.f32 %v654, %v770
    %v778 = vmul.f32 %v658, %v770
    %v779 = vmul.f32 %v662, %v770
    %v780 = vmul.f32 %v666, %v770
    %v781 = vmul.f32 %v670, %v770
    %v782 = vmul.f32 %v674, %v770
    %v783 = vmul.f32 %v678, %v770
    %v784 = vmul.f32 %v682, %v770
    %v785 = vmul.f32 %v686, %v770
    %v786 = vmul.f32 %v690, %v770
    %v787 = vmul.f32 %v694, %v770
    %v788 = vmul.f32 %v698, %v770
    %v789 = vmul.f32 %v702, %v770
    %v790 = vmul.f32 %v706, %v770
    %v791 = vmul.f32 %v710, %v770
    %v792 = vmul.f32 %v714, %v770
    %v793 = vmul.f32 %v718, %v770
    %v794 = vmul.f32 %v722, %v770
    %v795 = vmul.f32 %v726, %v770
    %v796 = vmul.f32 %v730, %v770
    %v797 = vmul.f32 %v734, %v770
    %v798 = vmul.f32 %v738, %v770
    %v799 = vmul.f32 %v742, %v770
    %v800 = vmul.f32 %v746, %v770
    %v801 = vmul.f32 %v750, %v770
    %v802 = vmul.f32 %v754, %v770
    %v803 = vmul.f32 %v758, %v770
    %v804 = vmul.f32 %v762, %v770
    %v805 = vmul.f32 %v766, %v770
    %v806 = vmul.f32 %v642, %v771
    %v807 = vmul.f32 %v646, %v771
    %v808 = vmul.f32 %v650, %v771
    %v809 = vmul.f32 %v654, %v771
    %v810 = vmul.f32 %v658, %v771
    %v811 = vmul.f32 %v662, %v771
    %v812 = vmul.f32 %v666, %v771
    %v813 = vmul.f32 %v670, %v771
    %v814 = vmul.f32 %v674, %v771
    %v815 = vmul.f32 %v678, %v771
    %v816 = vmul.f32 %v682, %v771
    %v817 = vmul.f32 %v686, %v771
    %v818 = vmul.f32 %v690, %v771
    %v819 = vmul.f32 %v694, %v771
    %v820 = vmul.f32 %v698, %v771
    %v821 = vmul.f32 %v702, %v771
    %v822 = vmul.f32 %v706, %v771
    %v823 = vmul.f32 %v710, %v771
    %v824 = vmul.f32 %v714, %v771
    %v825 = vmul.f32 %v718, %v771
    %v826 = vmul.f32 %v722, %v771
    %v827 = vmul.f32 %v726, %v771
    %v828 = vmul.f32 %v730, %v771
    %v829 = vmul.f32 %v734, %v771
    %v830 = vmul.f32 %v738, %v771
    %v831 = vmul.f32 %v742, %v771
    %v832 = vmul.f32 %v746, %v771
    %v833 = vmul.f32 %v750, %v771
    %v834 = vmul.f32 %v754, %v771
    %v835 = vmul.f32 %v758, %v771
    %v836 = vmul.f32 %v762, %v771
    %v837 = vmul.f32 %v766, %v771
    %v838 = vadd.f32 %v576, %v774
    %v839 = vadd.f32 %v577, %v775
    %v840 = vadd.f32 %v578, %v776
    %v841 = vadd.f32 %v579, %v777
    %v842 = vadd.f32 %v580, %v778
    %v843 = vadd.f32 %v581, %v779
    %v844 = vadd.f32 %v582, %v780
    %v845 = vadd.f32 %v583, %v781
    %v846 = vadd.f32 %v584, %v782
    %v847 = vadd.f32 %v585, %v783
    %v848 = vadd.f32 %v586, %v784
    %v849 = vadd.f32 %v587, %v785
    %v850 = vadd.f32 %v588, %v786
    %v851 = vadd.f32 %v589, %v787
    %v852 = vadd.f32 %v590, %v788
    %v853 = vadd.f32 %v591, %v789
    %v854 = vadd.f32 %v592, %v790
    %v855 = vadd.f32 %v593, %v791
    %v856 = vadd.f32 %v594, %v792
    %v857 = vadd.f32 %v595, %v793
    %v858 = vadd.f32 %v596, %v794
    %v859 = vadd.f32 %v597, %v795
    %v860 = vadd.f32 %v598, %v796
    %v861 = vadd.f32 %v599, %v797
    %v862 = vadd.f32 %v600, %v798
    %v863 = vadd.f32 %v601, %v799
    %v864 = vadd.f32 %v602, %v800
    %v865 = vadd.f32 %v603, %v801
    %v866 = vadd.f32 %v604, %v802
    %v867 = vadd.f32 %v605, %v803
    %v868 = vadd.f32 %v606, %v804
    %v869 = vadd.f32 %v607, %v805
    %v870 = vadd.f32 %v608, %v806
    %v871 = vadd.f32 %v609, %v807
    %v872 = vadd.f32 %v610, %v808
    %v873 = vadd.f32 %v611, %v809
    %v874 = vadd.f32 %v612, %v810
    %v875 = vadd.f32 %v613, %v811
    %v876 = vadd.f32 %v614, %v812
    %v877 = vadd.f32 %v615, %v813
    %v878 = vadd.f32 %v616, %v814
    %v879 = vadd.f32 %v617, %v815
    %v880 = vadd.f32 %v618, %v816
    %v881 = vadd.f32 %v619, %v817
    %v882 = vadd.f32 %v620, %v818
    %v883 = vadd.f32 %v621, %v819
    %v884 = vadd.f32 %v622, %v820
    %v885 = vadd.f32 %v623, %v821
    %v886 = vadd.f32 %v624, %v822
    %v887 = vadd.f32 %v625, %v823
    %v888 = vadd.f32 %v626, %v824
    %v889 = vadd.f32 %v627, %v825
    %v890 = vadd.f32 %v628, %v826
    %v891 = vadd.f32 %v629, %v827
    %v892 = vadd.f32 %v630, %v828
    %v893 = vadd.f32 %v631, %v829
    %v894 = vadd.f32 %v632, %v830
    %v895 = vadd.f32 %v633, %v831
    %v896 = vadd.f32 %v634, %v832
    %v897 = vadd.f32 %v635, %v833
    %v898 = vadd.f32 %v636, %v834
    %v899 = vadd.f32 %v637, %v835
    %v900 = vadd.f32 %v638, %v836
    %v901 = vadd.f32 %v639, %v837
    %902 = vset.pattern.permute.xlu0 2
    %903 = vperm.xlu0 %902, %v26
    %v904 = vpop.permute.xlu0 %903
    %906 = vset.pattern.permute.xlu0 2
    %907 = vperm.xlu0 %906, %v27
    %v908 = vpop.permute.xlu0 %907
    %910 = vset.pattern.permute.xlu0 2
    %911 = vperm.xlu0 %910, %v28
    %v912 = vpop.permute.xlu0 %911
    %914 = vset.pattern.permute.xlu0 2
    %915 = vperm.xlu0 %914, %v29
    %v916 = vpop.permute.xlu0 %915
    %918 = vset.pattern.permute.xlu0 2
    %919 = vperm.xlu0 %918, %v30
    %v920 = vpop.permute.xlu0 %919
    %922 = vset.pattern.permute.xlu0 2
    %923 = vperm.xlu0 %922, %v31
    %v924 = vpop.permute.xlu0 %923
    %926 = vset.pattern.permute.xlu0 2
    %927 = vperm.xlu0 %926, %v32
    %v928 = vpop.permute.xlu0 %927
    %930 = vset.pattern.permute.xlu0 2
    %931 = vperm.xlu0 %930, %v33
    %v932 = vpop.permute.xlu0 %931
    %934 = vset.pattern.permute.xlu0 2
    %935 = vperm.xlu0 %934, %v34
    %v936 = vpop.permute.xlu0 %935
    %938 = vset.pattern.permute.xlu0 2
    %939 = vperm.xlu0 %938, %v35
    %v940 = vpop.permute.xlu0 %939
    %942 = vset.pattern.permute.xlu0 2
    %943 = vperm.xlu0 %942, %v36
    %v944 = vpop.permute.xlu0 %943
    %946 = vset.pattern.permute.xlu0 2
    %947 = vperm.xlu0 %946, %v37
    %v948 = vpop.permute.xlu0 %947
    %950 = vset.pattern.permute.xlu0 2
    %951 = vperm.xlu0 %950, %v38
    %v952 = vpop.permute.xlu0 %951
    %954 = vset.pattern.permute.xlu0 2
    %955 = vperm.xlu0 %954, %v39
    %v956 = vpop.permute.xlu0 %955
    %958 = vset.pattern.permute.xlu0 2
    %959 = vperm.xlu0 %958, %v40
    %v960 = vpop.permute.xlu0 %959
    %962 = vset.pattern.permute.xlu0 2
    %963 = vperm.xlu0 %962, %v41
    %v964 = vpop.permute.xlu0 %963
    %966 = vset.pattern.permute.xlu0 2
    %967 = vperm.xlu0 %966, %v42
    %v968 = vpop.permute.xlu0 %967
    %970 = vset.pattern.permute.xlu0 2
    %971 = vperm.xlu0 %970, %v43
    %v972 = vpop.permute.xlu0 %971
    %974 = vset.pattern.permute.xlu0 2
    %975 = vperm.xlu0 %974, %v44
    %v976 = vpop.permute.xlu0 %975
    %978 = vset.pattern.permute.xlu0 2
    %979 = vperm.xlu0 %978, %v45
    %v980 = vpop.permute.xlu0 %979
    %982 = vset.pattern.permute.xlu0 2
    %983 = vperm.xlu0 %982, %v46
    %v984 = vpop.permute.xlu0 %983
    %986 = vset.pattern.permute.xlu0 2
    %987 = vperm.xlu0 %986, %v47
    %v988 = vpop.permute.xlu0 %987
    %990 = vset.pattern.permute.xlu0 2
    %991 = vperm.xlu0 %990, %v48
    %v992 = vpop.permute.xlu0 %991
    %994 = vset.pattern.permute.xlu0 2
    %995 = vperm.xlu0 %994, %v49
    %v996 = vpop.permute.xlu0 %995
    %998 = vset.pattern.permute.xlu0 2
    %999 = vperm.xlu0 %998, %v50
    %v1000 = vpop.permute.xlu0 %999
    %1002 = vset.pattern.permute.xlu0 2
    %1003 = vperm.xlu0 %1002, %v51
    %v1004 = vpop.permute.xlu0 %1003
    %1006 = vset.pattern.permute.xlu0 2
    %1007 = vperm.xlu0 %1006, %v52
    %v1008 = vpop.permute.xlu0 %1007
    %1010 = vset.pattern.permute.xlu0 2
    %1011 = vperm.xlu0 %1010, %v53
    %v1012 = vpop.permute.xlu0 %1011
    %1014 = vset.pattern.permute.xlu0 2
    %1015 = vperm.xlu0 %1014, %v54
    %v1016 = vpop.permute.xlu0 %1015
    %1018 = vset.pattern.permute.xlu0 2
    %1019 = vperm.xlu0 %1018, %v55
    %v1020 = vpop.permute.xlu0 %1019
    %1022 = vset.pattern.permute.xlu0 2
    %1023 = vperm.xlu0 %1022, %v56
    %v1024 = vpop.permute.xlu0 %1023
    %1026 = vset.pattern.permute.xlu0 2
    %1027 = vperm.xlu0 %1026, %v57
    %v1028 = vpop.permute.xlu0 %1027
    %v1032 = vperm.slane %v62, 0
    %v1033 = vperm.slane %v63, 0
    %v1036 = vmul.f32 %v904, %v1032
    %v1037 = vmul.f32 %v908, %v1032
    %v1038 = vmul.f32 %v912, %v1032
    %v1039 = vmul.f32 %v916, %v1032
    %v1040 = vmul.f32 %v920, %v1032
    %v1041 = vmul.f32 %v924, %v1032
    %v1042 = vmul.f32 %v928, %v1032
    %v1043 = vmul.f32 %v932, %v1032
    %v1044 = vmul.f32 %v936, %v1032
    %v1045 = vmul.f32 %v940, %v1032
    %v1046 = vmul.f32 %v944, %v1032
    %v1047 = vmul.f32 %v948, %v1032
    %v1048 = vmul.f32 %v952, %v1032
    %v1049 = vmul.f32 %v956, %v1032
    %v1050 = vmul.f32 %v960, %v1032
    %v1051 = vmul.f32 %v964, %v1032
    %v1052 = vmul.f32 %v968, %v1032
    %v1053 = vmul.f32 %v972, %v1032
    %v1054 = vmul.f32 %v976, %v1032
    %v1055 = vmul.f32 %v980, %v1032
    %v1056 = vmul.f32 %v984, %v1032
    %v1057 = vmul.f32 %v988, %v1032
    %v1058 = vmul.f32 %v992, %v1032
    %v1059 = vmul.f32 %v996, %v1032
    %v1060 = vmul.f32 %v1000, %v1032
    %v1061 = vmul.f32 %v1004, %v1032
    %v1062 = vmul.f32 %v1008, %v1032
    %v1063 = vmul.f32 %v1012, %v1032
    %v1064 = vmul.f32 %v1016, %v1032
    %v1065 = vmul.f32 %v1020, %v1032
    %v1066 = vmul.f32 %v1024, %v1032
    %v1067 = vmul.f32 %v1028, %v1032
    %v1068 = vmul.f32 %v904, %v1033
    %v1069 = vmul.f32 %v908, %v1033
    %v1070 = vmul.f32 %v912, %v1033
    %v1071 = vmul.f32 %v916, %v1033
    %v1072 = vmul.f32 %v920, %v1033
    %v1073 = vmul.f32 %v924, %v1033
    %v1074 = vmul.f32 %v928, %v1033
    %v1075 = vmul.f32 %v932, %v1033
    %v1076 = vmul.f32 %v936, %v1033
    %v1077 = vmul.f32 %v940, %v1033
    %v1078 = vmul.f32 %v944, %v1033
    %v1079 = vmul.f32 %v948, %v1033
    %v1080 = vmul.f32 %v952, %v1033
    %v1081 = vmul.f32 %v956, %v1033
    %v1082 = vmul.f32 %v960, %v1033
    %v1083 = vmul.f32 %v964, %v1033
    %v1084 = vmul.f32 %v968, %v1033
    %v1085 = vmul.f32 %v972, %v1033
    %v1086 = vmul.f32 %v976, %v1033
    %v1087 = vmul.f32 %v980, %v1033
    %v1088 = vmul.f32 %v984, %v1033
    %v1089 = vmul.f32 %v988, %v1033
    %v1090 = vmul.f32 %v992, %v1033
    %v1091 = vmul.f32 %v996, %v1033
    %v1092 = vmul.f32 %v1000, %v1033
    %v1093 = vmul.f32 %v1004, %v1033
    %v1094 = vmul.f32 %v1008, %v1033
    %v1095 = vmul.f32 %v1012, %v1033
    %v1096 = vmul.f32 %v1016, %v1033
    %v1097 = vmul.f32 %v1020, %v1033
    %v1098 = vmul.f32 %v1024, %v1033
    %v1099 = vmul.f32 %v1028, %v1033
    %v1100 = vadd.f32 %v838, %v1036
    %v1101 = vadd.f32 %v839, %v1037
    %v1102 = vadd.f32 %v840, %v1038
    %v1103 = vadd.f32 %v841, %v1039
    %v1104 = vadd.f32 %v842, %v1040
    %v1105 = vadd.f32 %v843, %v1041
    %v1106 = vadd.f32 %v844, %v1042
    %v1107 = vadd.f32 %v845, %v1043
    %v1108 = vadd.f32 %v846, %v1044
    %v1109 = vadd.f32 %v847, %v1045
    %v1110 = vadd.f32 %v848, %v1046
    %v1111 = vadd.f32 %v849, %v1047
    %v1112 = vadd.f32 %v850, %v1048
    %v1113 = vadd.f32 %v851, %v1049
    %v1114 = vadd.f32 %v852, %v1050
    %v1115 = vadd.f32 %v853, %v1051
    %v1116 = vadd.f32 %v854, %v1052
    %v1117 = vadd.f32 %v855, %v1053
    %v1118 = vadd.f32 %v856, %v1054
    %v1119 = vadd.f32 %v857, %v1055
    %v1120 = vadd.f32 %v858, %v1056
    %v1121 = vadd.f32 %v859, %v1057
    %v1122 = vadd.f32 %v860, %v1058
    %v1123 = vadd.f32 %v861, %v1059
    %v1124 = vadd.f32 %v862, %v1060
    %v1125 = vadd.f32 %v863, %v1061
    %v1126 = vadd.f32 %v864, %v1062
    %v1127 = vadd.f32 %v865, %v1063
    %v1128 = vadd.f32 %v866, %v1064
    %v1129 = vadd.f32 %v867, %v1065
    %v1130 = vadd.f32 %v868, %v1066
    %v1131 = vadd.f32 %v869, %v1067
    %v1132 = vadd.f32 %v870, %v1068
    %v1133 = vadd.f32 %v871, %v1069
    %v1134 = vadd.f32 %v872, %v1070
    %v1135 = vadd.f32 %v873, %v1071
    %v1136 = vadd.f32 %v874, %v1072
    %v1137 = vadd.f32 %v875, %v1073
    %v1138 = vadd.f32 %v876, %v1074
    %v1139 = vadd.f32 %v877, %v1075
    %v1140 = vadd.f32 %v878, %v1076
    %v1141 = vadd.f32 %v879, %v1077
    %v1142 = vadd.f32 %v880, %v1078
    %v1143 = vadd.f32 %v881, %v1079
    %v1144 = vadd.f32 %v882, %v1080
    %v1145 = vadd.f32 %v883, %v1081
    %v1146 = vadd.f32 %v884, %v1082
    %v1147 = vadd.f32 %v885, %v1083
    %v1148 = vadd.f32 %v886, %v1084
    %v1149 = vadd.f32 %v887, %v1085
    %v1150 = vadd.f32 %v888, %v1086
    %v1151 = vadd.f32 %v889, %v1087
    %v1152 = vadd.f32 %v890, %v1088
    %v1153 = vadd.f32 %v891, %v1089
    %v1154 = vadd.f32 %v892, %v1090
    %v1155 = vadd.f32 %v893, %v1091
    %v1156 = vadd.f32 %v894, %v1092
    %v1157 = vadd.f32 %v895, %v1093
    %v1158 = vadd.f32 %v896, %v1094
    %v1159 = vadd.f32 %v897, %v1095
    %v1160 = vadd.f32 %v898, %v1096
    %v1161 = vadd.f32 %v899, %v1097
    %v1162 = vadd.f32 %v900, %v1098
    %v1163 = vadd.f32 %v901, %v1099
    %vm1164 = vcmp.gt.f32.partialorder %v1100, 0.0
    %vm1165 = vcmp.gt.f32.partialorder %v1101, 0.0
    %vm1166 = vcmp.gt.f32.partialorder %v1102, 0.0
    %vm1167 = vcmp.gt.f32.partialorder %v1103, 0.0
    %vm1168 = vcmp.gt.f32.partialorder %v1104, 0.0
    %vm1169 = vcmp.gt.f32.partialorder %v1105, 0.0
    %vm1170 = vcmp.gt.f32.partialorder %v1106, 0.0
    %vm1171 = vcmp.gt.f32.partialorder %v1107, 0.0
    %vm1172 = vcmp.gt.f32.partialorder %v1108, 0.0
    %vm1173 = vcmp.gt.f32.partialorder %v1109, 0.0
    %vm1174 = vcmp.gt.f32.partialorder %v1110, 0.0
    %vm1175 = vcmp.gt.f32.partialorder %v1111, 0.0
    %vm1176 = vcmp.gt.f32.partialorder %v1112, 0.0
    %vm1177 = vcmp.gt.f32.partialorder %v1113, 0.0
    %vm1178 = vcmp.gt.f32.partialorder %v1114, 0.0
    %vm1179 = vcmp.gt.f32.partialorder %v1115, 0.0
    %vm1180 = vcmp.gt.f32.partialorder %v1116, 0.0
    %vm1181 = vcmp.gt.f32.partialorder %v1117, 0.0
    %vm1182 = vcmp.gt.f32.partialorder %v1118, 0.0
    %vm1183 = vcmp.gt.f32.partialorder %v1119, 0.0
    %vm1184 = vcmp.gt.f32.partialorder %v1120, 0.0
    %vm1185 = vcmp.gt.f32.partialorder %v1121, 0.0
    %vm1186 = vcmp.gt.f32.partialorder %v1122, 0.0
    %vm1187 = vcmp.gt.f32.partialorder %v1123, 0.0
    %vm1188 = vcmp.gt.f32.partialorder %v1124, 0.0
    %vm1189 = vcmp.gt.f32.partialorder %v1125, 0.0
    %vm1190 = vcmp.gt.f32.partialorder %v1126, 0.0
    %vm1191 = vcmp.gt.f32.partialorder %v1127, 0.0
    %vm1192 = vcmp.gt.f32.partialorder %v1128, 0.0
    %vm1193 = vcmp.gt.f32.partialorder %v1129, 0.0
    %vm1194 = vcmp.gt.f32.partialorder %v1130, 0.0
    %vm1195 = vcmp.gt.f32.partialorder %v1131, 0.0
    %vm1196 = vcmp.gt.f32.partialorder %v1132, 0.0
    %vm1197 = vcmp.gt.f32.partialorder %v1133, 0.0
    %vm1198 = vcmp.gt.f32.partialorder %v1134, 0.0
    %vm1199 = vcmp.gt.f32.partialorder %v1135, 0.0
    %vm1200 = vcmp.gt.f32.partialorder %v1136, 0.0
    %vm1201 = vcmp.gt.f32.partialorder %v1137, 0.0
    %vm1202 = vcmp.gt.f32.partialorder %v1138, 0.0
    %vm1203 = vcmp.gt.f32.partialorder %v1139, 0.0
    %vm1204 = vcmp.gt.f32.partialorder %v1140, 0.0
    %vm1205 = vcmp.gt.f32.partialorder %v1141, 0.0
    %vm1206 = vcmp.gt.f32.partialorder %v1142, 0.0
    %vm1207 = vcmp.gt.f32.partialorder %v1143, 0.0
    %vm1208 = vcmp.gt.f32.partialorder %v1144, 0.0
    %vm1209 = vcmp.gt.f32.partialorder %v1145, 0.0
    %vm1210 = vcmp.gt.f32.partialorder %v1146, 0.0
    %vm1211 = vcmp.gt.f32.partialorder %v1147, 0.0
    %vm1212 = vcmp.gt.f32.partialorder %v1148, 0.0
    %vm1213 = vcmp.gt.f32.partialorder %v1149, 0.0
    %vm1214 = vcmp.gt.f32.partialorder %v1150, 0.0
    %vm1215 = vcmp.gt.f32.partialorder %v1151, 0.0
    %vm1216 = vcmp.gt.f32.partialorder %v1152, 0.0
    %vm1217 = vcmp.gt.f32.partialorder %v1153, 0.0
    %vm1218 = vcmp.gt.f32.partialorder %v1154, 0.0
    %vm1219 = vcmp.gt.f32.partialorder %v1155, 0.0
    %vm1220 = vcmp.gt.f32.partialorder %v1156, 0.0
    %vm1221 = vcmp.gt.f32.partialorder %v1157, 0.0
    %vm1222 = vcmp.gt.f32.partialorder %v1158, 0.0
    %vm1223 = vcmp.gt.f32.partialorder %v1159, 0.0
    %vm1224 = vcmp.gt.f32.partialorder %v1160, 0.0
    %vm1225 = vcmp.gt.f32.partialorder %v1161, 0.0
    %vm1226 = vcmp.gt.f32.partialorder %v1162, 0.0
    %vm1227 = vcmp.gt.f32.partialorder %v1163, 0.0
    %v1228 = vmul.f32 %v1100, 0.2
    %v1229 = vmul.f32 %v1101, 0.2
    %v1230 = vmul.f32 %v1102, 0.2
    %v1231 = vmul.f32 %v1103, 0.2
    %v1232 = vmul.f32 %v1104, 0.2
    %v1233 = vmul.f32 %v1105, 0.2
    %v1234 = vmul.f32 %v1106, 0.2
    %v1235 = vmul.f32 %v1107, 0.2
    %v1236 = vmul.f32 %v1108, 0.2
    %v1237 = vmul.f32 %v1109, 0.2
    %v1238 = vmul.f32 %v1110, 0.2
    %v1239 = vmul.f32 %v1111, 0.2
    %v1240 = vmul.f32 %v1112, 0.2
    %v1241 = vmul.f32 %v1113, 0.2
    %v1242 = vmul.f32 %v1114, 0.2
    %v1243 = vmul.f32 %v1115, 0.2
    %v1244 = vmul.f32 %v1116, 0.2
    %v1245 = vmul.f32 %v1117, 0.2
    %v1246 = vmul.f32 %v1118, 0.2
    %v1247 = vmul.f32 %v1119, 0.2
    %v1248 = vmul.f32 %v1120, 0.2
    %v1249 = vmul.f32 %v1121, 0.2
    %v1250 = vmul.f32 %v1122, 0.2
    %v1251 = vmul.f32 %v1123, 0.2
    %v1252 = vmul.f32 %v1124, 0.2
    %v1253 = vmul.f32 %v1125, 0.2
    %v1254 = vmul.f32 %v1126, 0.2
    %v1255 = vmul.f32 %v1127, 0.2
    %v1256 = vmul.f32 %v1128, 0.2
    %v1257 = vmul.f32 %v1129, 0.2
    %v1258 = vmul.f32 %v1130, 0.2
    %v1259 = vmul.f32 %v1131, 0.2
    %v1260 = vmul.f32 %v1132, 0.2
    %v1261 = vmul.f32 %v1133, 0.2
    %v1262 = vmul.f32 %v1134, 0.2
    %v1263 = vmul.f32 %v1135, 0.2
    %v1264 = vmul.f32 %v1136, 0.2
    %v1265 = vmul.f32 %v1137, 0.2
    %v1266 = vmul.f32 %v1138, 0.2
    %v1267 = vmul.f32 %v1139, 0.2
    %v1268 = vmul.f32 %v1140, 0.2
    %v1269 = vmul.f32 %v1141, 0.2
    %v1270 = vmul.f32 %v1142, 0.2
    %v1271 = vmul.f32 %v1143, 0.2
    %v1272 = vmul.f32 %v1144, 0.2
    %v1273 = vmul.f32 %v1145, 0.2
    %v1274 = vmul.f32 %v1146, 0.2
    %v1275 = vmul.f32 %v1147, 0.2
    %v1276 = vmul.f32 %v1148, 0.2
    %v1277 = vmul.f32 %v1149, 0.2
    %v1278 = vmul.f32 %v1150, 0.2
    %v1279 = vmul.f32 %v1151, 0.2
    %v1280 = vmul.f32 %v1152, 0.2
    %v1281 = vmul.f32 %v1153, 0.2
    %v1282 = vmul.f32 %v1154, 0.2
    %v1283 = vmul.f32 %v1155, 0.2
    %v1284 = vmul.f32 %v1156, 0.2
    %v1285 = vmul.f32 %v1157, 0.2
    %v1286 = vmul.f32 %v1158, 0.2
    %v1287 = vmul.f32 %v1159, 0.2
    %v1288 = vmul.f32 %v1160, 0.2
    %v1289 = vmul.f32 %v1161, 0.2
    %v1290 = vmul.f32 %v1162, 0.2
    %v1291 = vmul.f32 %v1163, 0.2
    %v1292 = vsel %vm1164, %v1100, %v1228
    %v1293 = vsel %vm1165, %v1101, %v1229
    %v1294 = vsel %vm1166, %v1102, %v1230
    %v1295 = vsel %vm1167, %v1103, %v1231
    %v1296 = vsel %vm1168, %v1104, %v1232
    %v1297 = vsel %vm1169, %v1105, %v1233
    %v1298 = vsel %vm1170, %v1106, %v1234
    %v1299 = vsel %vm1171, %v1107, %v1235
    %v1300 = vsel %vm1172, %v1108, %v1236
    %v1301 = vsel %vm1173, %v1109, %v1237
    %v1302 = vsel %vm1174, %v1110, %v1238
    %v1303 = vsel %vm1175, %v1111, %v1239
    %v1304 = vsel %vm1176, %v1112, %v1240
    %v1305 = vsel %vm1177, %v1113, %v1241
    %v1306 = vsel %vm1178, %v1114, %v1242
    %v1307 = vsel %vm1179, %v1115, %v1243
    %v1308 = vsel %vm1180, %v1116, %v1244
    %v1309 = vsel %vm1181, %v1117, %v1245
    %v1310 = vsel %vm1182, %v1118, %v1246
    %v1311 = vsel %vm1183, %v1119, %v1247
    %v1312 = vsel %vm1184, %v1120, %v1248
    %v1313 = vsel %vm1185, %v1121, %v1249
    %v1314 = vsel %vm1186, %v1122, %v1250
    %v1315 = vsel %vm1187, %v1123, %v1251
    %v1316 = vsel %vm1188, %v1124, %v1252
    %v1317 = vsel %vm1189, %v1125, %v1253
    %v1318 = vsel %vm1190, %v1126, %v1254
    %v1319 = vsel %vm1191, %v1127, %v1255
    %v1320 = vsel %vm1192, %v1128, %v1256
    %v1321 = vsel %vm1193, %v1129, %v1257
    %v1322 = vsel %vm1194, %v1130, %v1258
    %v1323 = vsel %vm1195, %v1131, %v1259
    %v1324 = vsel %vm1196, %v1132, %v1260
    %v1325 = vsel %vm1197, %v1133, %v1261
    %v1326 = vsel %vm1198, %v1134, %v1262
    %v1327 = vsel %vm1199, %v1135, %v1263
    %v1328 = vsel %vm1200, %v1136, %v1264
    %v1329 = vsel %vm1201, %v1137, %v1265
    %v1330 = vsel %vm1202, %v1138, %v1266
    %v1331 = vsel %vm1203, %v1139, %v1267
    %v1332 = vsel %vm1204, %v1140, %v1268
    %v1333 = vsel %vm1205, %v1141, %v1269
    %v1334 = vsel %vm1206, %v1142, %v1270
    %v1335 = vsel %vm1207, %v1143, %v1271
    %v1336 = vsel %vm1208, %v1144, %v1272
    %v1337 = vsel %vm1209, %v1145, %v1273
    %v1338 = vsel %vm1210, %v1146, %v1274
    %v1339 = vsel %vm1211, %v1147, %v1275
    %v1340 = vsel %vm1212, %v1148, %v1276
    %v1341 = vsel %vm1213, %v1149, %v1277
    %v1342 = vsel %vm1214, %v1150, %v1278
    %v1343 = vsel %vm1215, %v1151, %v1279
    %v1344 = vsel %vm1216, %v1152, %v1280
    %v1345 = vsel %vm1217, %v1153, %v1281
    %v1346 = vsel %vm1218, %v1154, %v1282
    %v1347 = vsel %vm1219, %v1155, %v1283
    %v1348 = vsel %vm1220, %v1156, %v1284
    %v1349 = vsel %vm1221, %v1157, %v1285
    %v1350 = vsel %vm1222, %v1158, %v1286
    %v1351 = vsel %vm1223, %v1159, %v1287
    %v1352 = vsel %vm1224, %v1160, %v1288
    %v1353 = vsel %vm1225, %v1161, %v1289
    %v1354 = vsel %vm1226, %v1162, %v1290
    %v1355 = vsel %vm1227, %v1163, %v1291
    %v1358 = vperm.slane %v64, 0
    %v1359 = vperm.slane %v65, 0
    %v1362 = vmul.f32 %v1292, %v1358
    %v1363 = vmul.f32 %v1293, %v1358
    %v1364 = vmul.f32 %v1294, %v1358
    %v1365 = vmul.f32 %v1295, %v1358
    %v1366 = vmul.f32 %v1296, %v1358
    %v1367 = vmul.f32 %v1297, %v1358
    %v1368 = vmul.f32 %v1298, %v1358
    %v1369 = vmul.f32 %v1299, %v1358
    %v1370 = vmul.f32 %v1300, %v1358
    %v1371 = vmul.f32 %v1301, %v1358
    %v1372 = vmul.f32 %v1302, %v1358
    %v1373 = vmul.f32 %v1303, %v1358
    %v1374 = vmul.f32 %v1304, %v1358
    %v1375 = vmul.f32 %v1305, %v1358
    %v1376 = vmul.f32 %v1306, %v1358
    %v1377 = vmul.f32 %v1307, %v1358
    %v1378 = vmul.f32 %v1308, %v1358
    %v1379 = vmul.f32 %v1309, %v1358
    %v1380 = vmul.f32 %v1310, %v1358
    %v1381 = vmul.f32 %v1311, %v1358
    %v1382 = vmul.f32 %v1312, %v1358
    %v1383 = vmul.f32 %v1313, %v1358
    %v1384 = vmul.f32 %v1314, %v1358
    %v1385 = vmul.f32 %v1315, %v1358
    %v1386 = vmul.f32 %v1316, %v1358
    %v1387 = vmul.f32 %v1317, %v1358
    %v1388 = vmul.f32 %v1318, %v1358
    %v1389 = vmul.f32 %v1319, %v1358
    %v1390 = vmul.f32 %v1320, %v1358
    %v1391 = vmul.f32 %v1321, %v1358
    %v1392 = vmul.f32 %v1322, %v1358
    %v1393 = vmul.f32 %v1323, %v1358
    %v1394 = vmul.f32 %v1324, %v1359
    %v1395 = vmul.f32 %v1325, %v1359
    %v1396 = vmul.f32 %v1326, %v1359
    %v1397 = vmul.f32 %v1327, %v1359
    %v1398 = vmul.f32 %v1328, %v1359
    %v1399 = vmul.f32 %v1329, %v1359
    %v1400 = vmul.f32 %v1330, %v1359
    %v1401 = vmul.f32 %v1331, %v1359
    %v1402 = vmul.f32 %v1332, %v1359
    %v1403 = vmul.f32 %v1333, %v1359
    %v1404 = vmul.f32 %v1334, %v1359
    %v1405 = vmul.f32 %v1335, %v1359
    %v1406 = vmul.f32 %v1336, %v1359
    %v1407 = vmul.f32 %v1337, %v1359
    %v1408 = vmul.f32 %v1338, %v1359
    %v1409 = vmul.f32 %v1339, %v1359
    %v1410 = vmul.f32 %v1340, %v1359
    %v1411 = vmul.f32 %v1341, %v1359
    %v1412 = vmul.f32 %v1342, %v1359
    %v1413 = vmul.f32 %v1343, %v1359
    %v1414 = vmul.f32 %v1344, %v1359
    %v1415 = vmul.f32 %v1345, %v1359
    %v1416 = vmul.f32 %v1346, %v1359
    %v1417 = vmul.f32 %v1347, %v1359
    %v1418 = vmul.f32 %v1348, %v1359
    %v1419 = vmul.f32 %v1349, %v1359
    %v1420 = vmul.f32 %v1350, %v1359
    %v1421 = vmul.f32 %v1351, %v1359
    %v1422 = vmul.f32 %v1352, %v1359
    %v1423 = vmul.f32 %v1353, %v1359
    %v1424 = vmul.f32 %v1354, %v1359
    %v1425 = vmul.f32 %v1355, %v1359
    %1426 = vadd.xlane.f32.xlu0 %v1362
    %v1427 = vpop.xlane.xlu0 %1426
    %1428 = vadd.xlane.f32.xlu0 %v1363
    %v1429 = vpop.xlane.xlu0 %1428
    %1430 = vadd.xlane.f32.xlu0 %v1364
    %v1431 = vpop.xlane.xlu0 %1430
    %1432 = vadd.xlane.f32.xlu0 %v1365
    %v1433 = vpop.xlane.xlu0 %1432
    %1434 = vadd.xlane.f32.xlu0 %v1366
    %v1435 = vpop.xlane.xlu0 %1434
    %1436 = vadd.xlane.f32.xlu0 %v1367
    %v1437 = vpop.xlane.xlu0 %1436
    %1438 = vadd.xlane.f32.xlu0 %v1368
    %v1439 = vpop.xlane.xlu0 %1438
    %1440 = vadd.xlane.f32.xlu0 %v1369
    %v1441 = vpop.xlane.xlu0 %1440
    %1442 = vadd.xlane.f32.xlu0 %v1370
    %v1443 = vpop.xlane.xlu0 %1442
    %1444 = vadd.xlane.f32.xlu0 %v1371
    %v1445 = vpop.xlane.xlu0 %1444
    %1446 = vadd.xlane.f32.xlu0 %v1372
    %v1447 = vpop.xlane.xlu0 %1446
    %1448 = vadd.xlane.f32.xlu0 %v1373
    %v1449 = vpop.xlane.xlu0 %1448
    %1450 = vadd.xlane.f32.xlu0 %v1374
    %v1451 = vpop.xlane.xlu0 %1450
    %1452 = vadd.xlane.f32.xlu0 %v1375
    %v1453 = vpop.xlane.xlu0 %1452
    %1454 = vadd.xlane.f32.xlu0 %v1376
    %v1455 = vpop.xlane.xlu0 %1454
    %1456 = vadd.xlane.f32.xlu0 %v1377
    %v1457 = vpop.xlane.xlu0 %1456
    %1458 = vadd.xlane.f32.xlu0 %v1378
    %v1459 = vpop.xlane.xlu0 %1458
    %1460 = vadd.xlane.f32.xlu0 %v1379
    %v1461 = vpop.xlane.xlu0 %1460
    %1462 = vadd.xlane.f32.xlu0 %v1380
    %v1463 = vpop.xlane.xlu0 %1462
    %1464 = vadd.xlane.f32.xlu0 %v1381
    %v1465 = vpop.xlane.xlu0 %1464
    %1466 = vadd.xlane.f32.xlu0 %v1382
    %v1467 = vpop.xlane.xlu0 %1466
    %1468 = vadd.xlane.f32.xlu0 %v1383
    %v1469 = vpop.xlane.xlu0 %1468
    %1470 = vadd.xlane.f32.xlu0 %v1384
    %v1471 = vpop.xlane.xlu0 %1470
    %1472 = vadd.xlane.f32.xlu0 %v1385
    %v1473 = vpop.xlane.xlu0 %1472
    %1474 = vadd.xlane.f32.xlu0 %v1386
    %v1475 = vpop.xlane.xlu0 %1474
    %1476 = vadd.xlane.f32.xlu0 %v1387
    %v1477 = vpop.xlane.xlu0 %1476
    %1478 = vadd.xlane.f32.xlu0 %v1388
    %v1479 = vpop.xlane.xlu0 %1478
    %1480 = vadd.xlane.f32.xlu0 %v1389
    %v1481 = vpop.xlane.xlu0 %1480
    %1482 = vadd.xlane.f32.xlu0 %v1390
    %v1483 = vpop.xlane.xlu0 %1482
    %1484 = vadd.xlane.f32.xlu0 %v1391
    %v1485 = vpop.xlane.xlu0 %1484
    %1486 = vadd.xlane.f32.xlu0 %v1392
    %v1487 = vpop.xlane.xlu0 %1486
    %1488 = vadd.xlane.f32.xlu0 %v1393
    %v1489 = vpop.xlane.xlu0 %1488
    %1490 = vadd.xlane.f32.xlu0 %v1394
    %v1491 = vpop.xlane.xlu0 %1490
    %1492 = vadd.xlane.f32.xlu0 %v1395
    %v1493 = vpop.xlane.xlu0 %1492
    %1494 = vadd.xlane.f32.xlu0 %v1396
    %v1495 = vpop.xlane.xlu0 %1494
    %1496 = vadd.xlane.f32.xlu0 %v1397
    %v1497 = vpop.xlane.xlu0 %1496
    %1498 = vadd.xlane.f32.xlu0 %v1398
    %v1499 = vpop.xlane.xlu0 %1498
    %1500 = vadd.xlane.f32.xlu0 %v1399
    %v1501 = vpop.xlane.xlu0 %1500
    %1502 = vadd.xlane.f32.xlu0 %v1400
    %v1503 = vpop.xlane.xlu0 %1502
    %1504 = vadd.xlane.f32.xlu0 %v1401
    %v1505 = vpop.xlane.xlu0 %1504
    %1506 = vadd.xlane.f32.xlu0 %v1402
    %v1507 = vpop.xlane.xlu0 %1506
    %1508 = vadd.xlane.f32.xlu0 %v1403
    %v1509 = vpop.xlane.xlu0 %1508
    %1510 = vadd.xlane.f32.xlu0 %v1404
    %v1511 = vpop.xlane.xlu0 %1510
    %1512 = vadd.xlane.f32.xlu0 %v1405
    %v1513 = vpop.xlane.xlu0 %1512
    %1514 = vadd.xlane.f32.xlu0 %v1406
    %v1515 = vpop.xlane.xlu0 %1514
    %1516 = vadd.xlane.f32.xlu0 %v1407
    %v1517 = vpop.xlane.xlu0 %1516
    %1518 = vadd.xlane.f32.xlu0 %v1408
    %v1519 = vpop.xlane.xlu0 %1518
    %1520 = vadd.xlane.f32.xlu0 %v1409
    %v1521 = vpop.xlane.xlu0 %1520
    %1522 = vadd.xlane.f32.xlu0 %v1410
    %v1523 = vpop.xlane.xlu0 %1522
    %1524 = vadd.xlane.f32.xlu0 %v1411
    %v1525 = vpop.xlane.xlu0 %1524
    %1526 = vadd.xlane.f32.xlu0 %v1412
    %v1527 = vpop.xlane.xlu0 %1526
    %1528 = vadd.xlane.f32.xlu0 %v1413
    %v1529 = vpop.xlane.xlu0 %1528
    %1530 = vadd.xlane.f32.xlu0 %v1414
    %v1531 = vpop.xlane.xlu0 %1530
    %1532 = vadd.xlane.f32.xlu0 %v1415
    %v1533 = vpop.xlane.xlu0 %1532
    %1534 = vadd.xlane.f32.xlu0 %v1416
    %v1535 = vpop.xlane.xlu0 %1534
    %1536 = vadd.xlane.f32.xlu0 %v1417
    %v1537 = vpop.xlane.xlu0 %1536
    %1538 = vadd.xlane.f32.xlu0 %v1418
    %v1539 = vpop.xlane.xlu0 %1538
    %1540 = vadd.xlane.f32.xlu0 %v1419
    %v1541 = vpop.xlane.xlu0 %1540
    %1542 = vadd.xlane.f32.xlu0 %v1420
    %v1543 = vpop.xlane.xlu0 %1542
    %1544 = vadd.xlane.f32.xlu0 %v1421
    %v1545 = vpop.xlane.xlu0 %1544
    %1546 = vadd.xlane.f32.xlu0 %v1422
    %v1547 = vpop.xlane.xlu0 %1546
    %1548 = vadd.xlane.f32.xlu0 %v1423
    %v1549 = vpop.xlane.xlu0 %1548
    %1550 = vadd.xlane.f32.xlu0 %v1424
    %v1551 = vpop.xlane.xlu0 %1550
    %1552 = vadd.xlane.f32.xlu0 %v1425
    %v1553 = vpop.xlane.xlu0 %1552
    %v1556 = vperm.slane %v79, 0
    %v1557 = vlaneseq
    %v1558 = vshrl.u32 %v1557, 7
    %1560 = vset.pattern.permute.xlu0 %v1558
    %1561 = vperm.xlu0 %1560, %v1556
    %v1562 = vpop.permute.xlu0 %1561
    %v1563 = vlaneseq
    %v1564 = vshrl.u32 %v1563, 7
    %v1565 = vadd.s32 %v1564, 8
    %1566 = vset.pattern.permute.xlu0 %v1565
    %1567 = vperm.xlu0 %1566, %v1556
    %v1568 = vpop.permute.xlu0 %1567
    %v1569 = vperm.slane %v79, 1
    %v1570 = vlaneseq
    %v1571 = vshrl.u32 %v1570, 7
    %1573 = vset.pattern.permute.xlu0 %v1571
    %1574 = vperm.xlu0 %1573, %v1569
    %v1575 = vpop.permute.xlu0 %1574
    %v1576 = vlaneseq
    %v1577 = vshrl.u32 %v1576, 7
    %v1578 = vadd.s32 %v1577, 8
    %1579 = vset.pattern.permute.xlu0 %v1578
    %1580 = vperm.xlu0 %1579, %v1569
    %v1581 = vpop.permute.xlu0 %1580
    %v1582 = vperm.slane %v79, 2
    %v1583 = vlaneseq
    %v1584 = vshrl.u32 %v1583, 7
    %1586 = vset.pattern.permute.xlu0 %v1584
    %1587 = vperm.xlu0 %1586, %v1582
    %v1588 = vpop.permute.xlu0 %1587
    %v1589 = vlaneseq
    %v1590 = vshrl.u32 %v1589, 7
    %v1591 = vadd.s32 %v1590, 8
    %1592 = vset.pattern.permute.xlu0 %v1591
    %1593 = vperm.xlu0 %1592, %v1582
    %v1594 = vpop.permute.xlu0 %1593
    %v1595 = vperm.slane %v79, 3
    %v1596 = vlaneseq
    %v1597 = vshrl.u32 %v1596, 7
    %1599 = vset.pattern.permute.xlu0 %v1597
    %1600 = vperm.xlu0 %1599, %v1595
    %v1601 = vpop.permute.xlu0 %1600
    %v1602 = vlaneseq
    %v1603 = vshrl.u32 %v1602, 7
    %v1604 = vadd.s32 %v1603, 8
    %1605 = vset.pattern.permute.xlu0 %v1604
    %1606 = vperm.xlu0 %1605, %v1595
    %v1607 = vpop.permute.xlu0 %1606
    %v1608 = vperm.slane %v79, 4
    %v1609 = vlaneseq
    %v1610 = vshrl.u32 %v1609, 7
    %1612 = vset.pattern.permute.xlu0 %v1610
    %1613 = vperm.xlu0 %1612, %v1608
    %v1614 = vpop.permute.xlu0 %1613
    %v1615 = vlaneseq
    %v1616 = vshrl.u32 %v1615, 7
    %v1617 = vadd.s32 %v1616, 8
    %1618 = vset.pattern.permute.xlu0 %v1617
    %1619 = vperm.xlu0 %1618, %v1608
    %v1620 = vpop.permute.xlu0 %1619
    %v1621 = vperm.slane %v79, 5
    %v1622 = vlaneseq
    %v1623 = vshrl.u32 %v1622, 7
    %1625 = vset.pattern.permute.xlu0 %v1623
    %1626 = vperm.xlu0 %1625, %v1621
    %v1627 = vpop.permute.xlu0 %1626
    %v1628 = vlaneseq
    %v1629 = vshrl.u32 %v1628, 7
    %v1630 = vadd.s32 %v1629, 8
    %1631 = vset.pattern.permute.xlu0 %v1630
    %1632 = vperm.xlu0 %1631, %v1621
    %v1633 = vpop.permute.xlu0 %1632
    %v1634 = vperm.slane %v79, 6
    %v1635 = vlaneseq
    %v1636 = vshrl.u32 %v1635, 7
    %1638 = vset.pattern.permute.xlu0 %v1636
    %1639 = vperm.xlu0 %1638, %v1634
    %v1640 = vpop.permute.xlu0 %1639
    %v1641 = vlaneseq
    %v1642 = vshrl.u32 %v1641, 7
    %v1643 = vadd.s32 %v1642, 8
    %1644 = vset.pattern.permute.xlu0 %v1643
    %1645 = vperm.xlu0 %1644, %v1634
    %v1646 = vpop.permute.xlu0 %1645
    %v1647 = vperm.slane %v79, 7
    %v1648 = vlaneseq
    %v1649 = vshrl.u32 %v1648, 7
    %1651 = vset.pattern.permute.xlu0 %v1649
    %1652 = vperm.xlu0 %1651, %v1647
    %v1653 = vpop.permute.xlu0 %1652
    %v1654 = vlaneseq
    %v1655 = vshrl.u32 %v1654, 7
    %v1656 = vadd.s32 %v1655, 8
    %1657 = vset.pattern.permute.xlu0 %v1656
    %1658 = vperm.xlu0 %1657, %v1647
    %v1659 = vpop.permute.xlu0 %1658
    %v1660 = vperm.slane %v80, 0
    %v1661 = vlaneseq
    %v1662 = vshrl.u32 %v1661, 7
    %1664 = vset.pattern.permute.xlu0 %v1662
    %1665 = vperm.xlu0 %1664, %v1660
    %v1666 = vpop.permute.xlu0 %1665
    %v1667 = vlaneseq
    %v1668 = vshrl.u32 %v1667, 7
    %v1669 = vadd.s32 %v1668, 8
    %1670 = vset.pattern.permute.xlu0 %v1669
    %1671 = vperm.xlu0 %1670, %v1660
    %v1672 = vpop.permute.xlu0 %1671
    %v1673 = vperm.slane %v80, 1
    %v1674 = vlaneseq
    %v1675 = vshrl.u32 %v1674, 7
    %1677 = vset.pattern.permute.xlu0 %v1675
    %1678 = vperm.xlu0 %1677, %v1673
    %v1679 = vpop.permute.xlu0 %1678
    %v1680 = vlaneseq
    %v1681 = vshrl.u32 %v1680, 7
    %v1682 = vadd.s32 %v1681, 8
    %1683 = vset.pattern.permute.xlu0 %v1682
    %1684 = vperm.xlu0 %1683, %v1673
    %v1685 = vpop.permute.xlu0 %1684
    %v1686 = vperm.slane %v80, 2
    %v1687 = vlaneseq
    %v1688 = vshrl.u32 %v1687, 7
    %1690 = vset.pattern.permute.xlu0 %v1688
    %1691 = vperm.xlu0 %1690, %v1686
    %v1692 = vpop.permute.xlu0 %1691
    %v1693 = vlaneseq
    %v1694 = vshrl.u32 %v1693, 7
    %v1695 = vadd.s32 %v1694, 8
    %1696 = vset.pattern.permute.xlu0 %v1695
    %1697 = vperm.xlu0 %1696, %v1686
    %v1698 = vpop.permute.xlu0 %1697
    %v1699 = vperm.slane %v80, 3
    %v1700 = vlaneseq
    %v1701 = vshrl.u32 %v1700, 7
    %1703 = vset.pattern.permute.xlu0 %v1701
    %1704 = vperm.xlu0 %1703, %v1699
    %v1705 = vpop.permute.xlu0 %1704
    %v1706 = vlaneseq
    %v1707 = vshrl.u32 %v1706, 7
    %v1708 = vadd.s32 %v1707, 8
    %1709 = vset.pattern.permute.xlu0 %v1708
    %1710 = vperm.xlu0 %1709, %v1699
    %v1711 = vpop.permute.xlu0 %1710
    %v1712 = vperm.slane %v80, 4
    %v1713 = vlaneseq
    %v1714 = vshrl.u32 %v1713, 7
    %1716 = vset.pattern.permute.xlu0 %v1714
    %1717 = vperm.xlu0 %1716, %v1712
    %v1718 = vpop.permute.xlu0 %1717
    %v1719 = vlaneseq
    %v1720 = vshrl.u32 %v1719, 7
    %v1721 = vadd.s32 %v1720, 8
    %1722 = vset.pattern.permute.xlu0 %v1721
    %1723 = vperm.xlu0 %1722, %v1712
    %v1724 = vpop.permute.xlu0 %1723
    %v1725 = vperm.slane %v80, 5
    %v1726 = vlaneseq
    %v1727 = vshrl.u32 %v1726, 7
    %1729 = vset.pattern.permute.xlu0 %v1727
    %1730 = vperm.xlu0 %1729, %v1725
    %v1731 = vpop.permute.xlu0 %1730
    %v1732 = vlaneseq
    %v1733 = vshrl.u32 %v1732, 7
    %v1734 = vadd.s32 %v1733, 8
    %1735 = vset.pattern.permute.xlu0 %v1734
    %1736 = vperm.xlu0 %1735, %v1725
    %v1737 = vpop.permute.xlu0 %1736
    %v1738 = vperm.slane %v80, 6
    %v1739 = vlaneseq
    %v1740 = vshrl.u32 %v1739, 7
    %1742 = vset.pattern.permute.xlu0 %v1740
    %1743 = vperm.xlu0 %1742, %v1738
    %v1744 = vpop.permute.xlu0 %1743
    %v1745 = vlaneseq
    %v1746 = vshrl.u32 %v1745, 7
    %v1747 = vadd.s32 %v1746, 8
    %1748 = vset.pattern.permute.xlu0 %v1747
    %1749 = vperm.xlu0 %1748, %v1738
    %v1750 = vpop.permute.xlu0 %1749
    %v1751 = vperm.slane %v80, 7
    %v1752 = vlaneseq
    %v1753 = vshrl.u32 %v1752, 7
    %1755 = vset.pattern.permute.xlu0 %v1753
    %1756 = vperm.xlu0 %1755, %v1751
    %v1757 = vpop.permute.xlu0 %1756
    %v1758 = vlaneseq
    %v1759 = vshrl.u32 %v1758, 7
    %v1760 = vadd.s32 %v1759, 8
    %1761 = vset.pattern.permute.xlu0 %v1760
    %1762 = vperm.xlu0 %1761, %v1751
    %v1763 = vpop.permute.xlu0 %1762
    %v1796 = vadd.f32 %v1427, %v1562
    %v1797 = vadd.f32 %v1429, %v1568
    %v1798 = vadd.f32 %v1431, %v1575
    %v1799 = vadd.f32 %v1433, %v1581
    %v1800 = vadd.f32 %v1435, %v1588
    %v1801 = vadd.f32 %v1437, %v1594
    %v1802 = vadd.f32 %v1439, %v1601
    %v1803 = vadd.f32 %v1441, %v1607
    %v1804 = vadd.f32 %v1443, %v1614
    %v1805 = vadd.f32 %v1445, %v1620
    %v1806 = vadd.f32 %v1447, %v1627
    %v1807 = vadd.f32 %v1449, %v1633
    %v1808 = vadd.f32 %v1451, %v1640
    %v1809 = vadd.f32 %v1453, %v1646
    %v1810 = vadd.f32 %v1455, %v1653
    %v1811 = vadd.f32 %v1457, %v1659
    %v1812 = vadd.f32 %v1459, %v1666
    %v1813 = vadd.f32 %v1461, %v1672
    %v1814 = vadd.f32 %v1463, %v1679
    %v1815 = vadd.f32 %v1465, %v1685
    %v1816 = vadd.f32 %v1467, %v1692
    %v1817 = vadd.f32 %v1469, %v1698
    %v1818 = vadd.f32 %v1471, %v1705
    %v1819 = vadd.f32 %v1473, %v1711
    %v1820 = vadd.f32 %v1475, %v1718
    %v1821 = vadd.f32 %v1477, %v1724
    %v1822 = vadd.f32 %v1479, %v1731
    %v1823 = vadd.f32 %v1481, %v1737
    %v1824 = vadd.f32 %v1483, %v1744
    %v1825 = vadd.f32 %v1485, %v1750
    %v1826 = vadd.f32 %v1487, %v1757
    %v1827 = vadd.f32 %v1489, %v1763
    %v1828 = vadd.f32 %v1491, %v1562
    %v1829 = vadd.f32 %v1493, %v1568
    %v1830 = vadd.f32 %v1495, %v1575
    %v1831 = vadd.f32 %v1497, %v1581
    %v1832 = vadd.f32 %v1499, %v1588
    %v1833 = vadd.f32 %v1501, %v1594
    %v1834 = vadd.f32 %v1503, %v1601
    %v1835 = vadd.f32 %v1505, %v1607
    %v1836 = vadd.f32 %v1507, %v1614
    %v1837 = vadd.f32 %v1509, %v1620
    %v1838 = vadd.f32 %v1511, %v1627
    %v1839 = vadd.f32 %v1513, %v1633
    %v1840 = vadd.f32 %v1515, %v1640
    %v1841 = vadd.f32 %v1517, %v1646
    %v1842 = vadd.f32 %v1519, %v1653
    %v1843 = vadd.f32 %v1521, %v1659
    %v1844 = vadd.f32 %v1523, %v1666
    %v1845 = vadd.f32 %v1525, %v1672
    %v1846 = vadd.f32 %v1527, %v1679
    %v1847 = vadd.f32 %v1529, %v1685
    %v1848 = vadd.f32 %v1531, %v1692
    %v1849 = vadd.f32 %v1533, %v1698
    %v1850 = vadd.f32 %v1535, %v1705
    %v1851 = vadd.f32 %v1537, %v1711
    %v1852 = vadd.f32 %v1539, %v1718
    %v1853 = vadd.f32 %v1541, %v1724
    %v1854 = vadd.f32 %v1543, %v1731
    %v1855 = vadd.f32 %v1545, %v1737
    %v1856 = vadd.f32 %v1547, %v1744
    %v1857 = vadd.f32 %v1549, %v1750
    %v1858 = vadd.f32 %v1551, %v1757
    %v1859 = vadd.f32 %v1553, %v1763
    %1924 = vset.pattern.permute.xlu0 0
    %1925 = vperm.xlu0 %1924, %v1796
    %v1926 = vpop.permute.xlu0 %1925
    %1927 = vset.pattern.permute.xlu0 0
    %1928 = vperm.xlu0 %1927, %v1797
    %v1929 = vpop.permute.xlu0 %1928
    %1930 = vset.pattern.permute.xlu0 0
    %1931 = vperm.xlu0 %1930, %v1798
    %v1932 = vpop.permute.xlu0 %1931
    %1933 = vset.pattern.permute.xlu0 0
    %1934 = vperm.xlu0 %1933, %v1799
    %v1935 = vpop.permute.xlu0 %1934
    %1936 = vset.pattern.permute.xlu0 0
    %1937 = vperm.xlu0 %1936, %v1800
    %v1938 = vpop.permute.xlu0 %1937
    %1939 = vset.pattern.permute.xlu0 0
    %1940 = vperm.xlu0 %1939, %v1801
    %v1941 = vpop.permute.xlu0 %1940
    %1942 = vset.pattern.permute.xlu0 0
    %1943 = vperm.xlu0 %1942, %v1802
    %v1944 = vpop.permute.xlu0 %1943
    %1945 = vset.pattern.permute.xlu0 0
    %1946 = vperm.xlu0 %1945, %v1803
    %v1947 = vpop.permute.xlu0 %1946
    %1948 = vset.pattern.permute.xlu0 0
    %1949 = vperm.xlu0 %1948, %v1804
    %v1950 = vpop.permute.xlu0 %1949
    %1951 = vset.pattern.permute.xlu0 0
    %1952 = vperm.xlu0 %1951, %v1805
    %v1953 = vpop.permute.xlu0 %1952
    %1954 = vset.pattern.permute.xlu0 0
    %1955 = vperm.xlu0 %1954, %v1806
    %v1956 = vpop.permute.xlu0 %1955
    %1957 = vset.pattern.permute.xlu0 0
    %1958 = vperm.xlu0 %1957, %v1807
    %v1959 = vpop.permute.xlu0 %1958
    %1960 = vset.pattern.permute.xlu0 0
    %1961 = vperm.xlu0 %1960, %v1808
    %v1962 = vpop.permute.xlu0 %1961
    %1963 = vset.pattern.permute.xlu0 0
    %1964 = vperm.xlu0 %1963, %v1809
    %v1965 = vpop.permute.xlu0 %1964
    %1966 = vset.pattern.permute.xlu0 0
    %1967 = vperm.xlu0 %1966, %v1810
    %v1968 = vpop.permute.xlu0 %1967
    %1969 = vset.pattern.permute.xlu0 0
    %1970 = vperm.xlu0 %1969, %v1811
    %v1971 = vpop.permute.xlu0 %1970
    %1972 = vset.pattern.permute.xlu0 0
    %1973 = vperm.xlu0 %1972, %v1812
    %v1974 = vpop.permute.xlu0 %1973
    %1975 = vset.pattern.permute.xlu0 0
    %1976 = vperm.xlu0 %1975, %v1813
    %v1977 = vpop.permute.xlu0 %1976
    %1978 = vset.pattern.permute.xlu0 0
    %1979 = vperm.xlu0 %1978, %v1814
    %v1980 = vpop.permute.xlu0 %1979
    %1981 = vset.pattern.permute.xlu0 0
    %1982 = vperm.xlu0 %1981, %v1815
    %v1983 = vpop.permute.xlu0 %1982
    %1984 = vset.pattern.permute.xlu0 0
    %1985 = vperm.xlu0 %1984, %v1816
    %v1986 = vpop.permute.xlu0 %1985
    %1987 = vset.pattern.permute.xlu0 0
    %1988 = vperm.xlu0 %1987, %v1817
    %v1989 = vpop.permute.xlu0 %1988
    %1990 = vset.pattern.permute.xlu0 0
    %1991 = vperm.xlu0 %1990, %v1818
    %v1992 = vpop.permute.xlu0 %1991
    %1993 = vset.pattern.permute.xlu0 0
    %1994 = vperm.xlu0 %1993, %v1819
    %v1995 = vpop.permute.xlu0 %1994
    %1996 = vset.pattern.permute.xlu0 0
    %1997 = vperm.xlu0 %1996, %v1820
    %v1998 = vpop.permute.xlu0 %1997
    %1999 = vset.pattern.permute.xlu0 0
    %2000 = vperm.xlu0 %1999, %v1821
    %v2001 = vpop.permute.xlu0 %2000
    %2002 = vset.pattern.permute.xlu0 0
    %2003 = vperm.xlu0 %2002, %v1822
    %v2004 = vpop.permute.xlu0 %2003
    %2005 = vset.pattern.permute.xlu0 0
    %2006 = vperm.xlu0 %2005, %v1823
    %v2007 = vpop.permute.xlu0 %2006
    %2008 = vset.pattern.permute.xlu0 0
    %2009 = vperm.xlu0 %2008, %v1824
    %v2010 = vpop.permute.xlu0 %2009
    %2011 = vset.pattern.permute.xlu0 0
    %2012 = vperm.xlu0 %2011, %v1825
    %v2013 = vpop.permute.xlu0 %2012
    %2014 = vset.pattern.permute.xlu0 0
    %2015 = vperm.xlu0 %2014, %v1826
    %v2016 = vpop.permute.xlu0 %2015
    %2017 = vset.pattern.permute.xlu0 0
    %2018 = vperm.xlu0 %2017, %v1827
    %v2019 = vpop.permute.xlu0 %2018
    %2020 = vset.pattern.permute.xlu0 0
    %2021 = vperm.xlu0 %2020, %v1828
    %v2022 = vpop.permute.xlu0 %2021
    %2023 = vset.pattern.permute.xlu0 0
    %2024 = vperm.xlu0 %2023, %v1829
    %v2025 = vpop.permute.xlu0 %2024
    %2026 = vset.pattern.permute.xlu0 0
    %2027 = vperm.xlu0 %2026, %v1830
    %v2028 = vpop.permute.xlu0 %2027
    %2029 = vset.pattern.permute.xlu0 0
    %2030 = vperm.xlu0 %2029, %v1831
    %v2031 = vpop.permute.xlu0 %2030
    %2032 = vset.pattern.permute.xlu0 0
    %2033 = vperm.xlu0 %2032, %v1832
    %v2034 = vpop.permute.xlu0 %2033
    %2035 = vset.pattern.permute.xlu0 0
    %2036 = vperm.xlu0 %2035, %v1833
    %v2037 = vpop.permute.xlu0 %2036
    %2038 = vset.pattern.permute.xlu0 0
    %2039 = vperm.xlu0 %2038, %v1834
    %v2040 = vpop.permute.xlu0 %2039
    %2041 = vset.pattern.permute.xlu0 0
    %2042 = vperm.xlu0 %2041, %v1835
    %v2043 = vpop.permute.xlu0 %2042
    %2044 = vset.pattern.permute.xlu0 0
    %2045 = vperm.xlu0 %2044, %v1836
    %v2046 = vpop.permute.xlu0 %2045
    %2047 = vset.pattern.permute.xlu0 0
    %2048 = vperm.xlu0 %2047, %v1837
    %v2049 = vpop.permute.xlu0 %2048
    %2050 = vset.pattern.permute.xlu0 0
    %2051 = vperm.xlu0 %2050, %v1838
    %v2052 = vpop.permute.xlu0 %2051
    %2053 = vset.pattern.permute.xlu0 0
    %2054 = vperm.xlu0 %2053, %v1839
    %v2055 = vpop.permute.xlu0 %2054
    %2056 = vset.pattern.permute.xlu0 0
    %2057 = vperm.xlu0 %2056, %v1840
    %v2058 = vpop.permute.xlu0 %2057
    %2059 = vset.pattern.permute.xlu0 0
    %2060 = vperm.xlu0 %2059, %v1841
    %v2061 = vpop.permute.xlu0 %2060
    %2062 = vset.pattern.permute.xlu0 0
    %2063 = vperm.xlu0 %2062, %v1842
    %v2064 = vpop.permute.xlu0 %2063
    %2065 = vset.pattern.permute.xlu0 0
    %2066 = vperm.xlu0 %2065, %v1843
    %v2067 = vpop.permute.xlu0 %2066
    %2068 = vset.pattern.permute.xlu0 0
    %2069 = vperm.xlu0 %2068, %v1844
    %v2070 = vpop.permute.xlu0 %2069
    %2071 = vset.pattern.permute.xlu0 0
    %2072 = vperm.xlu0 %2071, %v1845
    %v2073 = vpop.permute.xlu0 %2072
    %2074 = vset.pattern.permute.xlu0 0
    %2075 = vperm.xlu0 %2074, %v1846
    %v2076 = vpop.permute.xlu0 %2075
    %2077 = vset.pattern.permute.xlu0 0
    %2078 = vperm.xlu0 %2077, %v1847
    %v2079 = vpop.permute.xlu0 %2078
    %2080 = vset.pattern.permute.xlu0 0
    %2081 = vperm.xlu0 %2080, %v1848
    %v2082 = vpop.permute.xlu0 %2081
    %2083 = vset.pattern.permute.xlu0 0
    %2084 = vperm.xlu0 %2083, %v1849
    %v2085 = vpop.permute.xlu0 %2084
    %2086 = vset.pattern.permute.xlu0 0
    %2087 = vperm.xlu0 %2086, %v1850
    %v2088 = vpop.permute.xlu0 %2087
    %2089 = vset.pattern.permute.xlu0 0
    %2090 = vperm.xlu0 %2089, %v1851
    %v2091 = vpop.permute.xlu0 %2090
    %2092 = vset.pattern.permute.xlu0 0
    %2093 = vperm.xlu0 %2092, %v1852
    %v2094 = vpop.permute.xlu0 %2093
    %2095 = vset.pattern.permute.xlu0 0
    %2096 = vperm.xlu0 %2095, %v1853
    %v2097 = vpop.permute.xlu0 %2096
    %2098 = vset.pattern.permute.xlu0 0
    %2099 = vperm.xlu0 %2098, %v1854
    %v2100 = vpop.permute.xlu0 %2099
    %2101 = vset.pattern.permute.xlu0 0
    %2102 = vperm.xlu0 %2101, %v1855
    %v2103 = vpop.permute.xlu0 %2102
    %2104 = vset.pattern.permute.xlu0 0
    %2105 = vperm.xlu0 %2104, %v1856
    %v2106 = vpop.permute.xlu0 %2105
    %2107 = vset.pattern.permute.xlu0 0
    %2108 = vperm.xlu0 %2107, %v1857
    %v2109 = vpop.permute.xlu0 %2108
    %2110 = vset.pattern.permute.xlu0 0
    %2111 = vperm.xlu0 %2110, %v1858
    %v2112 = vpop.permute.xlu0 %2111
    %2113 = vset.pattern.permute.xlu0 0
    %2114 = vperm.xlu0 %2113, %v1859
    %v2115 = vpop.permute.xlu0 %2114
    %v2116 = vlaneseq
    %v2117 = vand.u32 %v2116, 127
    %v2118 = vperm.slane %v1926, %v2117
    %v2119 = vadd.s32 %v2117, 4294967288
    %v2120 = vperm.slane %v1929, %v2119
    %vm2121 = vcmask 130112
    %v2122 = vsel %vm2121, %v2120, %v2118
    %v2123 = vperm.slane %v1932, %v2117
    %v2124 = vperm.slane %v1935, %v2119
    %v2125 = vsel %vm2121, %v2124, %v2123
    %v2126 = vperm.slane %v1938, %v2117
    %v2127 = vperm.slane %v1941, %v2119
    %v2128 = vsel %vm2121, %v2127, %v2126
    %v2129 = vperm.slane %v1944, %v2117
    %v2130 = vperm.slane %v1947, %v2119
    %v2131 = vsel %vm2121, %v2130, %v2129
    %v2132 = vperm.slane %v1950, %v2117
    %v2133 = vperm.slane %v1953, %v2119
    %v2134 = vsel %vm2121, %v2133, %v2132
    %v2135 = vperm.slane %v1956, %v2117
    %v2136 = vperm.slane %v1959, %v2119
    %v2137 = vsel %vm2121, %v2136, %v2135
    %v2138 = vperm.slane %v1962, %v2117
    %v2139 = vperm.slane %v1965, %v2119
    %v2140 = vsel %vm2121, %v2139, %v2138
    %v2141 = vperm.slane %v1968, %v2117
    %v2142 = vperm.slane %v1971, %v2119
    %v2143 = vsel %vm2121, %v2142, %v2141
    %v2144 = vperm.slane %v1974, %v2117
    %v2145 = vperm.slane %v1977, %v2119
    %v2146 = vsel %vm2121, %v2145, %v2144
    %v2147 = vperm.slane %v1980, %v2117
    %v2148 = vperm.slane %v1983, %v2119
    %v2149 = vsel %vm2121, %v2148, %v2147
    %v2150 = vperm.slane %v1986, %v2117
    %v2151 = vperm.slane %v1989, %v2119
    %v2152 = vsel %vm2121, %v2151, %v2150
    %v2153 = vperm.slane %v1992, %v2117
    %v2154 = vperm.slane %v1995, %v2119
    %v2155 = vsel %vm2121, %v2154, %v2153
    %v2156 = vperm.slane %v1998, %v2117
    %v2157 = vperm.slane %v2001, %v2119
    %v2158 = vsel %vm2121, %v2157, %v2156
    %v2159 = vperm.slane %v2004, %v2117
    %v2160 = vperm.slane %v2007, %v2119
    %v2161 = vsel %vm2121, %v2160, %v2159
    %v2162 = vperm.slane %v2010, %v2117
    %v2163 = vperm.slane %v2013, %v2119
    %v2164 = vsel %vm2121, %v2163, %v2162
    %v2165 = vperm.slane %v2016, %v2117
    %v2166 = vperm.slane %v2019, %v2119
    %v2167 = vsel %vm2121, %v2166, %v2165
    %v2168 = vperm.slane %v2022, %v2117
    %v2169 = vperm.slane %v2025, %v2119
    %v2170 = vsel %vm2121, %v2169, %v2168
    %v2171 = vperm.slane %v2028, %v2117
    %v2172 = vperm.slane %v2031, %v2119
    %v2173 = vsel %vm2121, %v2172, %v2171
    %v2174 = vperm.slane %v2034, %v2117
    %v2175 = vperm.slane %v2037, %v2119
    %v2176 = vsel %vm2121, %v2175, %v2174
    %v2177 = vperm.slane %v2040, %v2117
    %v2178 = vperm.slane %v2043, %v2119
    %v2179 = vsel %vm2121, %v2178, %v2177
    %v2180 = vperm.slane %v2046, %v2117
    %v2181 = vperm.slane %v2049, %v2119
    %v2182 = vsel %vm2121, %v2181, %v2180
    %v2183 = vperm.slane %v2052, %v2117
    %v2184 = vperm.slane %v2055, %v2119
    %v2185 = vsel %vm2121, %v2184, %v2183
    %v2186 = vperm.slane %v2058, %v2117
    %v2187 = vperm.slane %v2061, %v2119
    %v2188 = vsel %vm2121, %v2187, %v2186
    %v2189 = vperm.slane %v2064, %v2117
    %v2190 = vperm.slane %v2067, %v2119
    %v2191 = vsel %vm2121, %v2190, %v2189
    %v2192 = vperm.slane %v2070, %v2117
    %v2193 = vperm.slane %v2073, %v2119
    %v2194 = vsel %vm2121, %v2193, %v2192
    %v2195 = vperm.slane %v2076, %v2117
    %v2196 = vperm.slane %v2079, %v2119
    %v2197 = vsel %vm2121, %v2196, %v2195
    %v2198 = vperm.slane %v2082, %v2117
    %v2199 = vperm.slane %v2085, %v2119
    %v2200 = vsel %vm2121, %v2199, %v2198
    %v2201 = vperm.slane %v2088, %v2117
    %v2202 = vperm.slane %v2091, %v2119
    %v2203 = vsel %vm2121, %v2202, %v2201
    %v2204 = vperm.slane %v2094, %v2117
    %v2205 = vperm.slane %v2097, %v2119
    %v2206 = vsel %vm2121, %v2205, %v2204
    %v2207 = vperm.slane %v2100, %v2117
    %v2208 = vperm.slane %v2103, %v2119
    %v2209 = vsel %vm2121, %v2208, %v2207
    %v2210 = vperm.slane %v2106, %v2117
    %v2211 = vperm.slane %v2109, %v2119
    %v2212 = vsel %vm2121, %v2211, %v2210
    %v2213 = vperm.slane %v2112, %v2117
    %v2214 = vperm.slane %v2115, %v2119
    %v2215 = vsel %vm2121, %v2214, %v2213
    %vm2216 = vcmask 1041409
    %v2217 = vsel %vm2216, %v2125, %v2122
    %vm2218 = vcmask 1042434
    %v2219 = vsel %vm2218, %v2128, %v2217
    %vm2220 = vcmask 1043459
    %v2221 = vsel %vm2220, %v2131, %v2219
    %vm2222 = vcmask 1044484
    %v2223 = vsel %vm2222, %v2134, %v2221
    %vm2224 = vcmask 1045509
    %v2225 = vsel %vm2224, %v2137, %v2223
    %vm2226 = vcmask 1046534
    %v2227 = vsel %vm2226, %v2140, %v2225
    %vm2228 = vcmask 1047559
    %v2229 = vsel %vm2228, %v2143, %v2227
    %v2230 = vsel %vm2216, %v2149, %v2146
    %v2231 = vsel %vm2218, %v2152, %v2230
    %v2232 = vsel %vm2220, %v2155, %v2231
    %v2233 = vsel %vm2222, %v2158, %v2232
    %v2234 = vsel %vm2224, %v2161, %v2233
    %v2235 = vsel %vm2226, %v2164, %v2234
    %v2236 = vsel %vm2228, %v2167, %v2235
    %v2237 = vsel %vm2216, %v2173, %v2170
    %v2238 = vsel %vm2218, %v2176, %v2237
    %v2239 = vsel %vm2220, %v2179, %v2238
    %v2240 = vsel %vm2222, %v2182, %v2239
    %v2241 = vsel %vm2224, %v2185, %v2240
    %v2242 = vsel %vm2226, %v2188, %v2241
    %v2243 = vsel %vm2228, %v2191, %v2242
    %v2244 = vsel %vm2216, %v2197, %v2194
    %v2245 = vsel %vm2218, %v2200, %v2244
    %v2246 = vsel %vm2220, %v2203, %v2245
    %v2247 = vsel %vm2222, %v2206, %v2246
    %v2248 = vsel %vm2224, %v2209, %v2247
    %v2249 = vsel %vm2226, %v2212, %v2248
    %v2250 = vsel %vm2228, %v2215, %v2249
    %vm2255 = vcmask 130048
    %v2256 = vsel %vm2255, %v2229, -inf
    %2257 = vmax.xlane.f32.xlu0 %v2256
    %v2258 = vpop.xlane.xlu0 %2257
    %v2259 = vsel %vm2255, %v2236, -inf
    %2260 = vmax.xlane.f32.xlu0 %v2259
    %v2261 = vpop.xlane.xlu0 %2260
    %v2262 = vsel %vm2255, %v2243, -inf
    %2263 = vmax.xlane.f32.xlu0 %v2262
    %v2264 = vpop.xlane.xlu0 %2263
    %v2265 = vsel %vm2255, %v2250, -inf
    %2266 = vmax.xlane.f32.xlu0 %v2265
    %v2267 = vpop.xlane.xlu0 %2266
    %v2272 = vperm.slane %v2258, 0
    %v2273 = vperm.slane %v2258, 1
    %v2274 = vperm.slane %v2258, 2
    %v2275 = vperm.slane %v2258, 3
    %v2276 = vperm.slane %v2258, 4
    %v2277 = vperm.slane %v2258, 5
    %v2278 = vperm.slane %v2258, 6
    %v2279 = vperm.slane %v2258, 7
    %v2280 = vperm.slane %v2261, 0
    %v2281 = vperm.slane %v2261, 1
    %v2282 = vperm.slane %v2261, 2
    %v2283 = vperm.slane %v2261, 3
    %v2284 = vperm.slane %v2261, 4
    %v2285 = vperm.slane %v2261, 5
    %v2286 = vperm.slane %v2261, 6
    %v2287 = vperm.slane %v2261, 7
    %v2288 = vperm.slane %v2264, 0
    %v2289 = vperm.slane %v2264, 1
    %v2290 = vperm.slane %v2264, 2
    %v2291 = vperm.slane %v2264, 3
    %v2292 = vperm.slane %v2264, 4
    %v2293 = vperm.slane %v2264, 5
    %v2294 = vperm.slane %v2264, 6
    %v2295 = vperm.slane %v2264, 7
    %v2296 = vperm.slane %v2267, 0
    %v2297 = vperm.slane %v2267, 1
    %v2298 = vperm.slane %v2267, 2
    %v2299 = vperm.slane %v2267, 3
    %v2300 = vperm.slane %v2267, 4
    %v2301 = vperm.slane %v2267, 5
    %v2302 = vperm.slane %v2267, 6
    %v2303 = vperm.slane %v2267, 7
    %v2336 = vsub.f32 %v1796, %v2272
    %v2337 = vsub.f32 %v1797, %v2272
    %v2338 = vsub.f32 %v1798, %v2273
    %v2339 = vsub.f32 %v1799, %v2273
    %v2340 = vsub.f32 %v1800, %v2274
    %v2341 = vsub.f32 %v1801, %v2274
    %v2342 = vsub.f32 %v1802, %v2275
    %v2343 = vsub.f32 %v1803, %v2275
    %v2344 = vsub.f32 %v1804, %v2276
    %v2345 = vsub.f32 %v1805, %v2276
    %v2346 = vsub.f32 %v1806, %v2277
    %v2347 = vsub.f32 %v1807, %v2277
    %v2348 = vsub.f32 %v1808, %v2278
    %v2349 = vsub.f32 %v1809, %v2278
    %v2350 = vsub.f32 %v1810, %v2279
    %v2351 = vsub.f32 %v1811, %v2279
    %v2352 = vsub.f32 %v1812, %v2280
    %v2353 = vsub.f32 %v1813, %v2280
    %v2354 = vsub.f32 %v1814, %v2281
    %v2355 = vsub.f32 %v1815, %v2281
    %v2356 = vsub.f32 %v1816, %v2282
    %v2357 = vsub.f32 %v1817, %v2282
    %v2358 = vsub.f32 %v1818, %v2283
    %v2359 = vsub.f32 %v1819, %v2283
    %v2360 = vsub.f32 %v1820, %v2284
    %v2361 = vsub.f32 %v1821, %v2284
    %v2362 = vsub.f32 %v1822, %v2285
    %v2363 = vsub.f32 %v1823, %v2285
    %v2364 = vsub.f32 %v1824, %v2286
    %v2365 = vsub.f32 %v1825, %v2286
    %v2366 = vsub.f32 %v1826, %v2287
    %v2367 = vsub.f32 %v1827, %v2287
    %v2368 = vsub.f32 %v1828, %v2288
    %v2369 = vsub.f32 %v1829, %v2288
    %v2370 = vsub.f32 %v1830, %v2289
    %v2371 = vsub.f32 %v1831, %v2289
    %v2372 = vsub.f32 %v1832, %v2290
    %v2373 = vsub.f32 %v1833, %v2290
    %v2374 = vsub.f32 %v1834, %v2291
    %v2375 = vsub.f32 %v1835, %v2291
    %v2376 = vsub.f32 %v1836, %v2292
    %v2377 = vsub.f32 %v1837, %v2292
    %v2378 = vsub.f32 %v1838, %v2293
    %v2379 = vsub.f32 %v1839, %v2293
    %v2380 = vsub.f32 %v1840, %v2294
    %v2381 = vsub.f32 %v1841, %v2294
    %v2382 = vsub.f32 %v1842, %v2295
    %v2383 = vsub.f32 %v1843, %v2295
    %v2384 = vsub.f32 %v1844, %v2296
    %v2385 = vsub.f32 %v1845, %v2296
    %v2386 = vsub.f32 %v1846, %v2297
    %v2387 = vsub.f32 %v1847, %v2297
    %v2388 = vsub.f32 %v1848, %v2298
    %v2389 = vsub.f32 %v1849, %v2298
    %v2390 = vsub.f32 %v1850, %v2299
    %v2391 = vsub.f32 %v1851, %v2299
    %v2392 = vsub.f32 %v1852, %v2300
    %v2393 = vsub.f32 %v1853, %v2300
    %v2394 = vsub.f32 %v1854, %v2301
    %v2395 = vsub.f32 %v1855, %v2301
    %v2396 = vsub.f32 %v1856, %v2302
    %v2397 = vsub.f32 %v1857, %v2302
    %v2398 = vsub.f32 %v1858, %v2303
    %v2399 = vsub.f32 %v1859, %v2303
    %v2400 = vmul.f32 %v2336, 1.442695
    %v2401 = vpow.pop %v2400
    %v2402 = vmul.f32 %v2337, 1.442695
    %v2403 = vpow.pop %v2402
    %v2404 = vmul.f32 %v2338, 1.442695
    %v2405 = vpow.pop %v2404
    %v2406 = vmul.f32 %v2339, 1.442695
    %v2407 = vpow.pop %v2406
    %v2408 = vmul.f32 %v2340, 1.442695
    %v2409 = vpow.pop %v2408
    %v2410 = vmul.f32 %v2341, 1.442695
    %v2411 = vpow.pop %v2410
    %v2412 = vmul.f32 %v2342, 1.442695
    %v2413 = vpow.pop %v2412
    %v2414 = vmul.f32 %v2343, 1.442695
    %v2415 = vpow.pop %v2414
    %v2416 = vmul.f32 %v2344, 1.442695
    %v2417 = vpow.pop %v2416
    %v2418 = vmul.f32 %v2345, 1.442695
    %v2419 = vpow.pop %v2418
    %v2420 = vmul.f32 %v2346, 1.442695
    %v2421 = vpow.pop %v2420
    %v2422 = vmul.f32 %v2347, 1.442695
    %v2423 = vpow.pop %v2422
    %v2424 = vmul.f32 %v2348, 1.442695
    %v2425 = vpow.pop %v2424
    %v2426 = vmul.f32 %v2349, 1.442695
    %v2427 = vpow.pop %v2426
    %v2428 = vmul.f32 %v2350, 1.442695
    %v2429 = vpow.pop %v2428
    %v2430 = vmul.f32 %v2351, 1.442695
    %v2431 = vpow.pop %v2430
    %v2432 = vmul.f32 %v2352, 1.442695
    %v2433 = vpow.pop %v2432
    %v2434 = vmul.f32 %v2353, 1.442695
    %v2435 = vpow.pop %v2434
    %v2436 = vmul.f32 %v2354, 1.442695
    %v2437 = vpow.pop %v2436
    %v2438 = vmul.f32 %v2355, 1.442695
    %v2439 = vpow.pop %v2438
    %v2440 = vmul.f32 %v2356, 1.442695
    %v2441 = vpow.pop %v2440
    %v2442 = vmul.f32 %v2357, 1.442695
    %v2443 = vpow.pop %v2442
    %v2444 = vmul.f32 %v2358, 1.442695
    %v2445 = vpow.pop %v2444
    %v2446 = vmul.f32 %v2359, 1.442695
    %v2447 = vpow.pop %v2446
    %v2448 = vmul.f32 %v2360, 1.442695
    %v2449 = vpow.pop %v2448
    %v2450 = vmul.f32 %v2361, 1.442695
    %v2451 = vpow.pop %v2450
    %v2452 = vmul.f32 %v2362, 1.442695
    %v2453 = vpow.pop %v2452
    %v2454 = vmul.f32 %v2363, 1.442695
    %v2455 = vpow.pop %v2454
    %v2456 = vmul.f32 %v2364, 1.442695
    %v2457 = vpow.pop %v2456
    %v2458 = vmul.f32 %v2365, 1.442695
    %v2459 = vpow.pop %v2458
    %v2460 = vmul.f32 %v2366, 1.442695
    %v2461 = vpow.pop %v2460
    %v2462 = vmul.f32 %v2367, 1.442695
    %v2463 = vpow.pop %v2462
    %v2464 = vmul.f32 %v2368, 1.442695
    %v2465 = vpow.pop %v2464
    %v2466 = vmul.f32 %v2369, 1.442695
    %v2467 = vpow.pop %v2466
    %v2468 = vmul.f32 %v2370, 1.442695
    %v2469 = vpow.pop %v2468
    %v2470 = vmul.f32 %v2371, 1.442695
    %v2471 = vpow.pop %v2470
    %v2472 = vmul.f32 %v2372, 1.442695
    %v2473 = vpow.pop %v2472
    %v2474 = vmul.f32 %v2373, 1.442695
    %v2475 = vpow.pop %v2474
    %v2476 = vmul.f32 %v2374, 1.442695
    %v2477 = vpow.pop %v2476
    %v2478 = vmul.f32 %v2375, 1.442695
    %v2479 = vpow.pop %v2478
    %v2480 = vmul.f32 %v2376, 1.442695
    %v2481 = vpow.pop %v2480
    %v2482 = vmul.f32 %v2377, 1.442695
    %v2483 = vpow.pop %v2482
    %v2484 = vmul.f32 %v2378, 1.442695
    %v2485 = vpow.pop %v2484
    %v2486 = vmul.f32 %v2379, 1.442695
    %v2487 = vpow.pop %v2486
    %v2488 = vmul.f32 %v2380, 1.442695
    %v2489 = vpow.pop %v2488
    %v2490 = vmul.f32 %v2381, 1.442695
    %v2491 = vpow.pop %v2490
    %v2492 = vmul.f32 %v2382, 1.442695
    %v2493 = vpow.pop %v2492
    %v2494 = vmul.f32 %v2383, 1.442695
    %v2495 = vpow.pop %v2494
    %v2496 = vmul.f32 %v2384, 1.442695
    %v2497 = vpow.pop %v2496
    %v2498 = vmul.f32 %v2385, 1.442695
    %v2499 = vpow.pop %v2498
    %v2500 = vmul.f32 %v2386, 1.442695
    %v2501 = vpow.pop %v2500
    %v2502 = vmul.f32 %v2387, 1.442695
    %v2503 = vpow.pop %v2502
    %v2504 = vmul.f32 %v2388, 1.442695
    %v2505 = vpow.pop %v2504
    %v2506 = vmul.f32 %v2389, 1.442695
    %v2507 = vpow.pop %v2506
    %v2508 = vmul.f32 %v2390, 1.442695
    %v2509 = vpow.pop %v2508
    %v2510 = vmul.f32 %v2391, 1.442695
    %v2511 = vpow.pop %v2510
    %v2512 = vmul.f32 %v2392, 1.442695
    %v2513 = vpow.pop %v2512
    %v2514 = vmul.f32 %v2393, 1.442695
    %v2515 = vpow.pop %v2514
    %v2516 = vmul.f32 %v2394, 1.442695
    %v2517 = vpow.pop %v2516
    %v2518 = vmul.f32 %v2395, 1.442695
    %v2519 = vpow.pop %v2518
    %v2520 = vmul.f32 %v2396, 1.442695
    %v2521 = vpow.pop %v2520
    %v2522 = vmul.f32 %v2397, 1.442695
    %v2523 = vpow.pop %v2522
    %v2524 = vmul.f32 %v2398, 1.442695
    %v2525 = vpow.pop %v2524
    %v2526 = vmul.f32 %v2399, 1.442695
    %v2527 = vpow.pop %v2526
    %v2530 = vperm.slane %v24, 0
    %v2531 = vlaneseq
    %v2532 = vshrl.u32 %v2531, 7
    %2534 = vset.pattern.permute.xlu0 %v2532
    %2535 = vperm.xlu0 %2534, %v2530
    %v2536 = vpop.permute.xlu0 %2535
    %v2537 = vlaneseq
    %v2538 = vshrl.u32 %v2537, 7
    %v2539 = vadd.s32 %v2538, 8
    %2540 = vset.pattern.permute.xlu0 %v2539
    %2541 = vperm.xlu0 %2540, %v2530
    %v2542 = vpop.permute.xlu0 %2541
    %v2543 = vperm.slane %v24, 1
    %v2544 = vlaneseq
    %v2545 = vshrl.u32 %v2544, 7
    %2547 = vset.pattern.permute.xlu0 %v2545
    %2548 = vperm.xlu0 %2547, %v2543
    %v2549 = vpop.permute.xlu0 %2548
    %v2550 = vlaneseq
    %v2551 = vshrl.u32 %v2550, 7
    %v2552 = vadd.s32 %v2551, 8
    %2553 = vset.pattern.permute.xlu0 %v2552
    %2554 = vperm.xlu0 %2553, %v2543
    %v2555 = vpop.permute.xlu0 %2554
    %v2556 = vperm.slane %v24, 2
    %v2557 = vlaneseq
    %v2558 = vshrl.u32 %v2557, 7
    %2560 = vset.pattern.permute.xlu0 %v2558
    %2561 = vperm.xlu0 %2560, %v2556
    %v2562 = vpop.permute.xlu0 %2561
    %v2563 = vlaneseq
    %v2564 = vshrl.u32 %v2563, 7
    %v2565 = vadd.s32 %v2564, 8
    %2566 = vset.pattern.permute.xlu0 %v2565
    %2567 = vperm.xlu0 %2566, %v2556
    %v2568 = vpop.permute.xlu0 %2567
    %v2569 = vperm.slane %v24, 3
    %v2570 = vlaneseq
    %v2571 = vshrl.u32 %v2570, 7
    %2573 = vset.pattern.permute.xlu0 %v2571
    %2574 = vperm.xlu0 %2573, %v2569
    %v2575 = vpop.permute.xlu0 %2574
    %v2576 = vlaneseq
    %v2577 = vshrl.u32 %v2576, 7
    %v2578 = vadd.s32 %v2577, 8
    %2579 = vset.pattern.permute.xlu0 %v2578
    %2580 = vperm.xlu0 %2579, %v2569
    %v2581 = vpop.permute.xlu0 %2580
    %v2582 = vperm.slane %v24, 4
    %v2583 = vlaneseq
    %v2584 = vshrl.u32 %v2583, 7
    %2586 = vset.pattern.permute.xlu0 %v2584
    %2587 = vperm.xlu0 %2586, %v2582
    %v2588 = vpop.permute.xlu0 %2587
    %v2589 = vlaneseq
    %v2590 = vshrl.u32 %v2589, 7
    %v2591 = vadd.s32 %v2590, 8
    %2592 = vset.pattern.permute.xlu0 %v2591
    %2593 = vperm.xlu0 %2592, %v2582
    %v2594 = vpop.permute.xlu0 %2593
    %v2595 = vperm.slane %v24, 5
    %v2596 = vlaneseq
    %v2597 = vshrl.u32 %v2596, 7
    %2599 = vset.pattern.permute.xlu0 %v2597
    %2600 = vperm.xlu0 %2599, %v2595
    %v2601 = vpop.permute.xlu0 %2600
    %v2602 = vlaneseq
    %v2603 = vshrl.u32 %v2602, 7
    %v2604 = vadd.s32 %v2603, 8
    %2605 = vset.pattern.permute.xlu0 %v2604
    %2606 = vperm.xlu0 %2605, %v2595
    %v2607 = vpop.permute.xlu0 %2606
    %v2608 = vperm.slane %v24, 6
    %v2609 = vlaneseq
    %v2610 = vshrl.u32 %v2609, 7
    %2612 = vset.pattern.permute.xlu0 %v2610
    %2613 = vperm.xlu0 %2612, %v2608
    %v2614 = vpop.permute.xlu0 %2613
    %v2615 = vlaneseq
    %v2616 = vshrl.u32 %v2615, 7
    %v2617 = vadd.s32 %v2616, 8
    %2618 = vset.pattern.permute.xlu0 %v2617
    %2619 = vperm.xlu0 %2618, %v2608
    %v2620 = vpop.permute.xlu0 %2619
    %v2621 = vperm.slane %v24, 7
    %v2622 = vlaneseq
    %v2623 = vshrl.u32 %v2622, 7
    %2625 = vset.pattern.permute.xlu0 %v2623
    %2626 = vperm.xlu0 %2625, %v2621
    %v2627 = vpop.permute.xlu0 %2626
    %v2628 = vlaneseq
    %v2629 = vshrl.u32 %v2628, 7
    %v2630 = vadd.s32 %v2629, 8
    %2631 = vset.pattern.permute.xlu0 %v2630
    %2632 = vperm.xlu0 %2631, %v2621
    %v2633 = vpop.permute.xlu0 %2632
    %v2634 = vperm.slane %v25, 0
    %v2635 = vlaneseq
    %v2636 = vshrl.u32 %v2635, 7
    %2638 = vset.pattern.permute.xlu0 %v2636
    %2639 = vperm.xlu0 %2638, %v2634
    %v2640 = vpop.permute.xlu0 %2639
    %v2641 = vlaneseq
    %v2642 = vshrl.u32 %v2641, 7
    %v2643 = vadd.s32 %v2642, 8
    %2644 = vset.pattern.permute.xlu0 %v2643
    %2645 = vperm.xlu0 %2644, %v2634
    %v2646 = vpop.permute.xlu0 %2645
    %v2647 = vperm.slane %v25, 1
    %v2648 = vlaneseq
    %v2649 = vshrl.u32 %v2648, 7
    %2651 = vset.pattern.permute.xlu0 %v2649
    %2652 = vperm.xlu0 %2651, %v2647
    %v2653 = vpop.permute.xlu0 %2652
    %v2654 = vlaneseq
    %v2655 = vshrl.u32 %v2654, 7
    %v2656 = vadd.s32 %v2655, 8
    %2657 = vset.pattern.permute.xlu0 %v2656
    %2658 = vperm.xlu0 %2657, %v2647
    %v2659 = vpop.permute.xlu0 %2658
    %v2660 = vperm.slane %v25, 2
    %v2661 = vlaneseq
    %v2662 = vshrl.u32 %v2661, 7
    %2664 = vset.pattern.permute.xlu0 %v2662
    %2665 = vperm.xlu0 %2664, %v2660
    %v2666 = vpop.permute.xlu0 %2665
    %v2667 = vlaneseq
    %v2668 = vshrl.u32 %v2667, 7
    %v2669 = vadd.s32 %v2668, 8
    %2670 = vset.pattern.permute.xlu0 %v2669
    %2671 = vperm.xlu0 %2670, %v2660
    %v2672 = vpop.permute.xlu0 %2671
    %v2673 = vperm.slane %v25, 3
    %v2674 = vlaneseq
    %v2675 = vshrl.u32 %v2674, 7
    %2677 = vset.pattern.permute.xlu0 %v2675
    %2678 = vperm.xlu0 %2677, %v2673
    %v2679 = vpop.permute.xlu0 %2678
    %v2680 = vlaneseq
    %v2681 = vshrl.u32 %v2680, 7
    %v2682 = vadd.s32 %v2681, 8
    %2683 = vset.pattern.permute.xlu0 %v2682
    %2684 = vperm.xlu0 %2683, %v2673
    %v2685 = vpop.permute.xlu0 %2684
    %v2686 = vperm.slane %v25, 4
    %v2687 = vlaneseq
    %v2688 = vshrl.u32 %v2687, 7
    %2690 = vset.pattern.permute.xlu0 %v2688
    %2691 = vperm.xlu0 %2690, %v2686
    %v2692 = vpop.permute.xlu0 %2691
    %v2693 = vlaneseq
    %v2694 = vshrl.u32 %v2693, 7
    %v2695 = vadd.s32 %v2694, 8
    %2696 = vset.pattern.permute.xlu0 %v2695
    %2697 = vperm.xlu0 %2696, %v2686
    %v2698 = vpop.permute.xlu0 %2697
    %v2699 = vperm.slane %v25, 5
    %v2700 = vlaneseq
    %v2701 = vshrl.u32 %v2700, 7
    %2703 = vset.pattern.permute.xlu0 %v2701
    %2704 = vperm.xlu0 %2703, %v2699
    %v2705 = vpop.permute.xlu0 %2704
    %v2706 = vlaneseq
    %v2707 = vshrl.u32 %v2706, 7
    %v2708 = vadd.s32 %v2707, 8
    %2709 = vset.pattern.permute.xlu0 %v2708
    %2710 = vperm.xlu0 %2709, %v2699
    %v2711 = vpop.permute.xlu0 %2710
    %v2712 = vperm.slane %v25, 6
    %v2713 = vlaneseq
    %v2714 = vshrl.u32 %v2713, 7
    %2716 = vset.pattern.permute.xlu0 %v2714
    %2717 = vperm.xlu0 %2716, %v2712
    %v2718 = vpop.permute.xlu0 %2717
    %v2719 = vlaneseq
    %v2720 = vshrl.u32 %v2719, 7
    %v2721 = vadd.s32 %v2720, 8
    %2722 = vset.pattern.permute.xlu0 %v2721
    %2723 = vperm.xlu0 %2722, %v2712
    %v2724 = vpop.permute.xlu0 %2723
    %v2725 = vperm.slane %v25, 7
    %v2726 = vlaneseq
    %v2727 = vshrl.u32 %v2726, 7
    %2729 = vset.pattern.permute.xlu0 %v2727
    %2730 = vperm.xlu0 %2729, %v2725
    %v2731 = vpop.permute.xlu0 %2730
    %v2732 = vlaneseq
    %v2733 = vshrl.u32 %v2732, 7
    %v2734 = vadd.s32 %v2733, 8
    %2735 = vset.pattern.permute.xlu0 %v2734
    %2736 = vperm.xlu0 %2735, %v2725
    %v2737 = vpop.permute.xlu0 %2736
    %v2770 = vmul.f32 %v2401, %v2536
    %v2771 = vmul.f32 %v2403, %v2542
    %v2772 = vmul.f32 %v2405, %v2549
    %v2773 = vmul.f32 %v2407, %v2555
    %v2774 = vmul.f32 %v2409, %v2562
    %v2775 = vmul.f32 %v2411, %v2568
    %v2776 = vmul.f32 %v2413, %v2575
    %v2777 = vmul.f32 %v2415, %v2581
    %v2778 = vmul.f32 %v2417, %v2588
    %v2779 = vmul.f32 %v2419, %v2594
    %v2780 = vmul.f32 %v2421, %v2601
    %v2781 = vmul.f32 %v2423, %v2607
    %v2782 = vmul.f32 %v2425, %v2614
    %v2783 = vmul.f32 %v2427, %v2620
    %v2784 = vmul.f32 %v2429, %v2627
    %v2785 = vmul.f32 %v2431, %v2633
    %v2786 = vmul.f32 %v2433, %v2640
    %v2787 = vmul.f32 %v2435, %v2646
    %v2788 = vmul.f32 %v2437, %v2653
    %v2789 = vmul.f32 %v2439, %v2659
    %v2790 = vmul.f32 %v2441, %v2666
    %v2791 = vmul.f32 %v2443, %v2672
    %v2792 = vmul.f32 %v2445, %v2679
    %v2793 = vmul.f32 %v2447, %v2685
    %v2794 = vmul.f32 %v2449, %v2692
    %v2795 = vmul.f32 %v2451, %v2698
    %v2796 = vmul.f32 %v2453, %v2705
    %v2797 = vmul.f32 %v2455, %v2711
    %v2798 = vmul.f32 %v2457, %v2718
    %v2799 = vmul.f32 %v2459, %v2724
    %v2800 = vmul.f32 %v2461, %v2731
    %v2801 = vmul.f32 %v2463, %v2737
    %v2802 = vmul.f32 %v2465, %v2536
    %v2803 = vmul.f32 %v2467, %v2542
    %v2804 = vmul.f32 %v2469, %v2549
    %v2805 = vmul.f32 %v2471, %v2555
    %v2806 = vmul.f32 %v2473, %v2562
    %v2807 = vmul.f32 %v2475, %v2568
    %v2808 = vmul.f32 %v2477, %v2575
    %v2809 = vmul.f32 %v2479, %v2581
    %v2810 = vmul.f32 %v2481, %v2588
    %v2811 = vmul.f32 %v2483, %v2594
    %v2812 = vmul.f32 %v2485, %v2601
    %v2813 = vmul.f32 %v2487, %v2607
    %v2814 = vmul.f32 %v2489, %v2614
    %v2815 = vmul.f32 %v2491, %v2620
    %v2816 = vmul.f32 %v2493, %v2627
    %v2817 = vmul.f32 %v2495, %v2633
    %v2818 = vmul.f32 %v2497, %v2640
    %v2819 = vmul.f32 %v2499, %v2646
    %v2820 = vmul.f32 %v2501, %v2653
    %v2821 = vmul.f32 %v2503, %v2659
    %v2822 = vmul.f32 %v2505, %v2666
    %v2823 = vmul.f32 %v2507, %v2672
    %v2824 = vmul.f32 %v2509, %v2679
    %v2825 = vmul.f32 %v2511, %v2685
    %v2826 = vmul.f32 %v2513, %v2692
    %v2827 = vmul.f32 %v2515, %v2698
    %v2828 = vmul.f32 %v2517, %v2705
    %v2829 = vmul.f32 %v2519, %v2711
    %v2830 = vmul.f32 %v2521, %v2718
    %v2831 = vmul.f32 %v2523, %v2724
    %v2832 = vmul.f32 %v2525, %v2731
    %v2833 = vmul.f32 %v2527, %v2737
    %2898 = vset.pattern.permute.xlu0 0
    %2899 = vperm.xlu0 %2898, %v2770
    %v2900 = vpop.permute.xlu0 %2899
    %2901 = vset.pattern.permute.xlu0 0
    %2902 = vperm.xlu0 %2901, %v2771
    %v2903 = vpop.permute.xlu0 %2902
    %2904 = vset.pattern.permute.xlu0 0
    %2905 = vperm.xlu0 %2904, %v2772
    %v2906 = vpop.permute.xlu0 %2905
    %2907 = vset.pattern.permute.xlu0 0
    %2908 = vperm.xlu0 %2907, %v2773
    %v2909 = vpop.permute.xlu0 %2908
    %2910 = vset.pattern.permute.xlu0 0
    %2911 = vperm.xlu0 %2910, %v2774
    %v2912 = vpop.permute.xlu0 %2911
    %2913 = vset.pattern.permute.xlu0 0
    %2914 = vperm.xlu0 %2913, %v2775
    %v2915 = vpop.permute.xlu0 %2914
    %2916 = vset.pattern.permute.xlu0 0
    %2917 = vperm.xlu0 %2916, %v2776
    %v2918 = vpop.permute.xlu0 %2917
    %2919 = vset.pattern.permute.xlu0 0
    %2920 = vperm.xlu0 %2919, %v2777
    %v2921 = vpop.permute.xlu0 %2920
    %2922 = vset.pattern.permute.xlu0 0
    %2923 = vperm.xlu0 %2922, %v2778
    %v2924 = vpop.permute.xlu0 %2923
    %2925 = vset.pattern.permute.xlu0 0
    %2926 = vperm.xlu0 %2925, %v2779
    %v2927 = vpop.permute.xlu0 %2926
    %2928 = vset.pattern.permute.xlu0 0
    %2929 = vperm.xlu0 %2928, %v2780
    %v2930 = vpop.permute.xlu0 %2929
    %2931 = vset.pattern.permute.xlu0 0
    %2932 = vperm.xlu0 %2931, %v2781
    %v2933 = vpop.permute.xlu0 %2932
    %2934 = vset.pattern.permute.xlu0 0
    %2935 = vperm.xlu0 %2934, %v2782
    %v2936 = vpop.permute.xlu0 %2935
    %2937 = vset.pattern.permute.xlu0 0
    %2938 = vperm.xlu0 %2937, %v2783
    %v2939 = vpop.permute.xlu0 %2938
    %2940 = vset.pattern.permute.xlu0 0
    %2941 = vperm.xlu0 %2940, %v2784
    %v2942 = vpop.permute.xlu0 %2941
    %2943 = vset.pattern.permute.xlu0 0
    %2944 = vperm.xlu0 %2943, %v2785
    %v2945 = vpop.permute.xlu0 %2944
    %2946 = vset.pattern.permute.xlu0 0
    %2947 = vperm.xlu0 %2946, %v2786
    %v2948 = vpop.permute.xlu0 %2947
    %2949 = vset.pattern.permute.xlu0 0
    %2950 = vperm.xlu0 %2949, %v2787
    %v2951 = vpop.permute.xlu0 %2950
    %2952 = vset.pattern.permute.xlu0 0
    %2953 = vperm.xlu0 %2952, %v2788
    %v2954 = vpop.permute.xlu0 %2953
    %2955 = vset.pattern.permute.xlu0 0
    %2956 = vperm.xlu0 %2955, %v2789
    %v2957 = vpop.permute.xlu0 %2956
    %2958 = vset.pattern.permute.xlu0 0
    %2959 = vperm.xlu0 %2958, %v2790
    %v2960 = vpop.permute.xlu0 %2959
    %2961 = vset.pattern.permute.xlu0 0
    %2962 = vperm.xlu0 %2961, %v2791
    %v2963 = vpop.permute.xlu0 %2962
    %2964 = vset.pattern.permute.xlu0 0
    %2965 = vperm.xlu0 %2964, %v2792
    %v2966 = vpop.permute.xlu0 %2965
    %2967 = vset.pattern.permute.xlu0 0
    %2968 = vperm.xlu0 %2967, %v2793
    %v2969 = vpop.permute.xlu0 %2968
    %2970 = vset.pattern.permute.xlu0 0
    %2971 = vperm.xlu0 %2970, %v2794
    %v2972 = vpop.permute.xlu0 %2971
    %2973 = vset.pattern.permute.xlu0 0
    %2974 = vperm.xlu0 %2973, %v2795
    %v2975 = vpop.permute.xlu0 %2974
    %2976 = vset.pattern.permute.xlu0 0
    %2977 = vperm.xlu0 %2976, %v2796
    %v2978 = vpop.permute.xlu0 %2977
    %2979 = vset.pattern.permute.xlu0 0
    %2980 = vperm.xlu0 %2979, %v2797
    %v2981 = vpop.permute.xlu0 %2980
    %2982 = vset.pattern.permute.xlu0 0
    %2983 = vperm.xlu0 %2982, %v2798
    %v2984 = vpop.permute.xlu0 %2983
    %2985 = vset.pattern.permute.xlu0 0
    %2986 = vperm.xlu0 %2985, %v2799
    %v2987 = vpop.permute.xlu0 %2986
    %2988 = vset.pattern.permute.xlu0 0
    %2989 = vperm.xlu0 %2988, %v2800
    %v2990 = vpop.permute.xlu0 %2989
    %2991 = vset.pattern.permute.xlu0 0
    %2992 = vperm.xlu0 %2991, %v2801
    %v2993 = vpop.permute.xlu0 %2992
    %2994 = vset.pattern.permute.xlu0 0
    %2995 = vperm.xlu0 %2994, %v2802
    %v2996 = vpop.permute.xlu0 %2995
    %2997 = vset.pattern.permute.xlu0 0
    %2998 = vperm.xlu0 %2997, %v2803
    %v2999 = vpop.permute.xlu0 %2998
    %3000 = vset.pattern.permute.xlu0 0
    %3001 = vperm.xlu0 %3000, %v2804
    %v3002 = vpop.permute.xlu0 %3001
    %3003 = vset.pattern.permute.xlu0 0
    %3004 = vperm.xlu0 %3003, %v2805
    %v3005 = vpop.permute.xlu0 %3004
    %3006 = vset.pattern.permute.xlu0 0
    %3007 = vperm.xlu0 %3006, %v2806
    %v3008 = vpop.permute.xlu0 %3007
    %3009 = vset.pattern.permute.xlu0 0
    %3010 = vperm.xlu0 %3009, %v2807
    %v3011 = vpop.permute.xlu0 %3010
    %3012 = vset.pattern.permute.xlu0 0
    %3013 = vperm.xlu0 %3012, %v2808
    %v3014 = vpop.permute.xlu0 %3013
    %3015 = vset.pattern.permute.xlu0 0
    %3016 = vperm.xlu0 %3015, %v2809
    %v3017 = vpop.permute.xlu0 %3016
    %3018 = vset.pattern.permute.xlu0 0
    %3019 = vperm.xlu0 %3018, %v2810
    %v3020 = vpop.permute.xlu0 %3019
    %3021 = vset.pattern.permute.xlu0 0
    %3022 = vperm.xlu0 %3021, %v2811
    %v3023 = vpop.permute.xlu0 %3022
    %3024 = vset.pattern.permute.xlu0 0
    %3025 = vperm.xlu0 %3024, %v2812
    %v3026 = vpop.permute.xlu0 %3025
    %3027 = vset.pattern.permute.xlu0 0
    %3028 = vperm.xlu0 %3027, %v2813
    %v3029 = vpop.permute.xlu0 %3028
    %3030 = vset.pattern.permute.xlu0 0
    %3031 = vperm.xlu0 %3030, %v2814
    %v3032 = vpop.permute.xlu0 %3031
    %3033 = vset.pattern.permute.xlu0 0
    %3034 = vperm.xlu0 %3033, %v2815
    %v3035 = vpop.permute.xlu0 %3034
    %3036 = vset.pattern.permute.xlu0 0
    %3037 = vperm.xlu0 %3036, %v2816
    %v3038 = vpop.permute.xlu0 %3037
    %3039 = vset.pattern.permute.xlu0 0
    %3040 = vperm.xlu0 %3039, %v2817
    %v3041 = vpop.permute.xlu0 %3040
    %3042 = vset.pattern.permute.xlu0 0
    %3043 = vperm.xlu0 %3042, %v2818
    %v3044 = vpop.permute.xlu0 %3043
    %3045 = vset.pattern.permute.xlu0 0
    %3046 = vperm.xlu0 %3045, %v2819
    %v3047 = vpop.permute.xlu0 %3046
    %3048 = vset.pattern.permute.xlu0 0
    %3049 = vperm.xlu0 %3048, %v2820
    %v3050 = vpop.permute.xlu0 %3049
    %3051 = vset.pattern.permute.xlu0 0
    %3052 = vperm.xlu0 %3051, %v2821
    %v3053 = vpop.permute.xlu0 %3052
    %3054 = vset.pattern.permute.xlu0 0
    %3055 = vperm.xlu0 %3054, %v2822
    %v3056 = vpop.permute.xlu0 %3055
    %3057 = vset.pattern.permute.xlu0 0
    %3058 = vperm.xlu0 %3057, %v2823
    %v3059 = vpop.permute.xlu0 %3058
    %3060 = vset.pattern.permute.xlu0 0
    %3061 = vperm.xlu0 %3060, %v2824
    %v3062 = vpop.permute.xlu0 %3061
    %3063 = vset.pattern.permute.xlu0 0
    %3064 = vperm.xlu0 %3063, %v2825
    %v3065 = vpop.permute.xlu0 %3064
    %3066 = vset.pattern.permute.xlu0 0
    %3067 = vperm.xlu0 %3066, %v2826
    %v3068 = vpop.permute.xlu0 %3067
    %3069 = vset.pattern.permute.xlu0 0
    %3070 = vperm.xlu0 %3069, %v2827
    %v3071 = vpop.permute.xlu0 %3070
    %3072 = vset.pattern.permute.xlu0 0
    %3073 = vperm.xlu0 %3072, %v2828
    %v3074 = vpop.permute.xlu0 %3073
    %3075 = vset.pattern.permute.xlu0 0
    %3076 = vperm.xlu0 %3075, %v2829
    %v3077 = vpop.permute.xlu0 %3076
    %3078 = vset.pattern.permute.xlu0 0
    %3079 = vperm.xlu0 %3078, %v2830
    %v3080 = vpop.permute.xlu0 %3079
    %3081 = vset.pattern.permute.xlu0 0
    %3082 = vperm.xlu0 %3081, %v2831
    %v3083 = vpop.permute.xlu0 %3082
    %3084 = vset.pattern.permute.xlu0 0
    %3085 = vperm.xlu0 %3084, %v2832
    %v3086 = vpop.permute.xlu0 %3085
    %3087 = vset.pattern.permute.xlu0 0
    %3088 = vperm.xlu0 %3087, %v2833
    %v3089 = vpop.permute.xlu0 %3088
    %v3090 = vperm.slane %v2900, %v2117
    %v3091 = vperm.slane %v2903, %v2119
    %v3092 = vsel %vm2121, %v3091, %v3090
    %v3093 = vperm.slane %v2906, %v2117
    %v3094 = vperm.slane %v2909, %v2119
    %v3095 = vsel %vm2121, %v3094, %v3093
    %v3096 = vperm.slane %v2912, %v2117
    %v3097 = vperm.slane %v2915, %v2119
    %v3098 = vsel %vm2121, %v3097, %v3096
    %v3099 = vperm.slane %v2918, %v2117
    %v3100 = vperm.slane %v2921, %v2119
    %v3101 = vsel %vm2121, %v3100, %v3099
    %v3102 = vperm.slane %v2924, %v2117
    %v3103 = vperm.slane %v2927, %v2119
    %v3104 = vsel %vm2121, %v3103, %v3102
    %v3105 = vperm.slane %v2930, %v2117
    %v3106 = vperm.slane %v2933, %v2119
    %v3107 = vsel %vm2121, %v3106, %v3105
    %v3108 = vperm.slane %v2936, %v2117
    %v3109 = vperm.slane %v2939, %v2119
    %v3110 = vsel %vm2121, %v3109, %v3108
    %v3111 = vperm.slane %v2942, %v2117
    %v3112 = vperm.slane %v2945, %v2119
    %v3113 = vsel %vm2121, %v3112, %v3111
    %v3114 = vperm.slane %v2948, %v2117
    %v3115 = vperm.slane %v2951, %v2119
    %v3116 = vsel %vm2121, %v3115, %v3114
    %v3117 = vperm.slane %v2954, %v2117
    %v3118 = vperm.slane %v2957, %v2119
    %v3119 = vsel %vm2121, %v3118, %v3117
    %v3120 = vperm.slane %v2960, %v2117
    %v3121 = vperm.slane %v2963, %v2119
    %v3122 = vsel %vm2121, %v3121, %v3120
    %v3123 = vperm.slane %v2966, %v2117
    %v3124 = vperm.slane %v2969, %v2119
    %v3125 = vsel %vm2121, %v3124, %v3123
    %v3126 = vperm.slane %v2972, %v2117
    %v3127 = vperm.slane %v2975, %v2119
    %v3128 = vsel %vm2121, %v3127, %v3126
    %v3129 = vperm.slane %v2978, %v2117
    %v3130 = vperm.slane %v2981, %v2119
    %v3131 = vsel %vm2121, %v3130, %v3129
    %v3132 = vperm.slane %v2984, %v2117
    %v3133 = vperm.slane %v2987, %v2119
    %v3134 = vsel %vm2121, %v3133, %v3132
    %v3135 = vperm.slane %v2990, %v2117
    %v3136 = vperm.slane %v2993, %v2119
    %v3137 = vsel %vm2121, %v3136, %v3135
    %v3138 = vperm.slane %v2996, %v2117
    %v3139 = vperm.slane %v2999, %v2119
    %v3140 = vsel %vm2121, %v3139, %v3138
    %v3141 = vperm.slane %v3002, %v2117
    %v3142 = vperm.slane %v3005, %v2119
    %v3143 = vsel %vm2121, %v3142, %v3141
    %v3144 = vperm.slane %v3008, %v2117
    %v3145 = vperm.slane %v3011, %v2119
    %v3146 = vsel %vm2121, %v3145, %v3144
    %v3147 = vperm.slane %v3014, %v2117
    %v3148 = vperm.slane %v3017, %v2119
    %v3149 = vsel %vm2121, %v3148, %v3147
    %v3150 = vperm.slane %v3020, %v2117
    %v3151 = vperm.slane %v3023, %v2119
    %v3152 = vsel %vm2121, %v3151, %v3150
    %v3153 = vperm.slane %v3026, %v2117
    %v3154 = vperm.slane %v3029, %v2119
    %v3155 = vsel %vm2121, %v3154, %v3153
    %v3156 = vperm.slane %v3032, %v2117
    %v3157 = vperm.slane %v3035, %v2119
    %v3158 = vsel %vm2121, %v3157, %v3156
    %v3159 = vperm.slane %v3038, %v2117
    %v3160 = vperm.slane %v3041, %v2119
    %v3161 = vsel %vm2121, %v3160, %v3159
    %v3162 = vperm.slane %v3044, %v2117
    %v3163 = vperm.slane %v3047, %v2119
    %v3164 = vsel %vm2121, %v3163, %v3162
    %v3165 = vperm.slane %v3050, %v2117
    %v3166 = vperm.slane %v3053, %v2119
    %v3167 = vsel %vm2121, %v3166, %v3165
    %v3168 = vperm.slane %v3056, %v2117
    %v3169 = vperm.slane %v3059, %v2119
    %v3170 = vsel %vm2121, %v3169, %v3168
    %v3171 = vperm.slane %v3062, %v2117
    %v3172 = vperm.slane %v3065, %v2119
    %v3173 = vsel %vm2121, %v3172, %v3171
    %v3174 = vperm.slane %v3068, %v2117
    %v3175 = vperm.slane %v3071, %v2119
    %v3176 = vsel %vm2121, %v3175, %v3174
    %v3177 = vperm.slane %v3074, %v2117
    %v3178 = vperm.slane %v3077, %v2119
    %v3179 = vsel %vm2121, %v3178, %v3177
    %v3180 = vperm.slane %v3080, %v2117
    %v3181 = vperm.slane %v3083, %v2119
    %v3182 = vsel %vm2121, %v3181, %v3180
    %v3183 = vperm.slane %v3086, %v2117
    %v3184 = vperm.slane %v3089, %v2119
    %v3185 = vsel %vm2121, %v3184, %v3183
    %v3186 = vsel %vm2216, %v3095, %v3092
    %v3187 = vsel %vm2218, %v3098, %v3186
    %v3188 = vsel %vm2220, %v3101, %v3187
    %v3189 = vsel %vm2222, %v3104, %v3188
    %v3190 = vsel %vm2224, %v3107, %v3189
    %v3191 = vsel %vm2226, %v3110, %v3190
    %v3192 = vsel %vm2228, %v3113, %v3191
    %v3193 = vsel %vm2216, %v3119, %v3116
    %v3194 = vsel %vm2218, %v3122, %v3193
    %v3195 = vsel %vm2220, %v3125, %v3194
    %v3196 = vsel %vm2222, %v3128, %v3195
    %v3197 = vsel %vm2224, %v3131, %v3196
    %v3198 = vsel %vm2226, %v3134, %v3197
    %v3199 = vsel %vm2228, %v3137, %v3198
    %v3200 = vsel %vm2216, %v3143, %v3140
    %v3201 = vsel %vm2218, %v3146, %v3200
    %v3202 = vsel %vm2220, %v3149, %v3201
    %v3203 = vsel %vm2222, %v3152, %v3202
    %v3204 = vsel %vm2224, %v3155, %v3203
    %v3205 = vsel %vm2226, %v3158, %v3204
    %v3206 = vsel %vm2228, %v3161, %v3205
    %v3207 = vsel %vm2216, %v3167, %v3164
    %v3208 = vsel %vm2218, %v3170, %v3207
    %v3209 = vsel %vm2220, %v3173, %v3208
    %v3210 = vsel %vm2222, %v3176, %v3209
    %v3211 = vsel %vm2224, %v3179, %v3210
    %v3212 = vsel %vm2226, %v3182, %v3211
    %v3213 = vsel %vm2228, %v3185, %v3212
    %v3218 = vsel %vm2255, %v3192, 0.0
    %3219 = vadd.xlane.f32.xlu0 %v3218
    %v3220 = vpop.xlane.xlu0 %3219
    %v3221 = vsel %vm2255, %v3199, 0.0
    %3222 = vadd.xlane.f32.xlu0 %v3221
    %v3223 = vpop.xlane.xlu0 %3222
    %v3224 = vsel %vm2255, %v3206, 0.0
    %3225 = vadd.xlane.f32.xlu0 %v3224
    %v3226 = vpop.xlane.xlu0 %3225
    %v3227 = vsel %vm2255, %v3213, 0.0
    %3228 = vadd.xlane.f32.xlu0 %v3227
    %v3229 = vpop.xlane.xlu0 %3228
    %v3230 = vmax.f32 %v3220, 1e-30
    %v3231 = vmax.f32 %v3223, 1e-30
    %v3232 = vmax.f32 %v3226, 1e-30
    %v3233 = vmax.f32 %v3229, 1e-30
    %v3234 = vrcp.pop %v3230
    %v3235 = vrcp.pop %v3231
    %v3236 = vrcp.pop %v3232
    %v3237 = vrcp.pop %v3233
    %v3242 = vperm.slane %v3234, 0
    %v3243 = vperm.slane %v3234, 1
    %v3244 = vperm.slane %v3234, 2
    %v3245 = vperm.slane %v3234, 3
    %v3246 = vperm.slane %v3234, 4
    %v3247 = vperm.slane %v3234, 5
    %v3248 = vperm.slane %v3234, 6
    %v3249 = vperm.slane %v3234, 7
    %v3250 = vperm.slane %v3235, 0
    %v3251 = vperm.slane %v3235, 1
    %v3252 = vperm.slane %v3235, 2
    %v3253 = vperm.slane %v3235, 3
    %v3254 = vperm.slane %v3235, 4
    %v3255 = vperm.slane %v3235, 5
    %v3256 = vperm.slane %v3235, 6
    %v3257 = vperm.slane %v3235, 7
    %v3258 = vperm.slane %v3236, 0
    %v3259 = vperm.slane %v3236, 1
    %v3260 = vperm.slane %v3236, 2
    %v3261 = vperm.slane %v3236, 3
    %v3262 = vperm.slane %v3236, 4
    %v3263 = vperm.slane %v3236, 5
    %v3264 = vperm.slane %v3236, 6
    %v3265 = vperm.slane %v3236, 7
    %v3266 = vperm.slane %v3237, 0
    %v3267 = vperm.slane %v3237, 1
    %v3268 = vperm.slane %v3237, 2
    %v3269 = vperm.slane %v3237, 3
    %v3270 = vperm.slane %v3237, 4
    %v3271 = vperm.slane %v3237, 5
    %v3272 = vperm.slane %v3237, 6
    %v3273 = vperm.slane %v3237, 7
    %v3306 = vmul.f32 %v2770, %v3242
    %v3307 = vmul.f32 %v2771, %v3242
    %v3308 = vmul.f32 %v2772, %v3243
    %v3309 = vmul.f32 %v2773, %v3243
    %v3310 = vmul.f32 %v2774, %v3244
    %v3311 = vmul.f32 %v2775, %v3244
    %v3312 = vmul.f32 %v2776, %v3245
    %v3313 = vmul.f32 %v2777, %v3245
    %v3314 = vmul.f32 %v2778, %v3246
    %v3315 = vmul.f32 %v2779, %v3246
    %v3316 = vmul.f32 %v2780, %v3247
    %v3317 = vmul.f32 %v2781, %v3247
    %v3318 = vmul.f32 %v2782, %v3248
    %v3319 = vmul.f32 %v2783, %v3248
    %v3320 = vmul.f32 %v2784, %v3249
    %v3321 = vmul.f32 %v2785, %v3249
    %v3322 = vmul.f32 %v2786, %v3250
    %v3323 = vmul.f32 %v2787, %v3250
    %v3324 = vmul.f32 %v2788, %v3251
    %v3325 = vmul.f32 %v2789, %v3251
    %v3326 = vmul.f32 %v2790, %v3252
    %v3327 = vmul.f32 %v2791, %v3252
    %v3328 = vmul.f32 %v2792, %v3253
    %v3329 = vmul.f32 %v2793, %v3253
    %v3330 = vmul.f32 %v2794, %v3254
    %v3331 = vmul.f32 %v2795, %v3254
    %v3332 = vmul.f32 %v2796, %v3255
    %v3333 = vmul.f32 %v2797, %v3255
    %v3334 = vmul.f32 %v2798, %v3256
    %v3335 = vmul.f32 %v2799, %v3256
    %v3336 = vmul.f32 %v2800, %v3257
    %v3337 = vmul.f32 %v2801, %v3257
    %v3338 = vmul.f32 %v2802, %v3258
    %v3339 = vmul.f32 %v2803, %v3258
    %v3340 = vmul.f32 %v2804, %v3259
    %v3341 = vmul.f32 %v2805, %v3259
    %v3342 = vmul.f32 %v2806, %v3260
    %v3343 = vmul.f32 %v2807, %v3260
    %v3344 = vmul.f32 %v2808, %v3261
    %v3345 = vmul.f32 %v2809, %v3261
    %v3346 = vmul.f32 %v2810, %v3262
    %v3347 = vmul.f32 %v2811, %v3262
    %v3348 = vmul.f32 %v2812, %v3263
    %v3349 = vmul.f32 %v2813, %v3263
    %v3350 = vmul.f32 %v2814, %v3264
    %v3351 = vmul.f32 %v2815, %v3264
    %v3352 = vmul.f32 %v2816, %v3265
    %v3353 = vmul.f32 %v2817, %v3265
    %v3354 = vmul.f32 %v2818, %v3266
    %v3355 = vmul.f32 %v2819, %v3266
    %v3356 = vmul.f32 %v2820, %v3267
    %v3357 = vmul.f32 %v2821, %v3267
    %v3358 = vmul.f32 %v2822, %v3268
    %v3359 = vmul.f32 %v2823, %v3268
    %v3360 = vmul.f32 %v2824, %v3269
    %v3361 = vmul.f32 %v2825, %v3269
    %v3362 = vmul.f32 %v2826, %v3270
    %v3363 = vmul.f32 %v2827, %v3270
    %v3364 = vmul.f32 %v2828, %v3271
    %v3365 = vmul.f32 %v2829, %v3271
    %v3366 = vmul.f32 %v2830, %v3272
    %v3367 = vmul.f32 %v2831, %v3272
    %v3368 = vmul.f32 %v2832, %v3273
    %v3369 = vmul.f32 %v2833, %v3273
    %3402 = vset.pattern.permute.xlu0 0
    %3403 = vperm.xlu0 %3402, %v3306
    %v3404 = vpop.permute.xlu0 %3403
    %3405 = vset.pattern.permute.xlu0 0
    %3406 = vperm.xlu0 %3405, %v3307
    %v3407 = vpop.permute.xlu0 %3406
    %3408 = vset.pattern.permute.xlu0 0
    %3409 = vperm.xlu0 %3408, %v3308
    %v3410 = vpop.permute.xlu0 %3409
    %3411 = vset.pattern.permute.xlu0 0
    %3412 = vperm.xlu0 %3411, %v3309
    %v3413 = vpop.permute.xlu0 %3412
    %3414 = vset.pattern.permute.xlu0 0
    %3415 = vperm.xlu0 %3414, %v3310
    %v3416 = vpop.permute.xlu0 %3415
    %3417 = vset.pattern.permute.xlu0 0
    %3418 = vperm.xlu0 %3417, %v3311
    %v3419 = vpop.permute.xlu0 %3418
    %3420 = vset.pattern.permute.xlu0 0
    %3421 = vperm.xlu0 %3420, %v3312
    %v3422 = vpop.permute.xlu0 %3421
    %3423 = vset.pattern.permute.xlu0 0
    %3424 = vperm.xlu0 %3423, %v3313
    %v3425 = vpop.permute.xlu0 %3424
    %3426 = vset.pattern.permute.xlu0 0
    %3427 = vperm.xlu0 %3426, %v3314
    %v3428 = vpop.permute.xlu0 %3427
    %3429 = vset.pattern.permute.xlu0 0
    %3430 = vperm.xlu0 %3429, %v3315
    %v3431 = vpop.permute.xlu0 %3430
    %3432 = vset.pattern.permute.xlu0 0
    %3433 = vperm.xlu0 %3432, %v3316
    %v3434 = vpop.permute.xlu0 %3433
    %3435 = vset.pattern.permute.xlu0 0
    %3436 = vperm.xlu0 %3435, %v3317
    %v3437 = vpop.permute.xlu0 %3436
    %3438 = vset.pattern.permute.xlu0 0
    %3439 = vperm.xlu0 %3438, %v3318
    %v3440 = vpop.permute.xlu0 %3439
    %3441 = vset.pattern.permute.xlu0 0
    %3442 = vperm.xlu0 %3441, %v3319
    %v3443 = vpop.permute.xlu0 %3442
    %3444 = vset.pattern.permute.xlu0 0
    %3445 = vperm.xlu0 %3444, %v3320
    %v3446 = vpop.permute.xlu0 %3445
    %3447 = vset.pattern.permute.xlu0 0
    %3448 = vperm.xlu0 %3447, %v3321
    %v3449 = vpop.permute.xlu0 %3448
    %3450 = vset.pattern.permute.xlu0 0
    %3451 = vperm.xlu0 %3450, %v3322
    %v3452 = vpop.permute.xlu0 %3451
    %3453 = vset.pattern.permute.xlu0 0
    %3454 = vperm.xlu0 %3453, %v3323
    %v3455 = vpop.permute.xlu0 %3454
    %3456 = vset.pattern.permute.xlu0 0
    %3457 = vperm.xlu0 %3456, %v3324
    %v3458 = vpop.permute.xlu0 %3457
    %3459 = vset.pattern.permute.xlu0 0
    %3460 = vperm.xlu0 %3459, %v3325
    %v3461 = vpop.permute.xlu0 %3460
    %3462 = vset.pattern.permute.xlu0 0
    %3463 = vperm.xlu0 %3462, %v3326
    %v3464 = vpop.permute.xlu0 %3463
    %3465 = vset.pattern.permute.xlu0 0
    %3466 = vperm.xlu0 %3465, %v3327
    %v3467 = vpop.permute.xlu0 %3466
    %3468 = vset.pattern.permute.xlu0 0
    %3469 = vperm.xlu0 %3468, %v3328
    %v3470 = vpop.permute.xlu0 %3469
    %3471 = vset.pattern.permute.xlu0 0
    %3472 = vperm.xlu0 %3471, %v3329
    %v3473 = vpop.permute.xlu0 %3472
    %3474 = vset.pattern.permute.xlu0 0
    %3475 = vperm.xlu0 %3474, %v3330
    %v3476 = vpop.permute.xlu0 %3475
    %3477 = vset.pattern.permute.xlu0 0
    %3478 = vperm.xlu0 %3477, %v3331
    %v3479 = vpop.permute.xlu0 %3478
    %3480 = vset.pattern.permute.xlu0 0
    %3481 = vperm.xlu0 %3480, %v3332
    %v3482 = vpop.permute.xlu0 %3481
    %3483 = vset.pattern.permute.xlu0 0
    %3484 = vperm.xlu0 %3483, %v3333
    %v3485 = vpop.permute.xlu0 %3484
    %3486 = vset.pattern.permute.xlu0 0
    %3487 = vperm.xlu0 %3486, %v3334
    %v3488 = vpop.permute.xlu0 %3487
    %3489 = vset.pattern.permute.xlu0 0
    %3490 = vperm.xlu0 %3489, %v3335
    %v3491 = vpop.permute.xlu0 %3490
    %3492 = vset.pattern.permute.xlu0 0
    %3493 = vperm.xlu0 %3492, %v3336
    %v3494 = vpop.permute.xlu0 %3493
    %3495 = vset.pattern.permute.xlu0 0
    %3496 = vperm.xlu0 %3495, %v3337
    %v3497 = vpop.permute.xlu0 %3496
    %v3498 = vperm.slane %v3404, %v2117
    %v3499 = vperm.slane %v3407, %v2119
    %v3500 = vsel %vm2121, %v3499, %v3498
    %v3501 = vperm.slane %v3410, %v2117
    %v3502 = vperm.slane %v3413, %v2119
    %v3503 = vsel %vm2121, %v3502, %v3501
    %v3504 = vperm.slane %v3416, %v2117
    %v3505 = vperm.slane %v3419, %v2119
    %v3506 = vsel %vm2121, %v3505, %v3504
    %v3507 = vperm.slane %v3422, %v2117
    %v3508 = vperm.slane %v3425, %v2119
    %v3509 = vsel %vm2121, %v3508, %v3507
    %v3510 = vperm.slane %v3428, %v2117
    %v3511 = vperm.slane %v3431, %v2119
    %v3512 = vsel %vm2121, %v3511, %v3510
    %v3513 = vperm.slane %v3434, %v2117
    %v3514 = vperm.slane %v3437, %v2119
    %v3515 = vsel %vm2121, %v3514, %v3513
    %v3516 = vperm.slane %v3440, %v2117
    %v3517 = vperm.slane %v3443, %v2119
    %v3518 = vsel %vm2121, %v3517, %v3516
    %v3519 = vperm.slane %v3446, %v2117
    %v3520 = vperm.slane %v3449, %v2119
    %v3521 = vsel %vm2121, %v3520, %v3519
    %v3522 = vperm.slane %v3452, %v2117
    %v3523 = vperm.slane %v3455, %v2119
    %v3524 = vsel %vm2121, %v3523, %v3522
    %v3525 = vperm.slane %v3458, %v2117
    %v3526 = vperm.slane %v3461, %v2119
    %v3527 = vsel %vm2121, %v3526, %v3525
    %v3528 = vperm.slane %v3464, %v2117
    %v3529 = vperm.slane %v3467, %v2119
    %v3530 = vsel %vm2121, %v3529, %v3528
    %v3531 = vperm.slane %v3470, %v2117
    %v3532 = vperm.slane %v3473, %v2119
    %v3533 = vsel %vm2121, %v3532, %v3531
    %v3534 = vperm.slane %v3476, %v2117
    %v3535 = vperm.slane %v3479, %v2119
    %v3536 = vsel %vm2121, %v3535, %v3534
    %v3537 = vperm.slane %v3482, %v2117
    %v3538 = vperm.slane %v3485, %v2119
    %v3539 = vsel %vm2121, %v3538, %v3537
    %v3540 = vperm.slane %v3488, %v2117
    %v3541 = vperm.slane %v3491, %v2119
    %v3542 = vsel %vm2121, %v3541, %v3540
    %v3543 = vperm.slane %v3494, %v2117
    %v3544 = vperm.slane %v3497, %v2119
    %v3545 = vsel %vm2121, %v3544, %v3543
    %v3546 = vsel %vm2216, %v3503, %v3500
    %v3547 = vsel %vm2218, %v3506, %v3546
    %v3548 = vsel %vm2220, %v3509, %v3547
    %v3549 = vsel %vm2222, %v3512, %v3548
    %v3550 = vsel %vm2224, %v3515, %v3549
    %v3551 = vsel %vm2226, %v3518, %v3550
    %v3552 = vsel %vm2228, %v3521, %v3551
    %v3553 = vsel %vm2216, %v3527, %v3524
    %v3554 = vsel %vm2218, %v3530, %v3553
    %v3555 = vsel %vm2220, %v3533, %v3554
    %v3556 = vsel %vm2222, %v3536, %v3555
    %v3557 = vsel %vm2224, %v3539, %v3556
    %v3558 = vsel %vm2226, %v3542, %v3557
    %v3559 = vsel %vm2228, %v3545, %v3558
    %v3560 = vsel %vm2255, %v3552, 0
    %v3562 = vsel %vm2255, %v3559, 0
    %3564 = vmatpush.msra.mxu0 0.0
    %3565 = vmatpush.msra.mxu0 0.0
    %3566 = vmatpush.msra.mxu0 0.0
    %3567 = vmatpush.msra.mxu0 0.0
    %3568 = vmatpush.msra.mxu0 0.0
    %3569 = vmatpush.msra.mxu0 0.0
    %3570 = vmatpush.msra.mxu0 0.0
    %3571 = vmatpush.msra.mxu0 0.0
    %3572 = vmatpush.msra.mxu0 0.0
    %3573 = vmatpush.msra.mxu0 0.0
    %3574 = vmatpush.msra.mxu0 0.0
    %3575 = vmatpush.msra.mxu0 0.0
    %3576 = vmatpush.msra.mxu0 0.0
    %3577 = vmatpush.msra.mxu0 0.0
    %3578 = vmatpush.msra.mxu0 %v115
    %3579 = vmatpush.msra.mxu0 %v112
    %3580 = vmatmul.f32.gmra.mxu0 %v3560
    %v3581 = vpop.f32.mrf.mxu0
    %v3582 = vadd.f32 0.0, %v3581
    %3583 = vmatmul.f32.gmra.mxu0 %v3562
    %v3584 = vpop.f32.mrf.mxu0
    %v3585 = vadd.f32 0.0, %v3584
    %3586 = vdwg.mxu0
    %3619 = vset.pattern.permute.xlu0 0
    %3620 = vperm.xlu0 %3619, %v3338
    %v3621 = vpop.permute.xlu0 %3620
    %3622 = vset.pattern.permute.xlu0 0
    %3623 = vperm.xlu0 %3622, %v3339
    %v3624 = vpop.permute.xlu0 %3623
    %3625 = vset.pattern.permute.xlu0 0
    %3626 = vperm.xlu0 %3625, %v3340
    %v3627 = vpop.permute.xlu0 %3626
    %3628 = vset.pattern.permute.xlu0 0
    %3629 = vperm.xlu0 %3628, %v3341
    %v3630 = vpop.permute.xlu0 %3629
    %3631 = vset.pattern.permute.xlu0 0
    %3632 = vperm.xlu0 %3631, %v3342
    %v3633 = vpop.permute.xlu0 %3632
    %3634 = vset.pattern.permute.xlu0 0
    %3635 = vperm.xlu0 %3634, %v3343
    %v3636 = vpop.permute.xlu0 %3635
    %3637 = vset.pattern.permute.xlu0 0
    %3638 = vperm.xlu0 %3637, %v3344
    %v3639 = vpop.permute.xlu0 %3638
    %3640 = vset.pattern.permute.xlu0 0
    %3641 = vperm.xlu0 %3640, %v3345
    %v3642 = vpop.permute.xlu0 %3641
    %3643 = vset.pattern.permute.xlu0 0
    %3644 = vperm.xlu0 %3643, %v3346
    %v3645 = vpop.permute.xlu0 %3644
    %3646 = vset.pattern.permute.xlu0 0
    %3647 = vperm.xlu0 %3646, %v3347
    %v3648 = vpop.permute.xlu0 %3647
    %3649 = vset.pattern.permute.xlu0 0
    %3650 = vperm.xlu0 %3649, %v3348
    %v3651 = vpop.permute.xlu0 %3650
    %3652 = vset.pattern.permute.xlu0 0
    %3653 = vperm.xlu0 %3652, %v3349
    %v3654 = vpop.permute.xlu0 %3653
    %3655 = vset.pattern.permute.xlu0 0
    %3656 = vperm.xlu0 %3655, %v3350
    %v3657 = vpop.permute.xlu0 %3656
    %3658 = vset.pattern.permute.xlu0 0
    %3659 = vperm.xlu0 %3658, %v3351
    %v3660 = vpop.permute.xlu0 %3659
    %3661 = vset.pattern.permute.xlu0 0
    %3662 = vperm.xlu0 %3661, %v3352
    %v3663 = vpop.permute.xlu0 %3662
    %3664 = vset.pattern.permute.xlu0 0
    %3665 = vperm.xlu0 %3664, %v3353
    %v3666 = vpop.permute.xlu0 %3665
    %3667 = vset.pattern.permute.xlu0 0
    %3668 = vperm.xlu0 %3667, %v3354
    %v3669 = vpop.permute.xlu0 %3668
    %3670 = vset.pattern.permute.xlu0 0
    %3671 = vperm.xlu0 %3670, %v3355
    %v3672 = vpop.permute.xlu0 %3671
    %3673 = vset.pattern.permute.xlu0 0
    %3674 = vperm.xlu0 %3673, %v3356
    %v3675 = vpop.permute.xlu0 %3674
    %3676 = vset.pattern.permute.xlu0 0
    %3677 = vperm.xlu0 %3676, %v3357
    %v3678 = vpop.permute.xlu0 %3677
    %3679 = vset.pattern.permute.xlu0 0
    %3680 = vperm.xlu0 %3679, %v3358
    %v3681 = vpop.permute.xlu0 %3680
    %3682 = vset.pattern.permute.xlu0 0
    %3683 = vperm.xlu0 %3682, %v3359
    %v3684 = vpop.permute.xlu0 %3683
    %3685 = vset.pattern.permute.xlu0 0
    %3686 = vperm.xlu0 %3685, %v3360
    %v3687 = vpop.permute.xlu0 %3686
    %3688 = vset.pattern.permute.xlu0 0
    %3689 = vperm.xlu0 %3688, %v3361
    %v3690 = vpop.permute.xlu0 %3689
    %3691 = vset.pattern.permute.xlu0 0
    %3692 = vperm.xlu0 %3691, %v3362
    %v3693 = vpop.permute.xlu0 %3692
    %3694 = vset.pattern.permute.xlu0 0
    %3695 = vperm.xlu0 %3694, %v3363
    %v3696 = vpop.permute.xlu0 %3695
    %3697 = vset.pattern.permute.xlu0 0
    %3698 = vperm.xlu0 %3697, %v3364
    %v3699 = vpop.permute.xlu0 %3698
    %3700 = vset.pattern.permute.xlu0 0
    %3701 = vperm.xlu0 %3700, %v3365
    %v3702 = vpop.permute.xlu0 %3701
    %3703 = vset.pattern.permute.xlu0 0
    %3704 = vperm.xlu0 %3703, %v3366
    %v3705 = vpop.permute.xlu0 %3704
    %3706 = vset.pattern.permute.xlu0 0
    %3707 = vperm.xlu0 %3706, %v3367
    %v3708 = vpop.permute.xlu0 %3707
    %3709 = vset.pattern.permute.xlu0 0
    %3710 = vperm.xlu0 %3709, %v3368
    %v3711 = vpop.permute.xlu0 %3710
    %3712 = vset.pattern.permute.xlu0 0
    %3713 = vperm.xlu0 %3712, %v3369
    %v3714 = vpop.permute.xlu0 %3713
    %v3715 = vperm.slane %v3621, %v2117
    %v3716 = vperm.slane %v3624, %v2119
    %v3717 = vsel %vm2121, %v3716, %v3715
    %v3718 = vperm.slane %v3627, %v2117
    %v3719 = vperm.slane %v3630, %v2119
    %v3720 = vsel %vm2121, %v3719, %v3718
    %v3721 = vperm.slane %v3633, %v2117
    %v3722 = vperm.slane %v3636, %v2119
    %v3723 = vsel %vm2121, %v3722, %v3721
    %v3724 = vperm.slane %v3639, %v2117
    %v3725 = vperm.slane %v3642, %v2119
    %v3726 = vsel %vm2121, %v3725, %v3724
    %v3727 = vperm.slane %v3645, %v2117
    %v3728 = vperm.slane %v3648, %v2119
    %v3729 = vsel %vm2121, %v3728, %v3727
    %v3730 = vperm.slane %v3651, %v2117
    %v3731 = vperm.slane %v3654, %v2119
    %v3732 = vsel %vm2121, %v3731, %v3730
    %v3733 = vperm.slane %v3657, %v2117
    %v3734 = vperm.slane %v3660, %v2119
    %v3735 = vsel %vm2121, %v3734, %v3733
    %v3736 = vperm.slane %v3663, %v2117
    %v3737 = vperm.slane %v3666, %v2119
    %v3738 = vsel %vm2121, %v3737, %v3736
    %v3739 = vperm.slane %v3669, %v2117
    %v3740 = vperm.slane %v3672, %v2119
    %v3741 = vsel %vm2121, %v3740, %v3739
    %v3742 = vperm.slane %v3675, %v2117
    %v3743 = vperm.slane %v3678, %v2119
    %v3744 = vsel %vm2121, %v3743, %v3742
    %v3745 = vperm.slane %v3681, %v2117
    %v3746 = vperm.slane %v3684, %v2119
    %v3747 = vsel %vm2121, %v3746, %v3745
    %v3748 = vperm.slane %v3687, %v2117
    %v3749 = vperm.slane %v3690, %v2119
    %v3750 = vsel %vm2121, %v3749, %v3748
    %v3751 = vperm.slane %v3693, %v2117
    %v3752 = vperm.slane %v3696, %v2119
    %v3753 = vsel %vm2121, %v3752, %v3751
    %v3754 = vperm.slane %v3699, %v2117
    %v3755 = vperm.slane %v3702, %v2119
    %v3756 = vsel %vm2121, %v3755, %v3754
    %v3757 = vperm.slane %v3705, %v2117
    %v3758 = vperm.slane %v3708, %v2119
    %v3759 = vsel %vm2121, %v3758, %v3757
    %v3760 = vperm.slane %v3711, %v2117
    %v3761 = vperm.slane %v3714, %v2119
    %v3762 = vsel %vm2121, %v3761, %v3760
    %v3763 = vsel %vm2216, %v3720, %v3717
    %v3764 = vsel %vm2218, %v3723, %v3763
    %v3765 = vsel %vm2220, %v3726, %v3764
    %v3766 = vsel %vm2222, %v3729, %v3765
    %v3767 = vsel %vm2224, %v3732, %v3766
    %v3768 = vsel %vm2226, %v3735, %v3767
    %v3769 = vsel %vm2228, %v3738, %v3768
    %v3770 = vsel %vm2216, %v3744, %v3741
    %v3771 = vsel %vm2218, %v3747, %v3770
    %v3772 = vsel %vm2220, %v3750, %v3771
    %v3773 = vsel %vm2222, %v3753, %v3772
    %v3774 = vsel %vm2224, %v3756, %v3773
    %v3775 = vsel %vm2226, %v3759, %v3774
    %v3776 = vsel %vm2228, %v3762, %v3775
    %v3777 = vsel %vm2255, %v3769, 0
    %v3779 = vsel %vm2255, %v3776, 0
    %3781 = vmatpush.msra.mxu0 0.0
    %3782 = vmatpush.msra.mxu0 0.0
    %3783 = vmatpush.msra.mxu0 0.0
    %3784 = vmatpush.msra.mxu0 0.0
    %3785 = vmatpush.msra.mxu0 0.0
    %3786 = vmatpush.msra.mxu0 0.0
    %3787 = vmatpush.msra.mxu0 0.0
    %3788 = vmatpush.msra.mxu0 0.0
    %3789 = vmatpush.msra.mxu0 0.0
    %3790 = vmatpush.msra.mxu0 0.0
    %3791 = vmatpush.msra.mxu0 0.0
    %3792 = vmatpush.msra.mxu0 0.0
    %3793 = vmatpush.msra.mxu0 0.0
    %3794 = vmatpush.msra.mxu0 0.0
    %3795 = vmatpush.msra.mxu0 %v138
    %3796 = vmatpush.msra.mxu0 %v135
    %3797 = vmatmul.f32.gmra.mxu0 %v3777
    %v3798 = vpop.f32.mrf.mxu0
    %v3799 = vadd.f32 0.0, %v3798
    %3800 = vmatmul.f32.gmra.mxu0 %v3779
    %v3801 = vpop.f32.mrf.mxu0
    %v3802 = vadd.f32 0.0, %v3801
    %3803 = vdwg.mxu0
    %v3804 = vadd.f32 %v3582, %v3799
    %v3805 = vadd.f32 %v3585, %v3802
    %v3806 = vrcp.pop 2.0
    %v3807 = vmul.f32 2.0, %v3806
    %v3808 = vsub.f32 1.0, %v3807
    %v3809 = vmul.f32 %v3806, %v3808
    %v3810 = vadd.f32 %v3806, %v3809
    %vm3811 = vweird.f32 %v3806
    %v3812 = vsel %vm3811, %v3806, %v3810
    %v3813 = vmul.f32 %v3804, %v3812
    %v3814 = vmul.f32 %v3805, %v3812
    %v3816 = vperm.slane %v74, 0
    %v3818 = vadd.f32 %v3813, %v3816
    %v3819 = vadd.f32 %v3814, %v3816
    %v3820 = vld [vmem:[%s4] sm:$0xff]
    %v3821 = vld [vmem:[%s4 + $0x8] sm:$0xff]
    %v3822 = vld [vmem:[%s4 + $0x10] sm:$0xff]
    %v3823 = vld [vmem:[%s4 + $0x18] sm:$0xff]
    %v3824 = vld [vmem:[%s4 + $0x20] sm:$0xff]
    %v3825 = vld [vmem:[%s4 + $0x28] sm:$0xff]
    %v3826 = vld [vmem:[%s4 + $0x30] sm:$0xff]
    %v3827 = vld [vmem:[%s4 + $0x38] sm:$0xff]
    %v3828 = vld [vmem:[%s4 + $0x40] sm:$0xff]
    %v3829 = vld [vmem:[%s4 + $0x48] sm:$0xff]
    %v3830 = vld [vmem:[%s4 + $0x50] sm:$0xff]
    %v3831 = vld [vmem:[%s4 + $0x58] sm:$0xff]
    %v3832 = vld [vmem:[%s4 + $0x60] sm:$0xff]
    %v3833 = vld [vmem:[%s4 + $0x68] sm:$0xff]
    %v3834 = vld [vmem:[%s4 + $0x70] sm:$0xff]
    %v3835 = vld [vmem:[%s4 + $0x78] sm:$0xff]
    %v3836 = vld [vmem:[%s4 + $0x80] sm:$0xff]
    %v3837 = vld [vmem:[%s4 + $0x88] sm:$0xff]
    %v3838 = vld [vmem:[%s4 + $0x90] sm:$0xff]
    %v3839 = vld [vmem:[%s4 + $0x98] sm:$0xff]
    %v3840 = vld [vmem:[%s4 + $0xa0] sm:$0xff]
    %v3841 = vld [vmem:[%s4 + $0xa8] sm:$0xff]
    %v3842 = vld [vmem:[%s4 + $0xb0] sm:$0xff]
    %v3843 = vld [vmem:[%s4 + $0xb8] sm:$0xff]
    %v3844 = vld [vmem:[%s4 + $0xc0] sm:$0xff]
    %v3845 = vld [vmem:[%s4 + $0xc8] sm:$0xff]
    %v3846 = vld [vmem:[%s4 + $0xd0] sm:$0xff]
    %v3847 = vld [vmem:[%s4 + $0xd8] sm:$0xff]
    %v3848 = vld [vmem:[%s4 + $0xe0] sm:$0xff]
    %v3849 = vld [vmem:[%s4 + $0xe8] sm:$0xff]
    %v3850 = vld [vmem:[%s4 + $0xf0] sm:$0xff]
    %v3851 = vld [vmem:[%s4 + $0xf8] sm:$0xff]
    %v3852 = vld [vmem:[%s4 + $0x100] sm:$0xff]
    %v3853 = vld [vmem:[%s4 + $0x108] sm:$0xff]
    %v3854 = vld [vmem:[%s4 + $0x110] sm:$0xff]
    %v3855 = vld [vmem:[%s4 + $0x118] sm:$0xff]
    %v3856 = vld [vmem:[%s4 + $0x120] sm:$0xff]
    %v3857 = vld [vmem:[%s4 + $0x128] sm:$0xff]
    %v3858 = vld [vmem:[%s4 + $0x130] sm:$0xff]
    %v3859 = vld [vmem:[%s4 + $0x138] sm:$0xff]
    %v3860 = vld [vmem:[%s4 + $0x140] sm:$0xff]
    %v3861 = vld [vmem:[%s4 + $0x148] sm:$0xff]
    %v3862 = vld [vmem:[%s4 + $0x150] sm:$0xff]
    %v3863 = vld [vmem:[%s4 + $0x158] sm:$0xff]
    %v3864 = vld [vmem:[%s4 + $0x160] sm:$0xff]
    %v3865 = vld [vmem:[%s4 + $0x168] sm:$0xff]
    %v3866 = vld [vmem:[%s4 + $0x170] sm:$0xff]
    %v3867 = vld [vmem:[%s4 + $0x178] sm:$0xff]
    %v3868 = vld [vmem:[%s4 + $0x180] sm:$0xff]
    %v3869 = vld [vmem:[%s4 + $0x188] sm:$0xff]
    %v3870 = vld [vmem:[%s4 + $0x190] sm:$0xff]
    %v3871 = vld [vmem:[%s4 + $0x198] sm:$0xff]
    %v3872 = vld [vmem:[%s4 + $0x1a0] sm:$0xff]
    %v3873 = vld [vmem:[%s4 + $0x1a8] sm:$0xff]
    %v3874 = vld [vmem:[%s4 + $0x1b0] sm:$0xff]
    %v3875 = vld [vmem:[%s4 + $0x1b8] sm:$0xff]
    %v3876 = vld [vmem:[%s4 + $0x1c0] sm:$0xff]
    %v3877 = vld [vmem:[%s4 + $0x1c8] sm:$0xff]
    %v3878 = vld [vmem:[%s4 + $0x1d0] sm:$0xff]
    %v3879 = vld [vmem:[%s4 + $0x1d8] sm:$0xff]
    %v3880 = vld [vmem:[%s4 + $0x1e0] sm:$0xff]
    %v3881 = vld [vmem:[%s4 + $0x1e8] sm:$0xff]
    %v3882 = vld [vmem:[%s4 + $0x1f0] sm:$0xff]
    %v3883 = vld [vmem:[%s4 + $0x1f8] sm:$0xff]
    %3884 = vmatpush.msra.mxu0 %v3835
    %3885 = vmatpush.msra.mxu0 %v3834
    %3886 = vmatpush.msra.mxu0 %v3833
    %3887 = vmatpush.msra.mxu0 %v3832
    %3888 = vmatpush.msra.mxu0 %v3831
    %3889 = vmatpush.msra.mxu0 %v3830
    %3890 = vmatpush.msra.mxu0 %v3829
    %3891 = vmatpush.msra.mxu0 %v3828
    %3892 = vmatpush.msra.mxu0 %v3827
    %3893 = vmatpush.msra.mxu0 %v3826
    %3894 = vmatpush.msra.mxu0 %v3825
    %3895 = vmatpush.msra.mxu0 %v3824
    %3896 = vmatpush.msra.mxu0 %v3823
    %3897 = vmatpush.msra.mxu0 %v3822
    %3898 = vmatpush.msra.mxu0 %v3821
    %3899 = vmatpush.msra.mxu0 %v3820
    %3900 = vmatmul.f32.gmra.mxu0 %v3818
    %v3901 = vpop.f32.mrf.mxu0
    %v3902 = vadd.f32 0.0, %v3901
    %3903 = vmatmul.f32.gmra.mxu0 %v3819
    %v3904 = vpop.f32.mrf.mxu0
    %v3905 = vadd.f32 0.0, %v3904
    %3906 = vdwg.mxu0
    %3907 = vmatpush.msra.mxu0 %v3851
    %3908 = vmatpush.msra.mxu0 %v3850
    %3909 = vmatpush.msra.mxu0 %v3849
    %3910 = vmatpush.msra.mxu0 %v3848
    %3911 = vmatpush.msra.mxu0 %v3847
    %3912 = vmatpush.msra.mxu0 %v3846
    %3913 = vmatpush.msra.mxu0 %v3845
    %3914 = vmatpush.msra.mxu0 %v3844
    %3915 = vmatpush.msra.mxu0 %v3843
    %3916 = vmatpush.msra.mxu0 %v3842
    %3917 = vmatpush.msra.mxu0 %v3841
    %3918 = vmatpush.msra.mxu0 %v3840
    %3919 = vmatpush.msra.mxu0 %v3839
    %3920 = vmatpush.msra.mxu0 %v3838
    %3921 = vmatpush.msra.mxu0 %v3837
    %3922 = vmatpush.msra.mxu0 %v3836
    %3923 = vmatmul.f32.gmra.mxu0 %v3818
    %v3924 = vpop.f32.mrf.mxu0
    %v3925 = vadd.f32 0.0, %v3924
    %3926 = vmatmul.f32.gmra.mxu0 %v3819
    %v3927 = vpop.f32.mrf.mxu0
    %v3928 = vadd.f32 0.0, %v3927
    %3929 = vdwg.mxu0
    %3930 = vmatpush.msra.mxu0 %v3867
    %3931 = vmatpush.msra.mxu0 %v3866
    %3932 = vmatpush.msra.mxu0 %v3865
    %3933 = vmatpush.msra.mxu0 %v3864
    %3934 = vmatpush.msra.mxu0 %v3863
    %3935 = vmatpush.msra.mxu0 %v3862
    %3936 = vmatpush.msra.mxu0 %v3861
    %3937 = vmatpush.msra.mxu0 %v3860
    %3938 = vmatpush.msra.mxu0 %v3859
    %3939 = vmatpush.msra.mxu0 %v3858
    %3940 = vmatpush.msra.mxu0 %v3857
    %3941 = vmatpush.msra.mxu0 %v3856
    %3942 = vmatpush.msra.mxu0 %v3855
    %3943 = vmatpush.msra.mxu0 %v3854
    %3944 = vmatpush.msra.mxu0 %v3853
    %3945 = vmatpush.msra.mxu0 %v3852
    %3946 = vmatmul.f32.gmra.mxu0 %v3818
    %v3947 = vpop.f32.mrf.mxu0
    %v3948 = vadd.f32 0.0, %v3947
    %3949 = vmatmul.f32.gmra.mxu0 %v3819
    %v3950 = vpop.f32.mrf.mxu0
    %v3951 = vadd.f32 0.0, %v3950
    %3952 = vdwg.mxu0
    %3953 = vmatpush.msra.mxu0 %v3883
    %3954 = vmatpush.msra.mxu0 %v3882
    %3955 = vmatpush.msra.mxu0 %v3881
    %3956 = vmatpush.msra.mxu0 %v3880
    %3957 = vmatpush.msra.mxu0 %v3879
    %3958 = vmatpush.msra.mxu0 %v3878
    %3959 = vmatpush.msra.mxu0 %v3877
    %3960 = vmatpush.msra.mxu0 %v3876
    %3961 = vmatpush.msra.mxu0 %v3875
    %3962 = vmatpush.msra.mxu0 %v3874
    %3963 = vmatpush.msra.mxu0 %v3873
    %3964 = vmatpush.msra.mxu0 %v3872
    %3965 = vmatpush.msra.mxu0 %v3871
    %3966 = vmatpush.msra.mxu0 %v3870
    %3967 = vmatpush.msra.mxu0 %v3869
    %3968 = vmatpush.msra.mxu0 %v3868
    %3969 = vmatmul.f32.gmra.mxu0 %v3818
    %v3970 = vpop.f32.mrf.mxu0
    %v3971 = vadd.f32 0.0, %v3970
    %3972 = vmatmul.f32.gmra.mxu0 %v3819
    %v3973 = vpop.f32.mrf.mxu0
    %v3974 = vadd.f32 0.0, %v3973
    %3975 = vdwg.mxu0
    %v3980 = vrot.slane %v3948, 1
    %v3981 = vrot.slane %v3948, 2
    %v3982 = vrot.slane %v3948, 3
    %v3983 = vrot.slane %v3948, 4
    %v3984 = vrot.slane %v3948, 5
    %v3985 = vrot.slane %v3948, 6
    %v3986 = vrot.slane %v3948, 7
    %v3987 = vrot.slane %v3951, 1
    %v3988 = vrot.slane %v3951, 2
    %v3989 = vrot.slane %v3951, 3
    %v3990 = vrot.slane %v3951, 4
    %v3991 = vrot.slane %v3951, 5
    %v3992 = vrot.slane %v3951, 6
    %v3993 = vrot.slane %v3951, 7
    %v3994 = vrot.slane %v3971, 1
    %v3995 = vrot.slane %v3971, 2
    %v3996 = vrot.slane %v3971, 3
    %v3997 = vrot.slane %v3971, 4
    %v3998 = vrot.slane %v3971, 5
    %v3999 = vrot.slane %v3971, 6
    %v4000 = vrot.slane %v3971, 7
    %v4001 = vrot.slane %v3974, 1
    %v4002 = vrot.slane %v3974, 2
    %v4003 = vrot.slane %v3974, 3
    %v4004 = vrot.slane %v3974, 4
    %v4005 = vrot.slane %v3974, 5
    %v4006 = vrot.slane %v3974, 6
    %v4007 = vrot.slane %v3974, 7
    %v4008 = vperm.slane %v3948, 0
    %v4009 = vperm.slane %v3980, 0
    %v4010 = vperm.slane %v3981, 0
    %v4011 = vperm.slane %v3982, 0
    %v4012 = vperm.slane %v3983, 0
    %v4013 = vperm.slane %v3984, 0
    %v4014 = vperm.slane %v3985, 0
    %v4015 = vperm.slane %v3986, 0
    %v4016 = vperm.slane %v3951, 0
    %v4017 = vperm.slane %v3987, 0
    %v4018 = vperm.slane %v3988, 0
    %v4019 = vperm.slane %v3989, 0
    %v4020 = vperm.slane %v3990, 0
    %v4021 = vperm.slane %v3991, 0
    %v4022 = vperm.slane %v3992, 0
    %v4023 = vperm.slane %v3993, 0
    %v4024 = vperm.slane %v3971, 0
    %v4025 = vperm.slane %v3994, 0
    %v4026 = vperm.slane %v3995, 0
    %v4027 = vperm.slane %v3996, 0
    %v4028 = vperm.slane %v3997, 0
    %v4029 = vperm.slane %v3998, 0
    %v4030 = vperm.slane %v3999, 0
    %v4031 = vperm.slane %v4000, 0
    %v4032 = vperm.slane %v3974, 0
    %v4033 = vperm.slane %v4001, 0
    %v4034 = vperm.slane %v4002, 0
    %v4035 = vperm.slane %v4003, 0
    %v4036 = vperm.slane %v4004, 0
    %v4037 = vperm.slane %v4005, 0
    %v4038 = vperm.slane %v4006, 0
    %v4039 = vperm.slane %v4007, 0
    %v4072 = vadd.f32 %v4008, %v3902
    %v4073 = vadd.f32 %v4008, %v3905
    %v4074 = vadd.f32 %v4009, %v3902
    %v4075 = vadd.f32 %v4009, %v3905
    %v4076 = vadd.f32 %v4010, %v3902
    %v4077 = vadd.f32 %v4010, %v3905
    %v4078 = vadd.f32 %v4011, %v3902
    %v4079 = vadd.f32 %v4011, %v3905
    %v4080 = vadd.f32 %v4012, %v3902
    %v4081 = vadd.f32 %v4012, %v3905
    %v4082 = vadd.f32 %v4013, %v3902
    %v4083 = vadd.f32 %v4013, %v3905
    %v4084 = vadd.f32 %v4014, %v3902
    %v4085 = vadd.f32 %v4014, %v3905
    %v4086 = vadd.f32 %v4015, %v3902
    %v4087 = vadd.f32 %v4015, %v3905
    %v4088 = vadd.f32 %v4016, %v3902
    %v4089 = vadd.f32 %v4016, %v3905
    %v4090 = vadd.f32 %v4017, %v3902
    %v4091 = vadd.f32 %v4017, %v3905
    %v4092 = vadd.f32 %v4018, %v3902
    %v4093 = vadd.f32 %v4018, %v3905
    %v4094 = vadd.f32 %v4019, %v3902
    %v4095 = vadd.f32 %v4019, %v3905
    %v4096 = vadd.f32 %v4020, %v3902
    %v4097 = vadd.f32 %v4020, %v3905
    %v4098 = vadd.f32 %v4021, %v3902
    %v4099 = vadd.f32 %v4021, %v3905
    %v4100 = vadd.f32 %v4022, %v3902
    %v4101 = vadd.f32 %v4022, %v3905
    %v4102 = vadd.f32 %v4023, %v3902
    %v4103 = vadd.f32 %v4023, %v3905
    %v4104 = vadd.f32 %v4024, %v3925
    %v4105 = vadd.f32 %v4024, %v3928
    %v4106 = vadd.f32 %v4025, %v3925
    %v4107 = vadd.f32 %v4025, %v3928
    %v4108 = vadd.f32 %v4026, %v3925
    %v4109 = vadd.f32 %v4026, %v3928
    %v4110 = vadd.f32 %v4027, %v3925
    %v4111 = vadd.f32 %v4027, %v3928
    %v4112 = vadd.f32 %v4028, %v3925
    %v4113 = vadd.f32 %v4028, %v3928
    %v4114 = vadd.f32 %v4029, %v3925
    %v4115 = vadd.f32 %v4029, %v3928
    %v4116 = vadd.f32 %v4030, %v3925
    %v4117 = vadd.f32 %v4030, %v3928
    %v4118 = vadd.f32 %v4031, %v3925
    %v4119 = vadd.f32 %v4031, %v3928
    %v4120 = vadd.f32 %v4032, %v3925
    %v4121 = vadd.f32 %v4032, %v3928
    %v4122 = vadd.f32 %v4033, %v3925
    %v4123 = vadd.f32 %v4033, %v3928
    %v4124 = vadd.f32 %v4034, %v3925
    %v4125 = vadd.f32 %v4034, %v3928
    %v4126 = vadd.f32 %v4035, %v3925
    %v4127 = vadd.f32 %v4035, %v3928
    %v4128 = vadd.f32 %v4036, %v3925
    %v4129 = vadd.f32 %v4036, %v3928
    %v4130 = vadd.f32 %v4037, %v3925
    %v4131 = vadd.f32 %v4037, %v3928
    %v4132 = vadd.f32 %v4038, %v3925
    %v4133 = vadd.f32 %v4038, %v3928
    %v4134 = vadd.f32 %v4039, %v3925
    %v4135 = vadd.f32 %v4039, %v3928
    %v4138 = vperm.slane %v66, 0
    %v4139 = vperm.slane %v67, 0
    %v4142 = vmul.f32 %v349, %v4138
    %v4143 = vmul.f32 %v354, %v4138
    %v4144 = vmul.f32 %v359, %v4138
    %v4145 = vmul.f32 %v364, %v4138
    %v4146 = vmul.f32 %v369, %v4138
    %v4147 = vmul.f32 %v374, %v4138
    %v4148 = vmul.f32 %v379, %v4138
    %v4149 = vmul.f32 %v384, %v4138
    %v4150 = vmul.f32 %v389, %v4138
    %v4151 = vmul.f32 %v394, %v4138
    %v4152 = vmul.f32 %v399, %v4138
    %v4153 = vmul.f32 %v404, %v4138
    %v4154 = vmul.f32 %v409, %v4138
    %v4155 = vmul.f32 %v414, %v4138
    %v4156 = vmul.f32 %v419, %v4138
    %v4157 = vmul.f32 %v424, %v4138
    %v4158 = vmul.f32 %v429, %v4138
    %v4159 = vmul.f32 %v434, %v4138
    %v4160 = vmul.f32 %v439, %v4138
    %v4161 = vmul.f32 %v444, %v4138
    %v4162 = vmul.f32 %v449, %v4138
    %v4163 = vmul.f32 %v454, %v4138
    %v4164 = vmul.f32 %v459, %v4138
    %v4165 = vmul.f32 %v464, %v4138
    %v4166 = vmul.f32 %v469, %v4138
    %v4167 = vmul.f32 %v474, %v4138
    %v4168 = vmul.f32 %v479, %v4138
    %v4169 = vmul.f32 %v484, %v4138
    %v4170 = vmul.f32 %v489, %v4138
    %v4171 = vmul.f32 %v494, %v4138
    %v4172 = vmul.f32 %v499, %v4138
    %v4173 = vmul.f32 %v504, %v4138
    %v4174 = vmul.f32 %v349, %v4139
    %v4175 = vmul.f32 %v354, %v4139
    %v4176 = vmul.f32 %v359, %v4139
    %v4177 = vmul.f32 %v364, %v4139
    %v4178 = vmul.f32 %v369, %v4139
    %v4179 = vmul.f32 %v374, %v4139
    %v4180 = vmul.f32 %v379, %v4139
    %v4181 = vmul.f32 %v384, %v4139
    %v4182 = vmul.f32 %v389, %v4139
    %v4183 = vmul.f32 %v394, %v4139
    %v4184 = vmul.f32 %v399, %v4139
    %v4185 = vmul.f32 %v404, %v4139
    %v4186 = vmul.f32 %v409, %v4139
    %v4187 = vmul.f32 %v414, %v4139
    %v4188 = vmul.f32 %v419, %v4139
    %v4189 = vmul.f32 %v424, %v4139
    %v4190 = vmul.f32 %v429, %v4139
    %v4191 = vmul.f32 %v434, %v4139
    %v4192 = vmul.f32 %v439, %v4139
    %v4193 = vmul.f32 %v444, %v4139
    %v4194 = vmul.f32 %v449, %v4139
    %v4195 = vmul.f32 %v454, %v4139
    %v4196 = vmul.f32 %v459, %v4139
    %v4197 = vmul.f32 %v464, %v4139
    %v4198 = vmul.f32 %v469, %v4139
    %v4199 = vmul.f32 %v474, %v4139
    %v4200 = vmul.f32 %v479, %v4139
    %v4201 = vmul.f32 %v484, %v4139
    %v4202 = vmul.f32 %v489, %v4139
    %v4203 = vmul.f32 %v494, %v4139
    %v4204 = vmul.f32 %v499, %v4139
    %v4205 = vmul.f32 %v504, %v4139
    %v4206 = vadd.f32 %v4072, %v4142
    %v4207 = vadd.f32 %v4073, %v4143
    %v4208 = vadd.f32 %v4074, %v4144
    %v4209 = vadd.f32 %v4075, %v4145
    %v4210 = vadd.f32 %v4076, %v4146
    %v4211 = vadd.f32 %v4077, %v4147
    %v4212 = vadd.f32 %v4078, %v4148
    %v4213 = vadd.f32 %v4079, %v4149
    %v4214 = vadd.f32 %v4080, %v4150
    %v4215 = vadd.f32 %v4081, %v4151
    %v4216 = vadd.f32 %v4082, %v4152
    %v4217 = vadd.f32 %v4083, %v4153
    %v4218 = vadd.f32 %v4084, %v4154
    %v4219 = vadd.f32 %v4085, %v4155
    %v4220 = vadd.f32 %v4086, %v4156
    %v4221 = vadd.f32 %v4087, %v4157
    %v4222 = vadd.f32 %v4088, %v4158
    %v4223 = vadd.f32 %v4089, %v4159
    %v4224 = vadd.f32 %v4090, %v4160
    %v4225 = vadd.f32 %v4091, %v4161
    %v4226 = vadd.f32 %v4092, %v4162
    %v4227 = vadd.f32 %v4093, %v4163
    %v4228 = vadd.f32 %v4094, %v4164
    %v4229 = vadd.f32 %v4095, %v4165
    %v4230 = vadd.f32 %v4096, %v4166
    %v4231 = vadd.f32 %v4097, %v4167
    %v4232 = vadd.f32 %v4098, %v4168
    %v4233 = vadd.f32 %v4099, %v4169
    %v4234 = vadd.f32 %v4100, %v4170
    %v4235 = vadd.f32 %v4101, %v4171
    %v4236 = vadd.f32 %v4102, %v4172
    %v4237 = vadd.f32 %v4103, %v4173
    %v4238 = vadd.f32 %v4104, %v4174
    %v4239 = vadd.f32 %v4105, %v4175
    %v4240 = vadd.f32 %v4106, %v4176
    %v4241 = vadd.f32 %v4107, %v4177
    %v4242 = vadd.f32 %v4108, %v4178
    %v4243 = vadd.f32 %v4109, %v4179
    %v4244 = vadd.f32 %v4110, %v4180
    %v4245 = vadd.f32 %v4111, %v4181
    %v4246 = vadd.f32 %v4112, %v4182
    %v4247 = vadd.f32 %v4113, %v4183
    %v4248 = vadd.f32 %v4114, %v4184
    %v4249 = vadd.f32 %v4115, %v4185
    %v4250 = vadd.f32 %v4116, %v4186
    %v4251 = vadd.f32 %v4117, %v4187
    %v4252 = vadd.f32 %v4118, %v4188
    %v4253 = vadd.f32 %v4119, %v4189
    %v4254 = vadd.f32 %v4120, %v4190
    %v4255 = vadd.f32 %v4121, %v4191
    %v4256 = vadd.f32 %v4122, %v4192
    %v4257 = vadd.f32 %v4123, %v4193
    %v4258 = vadd.f32 %v4124, %v4194
    %v4259 = vadd.f32 %v4125, %v4195
    %v4260 = vadd.f32 %v4126, %v4196
    %v4261 = vadd.f32 %v4127, %v4197
    %v4262 = vadd.f32 %v4128, %v4198
    %v4263 = vadd.f32 %v4129, %v4199
    %v4264 = vadd.f32 %v4130, %v4200
    %v4265 = vadd.f32 %v4131, %v4201
    %v4266 = vadd.f32 %v4132, %v4202
    %v4267 = vadd.f32 %v4133, %v4203
    %v4268 = vadd.f32 %v4134, %v4204
    %v4269 = vadd.f32 %v4135, %v4205
    %v4272 = vperm.slane %v68, 0
    %v4273 = vperm.slane %v69, 0
    %v4276 = vmul.f32 %v642, %v4272
    %v4277 = vmul.f32 %v646, %v4272
    %v4278 = vmul.f32 %v650, %v4272
    %v4279 = vmul.f32 %v654, %v4272
    %v4280 = vmul.f32 %v658, %v4272
    %v4281 = vmul.f32 %v662, %v4272
    %v4282 = vmul.f32 %v666, %v4272
    %v4283 = vmul.f32 %v670, %v4272
    %v4284 = vmul.f32 %v674, %v4272
    %v4285 = vmul.f32 %v678, %v4272
    %v4286 = vmul.f32 %v682, %v4272
    %v4287 = vmul.f32 %v686, %v4272
    %v4288 = vmul.f32 %v690, %v4272
    %v4289 = vmul.f32 %v694, %v4272
    %v4290 = vmul.f32 %v698, %v4272
    %v4291 = vmul.f32 %v702, %v4272
    %v4292 = vmul.f32 %v706, %v4272
    %v4293 = vmul.f32 %v710, %v4272
    %v4294 = vmul.f32 %v714, %v4272
    %v4295 = vmul.f32 %v718, %v4272
    %v4296 = vmul.f32 %v722, %v4272
    %v4297 = vmul.f32 %v726, %v4272
    %v4298 = vmul.f32 %v730, %v4272
    %v4299 = vmul.f32 %v734, %v4272
    %v4300 = vmul.f32 %v738, %v4272
    %v4301 = vmul.f32 %v742, %v4272
    %v4302 = vmul.f32 %v746, %v4272
    %v4303 = vmul.f32 %v750, %v4272
    %v4304 = vmul.f32 %v754, %v4272
    %v4305 = vmul.f32 %v758, %v4272
    %v4306 = vmul.f32 %v762, %v4272
    %v4307 = vmul.f32 %v766, %v4272
    %v4308 = vmul.f32 %v642, %v4273
    %v4309 = vmul.f32 %v646, %v4273
    %v4310 = vmul.f32 %v650, %v4273
    %v4311 = vmul.f32 %v654, %v4273
    %v4312 = vmul.f32 %v658, %v4273
    %v4313 = vmul.f32 %v662, %v4273
    %v4314 = vmul.f32 %v666, %v4273
    %v4315 = vmul.f32 %v670, %v4273
    %v4316 = vmul.f32 %v674, %v4273
    %v4317 = vmul.f32 %v678, %v4273
    %v4318 = vmul.f32 %v682, %v4273
    %v4319 = vmul.f32 %v686, %v4273
    %v4320 = vmul.f32 %v690, %v4273
    %v4321 = vmul.f32 %v694, %v4273
    %v4322 = vmul.f32 %v698, %v4273
    %v4323 = vmul.f32 %v702, %v4273
    %v4324 = vmul.f32 %v706, %v4273
    %v4325 = vmul.f32 %v710, %v4273
    %v4326 = vmul.f32 %v714, %v4273
    %v4327 = vmul.f32 %v718, %v4273
    %v4328 = vmul.f32 %v722, %v4273
    %v4329 = vmul.f32 %v726, %v4273
    %v4330 = vmul.f32 %v730, %v4273
    %v4331 = vmul.f32 %v734, %v4273
    %v4332 = vmul.f32 %v738, %v4273
    %v4333 = vmul.f32 %v742, %v4273
    %v4334 = vmul.f32 %v746, %v4273
    %v4335 = vmul.f32 %v750, %v4273
    %v4336 = vmul.f32 %v754, %v4273
    %v4337 = vmul.f32 %v758, %v4273
    %v4338 = vmul.f32 %v762, %v4273
    %v4339 = vmul.f32 %v766, %v4273
    %v4340 = vadd.f32 %v4206, %v4276
    %v4341 = vadd.f32 %v4207, %v4277
    %v4342 = vadd.f32 %v4208, %v4278
    %v4343 = vadd.f32 %v4209, %v4279
    %v4344 = vadd.f32 %v4210, %v4280
    %v4345 = vadd.f32 %v4211, %v4281
    %v4346 = vadd.f32 %v4212, %v4282
    %v4347 = vadd.f32 %v4213, %v4283
    %v4348 = vadd.f32 %v4214, %v4284
    %v4349 = vadd.f32 %v4215, %v4285
    %v4350 = vadd.f32 %v4216, %v4286
    %v4351 = vadd.f32 %v4217, %v4287
    %v4352 = vadd.f32 %v4218, %v4288
    %v4353 = vadd.f32 %v4219, %v4289
    %v4354 = vadd.f32 %v4220, %v4290
    %v4355 = vadd.f32 %v4221, %v4291
    %v4356 = vadd.f32 %v4222, %v4292
    %v4357 = vadd.f32 %v4223, %v4293
    %v4358 = vadd.f32 %v4224, %v4294
    %v4359 = vadd.f32 %v4225, %v4295
    %v4360 = vadd.f32 %v4226, %v4296
    %v4361 = vadd.f32 %v4227, %v4297
    %v4362 = vadd.f32 %v4228, %v4298
    %v4363 = vadd.f32 %v4229, %v4299
    %v4364 = vadd.f32 %v4230, %v4300
    %v4365 = vadd.f32 %v4231, %v4301
    %v4366 = vadd.f32 %v4232, %v4302
    %v4367 = vadd.f32 %v4233, %v4303
    %v4368 = vadd.f32 %v4234, %v4304
    %v4369 = vadd.f32 %v4235, %v4305
    %v4370 = vadd.f32 %v4236, %v4306
    %v4371 = vadd.f32 %v4237, %v4307
    %v4372 = vadd.f32 %v4238, %v4308
    %v4373 = vadd.f32 %v4239, %v4309
    %v4374 = vadd.f32 %v4240, %v4310
    %v4375 = vadd.f32 %v4241, %v4311
    %v4376 = vadd.f32 %v4242, %v4312
    %v4377 = vadd.f32 %v4243, %v4313
    %v4378 = vadd.f32 %v4244, %v4314
    %v4379 = vadd.f32 %v4245, %v4315
    %v4380 = vadd.f32 %v4246, %v4316
    %v4381 = vadd.f32 %v4247, %v4317
    %v4382 = vadd.f32 %v4248, %v4318
    %v4383 = vadd.f32 %v4249, %v4319
    %v4384 = vadd.f32 %v4250, %v4320
    %v4385 = vadd.f32 %v4251, %v4321
    %v4386 = vadd.f32 %v4252, %v4322
    %v4387 = vadd.f32 %v4253, %v4323
    %v4388 = vadd.f32 %v4254, %v4324
    %v4389 = vadd.f32 %v4255, %v4325
    %v4390 = vadd.f32 %v4256, %v4326
    %v4391 = vadd.f32 %v4257, %v4327
    %v4392 = vadd.f32 %v4258, %v4328
    %v4393 = vadd.f32 %v4259, %v4329
    %v4394 = vadd.f32 %v4260, %v4330
    %v4395 = vadd.f32 %v4261, %v4331
    %v4396 = vadd.f32 %v4262, %v4332
    %v4397 = vadd.f32 %v4263, %v4333
    %v4398 = vadd.f32 %v4264, %v4334
    %v4399 = vadd.f32 %v4265, %v4335
    %v4400 = vadd.f32 %v4266, %v4336
    %v4401 = vadd.f32 %v4267, %v4337
    %v4402 = vadd.f32 %v4268, %v4338
    %v4403 = vadd.f32 %v4269, %v4339
    %v4406 = vperm.slane %v70, 0
    %v4407 = vperm.slane %v71, 0
    %v4410 = vmul.f32 %v904, %v4406
    %v4411 = vmul.f32 %v908, %v4406
    %v4412 = vmul.f32 %v912, %v4406
    %v4413 = vmul.f32 %v916, %v4406
    %v4414 = vmul.f32 %v920, %v4406
    %v4415 = vmul.f32 %v924, %v4406
    %v4416 = vmul.f32 %v928, %v4406
    %v4417 = vmul.f32 %v932, %v4406
    %v4418 = vmul.f32 %v936, %v4406
    %v4419 = vmul.f32 %v940, %v4406
    %v4420 = vmul.f32 %v944, %v4406
    %v4421 = vmul.f32 %v948, %v4406
    %v4422 = vmul.f32 %v952, %v4406
    %v4423 = vmul.f32 %v956, %v4406
    %v4424 = vmul.f32 %v960, %v4406
    %v4425 = vmul.f32 %v964, %v4406
    %v4426 = vmul.f32 %v968, %v4406
    %v4427 = vmul.f32 %v972, %v4406
    %v4428 = vmul.f32 %v976, %v4406
    %v4429 = vmul.f32 %v980, %v4406
    %v4430 = vmul.f32 %v984, %v4406
    %v4431 = vmul.f32 %v988, %v4406
    %v4432 = vmul.f32 %v992, %v4406
    %v4433 = vmul.f32 %v996, %v4406
    %v4434 = vmul.f32 %v1000, %v4406
    %v4435 = vmul.f32 %v1004, %v4406
    %v4436 = vmul.f32 %v1008, %v4406
    %v4437 = vmul.f32 %v1012, %v4406
    %v4438 = vmul.f32 %v1016, %v4406
    %v4439 = vmul.f32 %v1020, %v4406
    %v4440 = vmul.f32 %v1024, %v4406
    %v4441 = vmul.f32 %v1028, %v4406
    %v4442 = vmul.f32 %v904, %v4407
    %v4443 = vmul.f32 %v908, %v4407
    %v4444 = vmul.f32 %v912, %v4407
    %v4445 = vmul.f32 %v916, %v4407
    %v4446 = vmul.f32 %v920, %v4407
    %v4447 = vmul.f32 %v924, %v4407
    %v4448 = vmul.f32 %v928, %v4407
    %v4449 = vmul.f32 %v932, %v4407
    %v4450 = vmul.f32 %v936, %v4407
    %v4451 = vmul.f32 %v940, %v4407
    %v4452 = vmul.f32 %v944, %v4407
    %v4453 = vmul.f32 %v948, %v4407
    %v4454 = vmul.f32 %v952, %v4407
    %v4455 = vmul.f32 %v956, %v4407
    %v4456 = vmul.f32 %v960, %v4407
    %v4457 = vmul.f32 %v964, %v4407
    %v4458 = vmul.f32 %v968, %v4407
    %v4459 = vmul.f32 %v972, %v4407
    %v4460 = vmul.f32 %v976, %v4407
    %v4461 = vmul.f32 %v980, %v4407
    %v4462 = vmul.f32 %v984, %v4407
    %v4463 = vmul.f32 %v988, %v4407
    %v4464 = vmul.f32 %v992, %v4407
    %v4465 = vmul.f32 %v996, %v4407
    %v4466 = vmul.f32 %v1000, %v4407
    %v4467 = vmul.f32 %v1004, %v4407
    %v4468 = vmul.f32 %v1008, %v4407
    %v4469 = vmul.f32 %v1012, %v4407
    %v4470 = vmul.f32 %v1016, %v4407
    %v4471 = vmul.f32 %v1020, %v4407
    %v4472 = vmul.f32 %v1024, %v4407
    %v4473 = vmul.f32 %v1028, %v4407
    %v4474 = vadd.f32 %v4340, %v4410
    %v4475 = vadd.f32 %v4341, %v4411
    %v4476 = vadd.f32 %v4342, %v4412
    %v4477 = vadd.f32 %v4343, %v4413
    %v4478 = vadd.f32 %v4344, %v4414
    %v4479 = vadd.f32 %v4345, %v4415
    %v4480 = vadd.f32 %v4346, %v4416
    %v4481 = vadd.f32 %v4347, %v4417
    %v4482 = vadd.f32 %v4348, %v4418
    %v4483 = vadd.f32 %v4349, %v4419
    %v4484 = vadd.f32 %v4350, %v4420
    %v4485 = vadd.f32 %v4351, %v4421
    %v4486 = vadd.f32 %v4352, %v4422
    %v4487 = vadd.f32 %v4353, %v4423
    %v4488 = vadd.f32 %v4354, %v4424
    %v4489 = vadd.f32 %v4355, %v4425
    %v4490 = vadd.f32 %v4356, %v4426
    %v4491 = vadd.f32 %v4357, %v4427
    %v4492 = vadd.f32 %v4358, %v4428
    %v4493 = vadd.f32 %v4359, %v4429
    %v4494 = vadd.f32 %v4360, %v4430
    %v4495 = vadd.f32 %v4361, %v4431
    %v4496 = vadd.f32 %v4362, %v4432
    %v4497 = vadd.f32 %v4363, %v4433
    %v4498 = vadd.f32 %v4364, %v4434
    %v4499 = vadd.f32 %v4365, %v4435
    %v4500 = vadd.f32 %v4366, %v4436
    %v4501 = vadd.f32 %v4367, %v4437
    %v4502 = vadd.f32 %v4368, %v4438
    %v4503 = vadd.f32 %v4369, %v4439
    %v4504 = vadd.f32 %v4370, %v4440
    %v4505 = vadd.f32 %v4371, %v4441
    %v4506 = vadd.f32 %v4372, %v4442
    %v4507 = vadd.f32 %v4373, %v4443
    %v4508 = vadd.f32 %v4374, %v4444
    %v4509 = vadd.f32 %v4375, %v4445
    %v4510 = vadd.f32 %v4376, %v4446
    %v4511 = vadd.f32 %v4377, %v4447
    %v4512 = vadd.f32 %v4378, %v4448
    %v4513 = vadd.f32 %v4379, %v4449
    %v4514 = vadd.f32 %v4380, %v4450
    %v4515 = vadd.f32 %v4381, %v4451
    %v4516 = vadd.f32 %v4382, %v4452
    %v4517 = vadd.f32 %v4383, %v4453
    %v4518 = vadd.f32 %v4384, %v4454
    %v4519 = vadd.f32 %v4385, %v4455
    %v4520 = vadd.f32 %v4386, %v4456
    %v4521 = vadd.f32 %v4387, %v4457
    %v4522 = vadd.f32 %v4388, %v4458
    %v4523 = vadd.f32 %v4389, %v4459
    %v4524 = vadd.f32 %v4390, %v4460
    %v4525 = vadd.f32 %v4391, %v4461
    %v4526 = vadd.f32 %v4392, %v4462
    %v4527 = vadd.f32 %v4393, %v4463
    %v4528 = vadd.f32 %v4394, %v4464
    %v4529 = vadd.f32 %v4395, %v4465
    %v4530 = vadd.f32 %v4396, %v4466
    %v4531 = vadd.f32 %v4397, %v4467
    %v4532 = vadd.f32 %v4398, %v4468
    %v4533 = vadd.f32 %v4399, %v4469
    %v4534 = vadd.f32 %v4400, %v4470
    %v4535 = vadd.f32 %v4401, %v4471
    %v4536 = vadd.f32 %v4402, %v4472
    %v4537 = vadd.f32 %v4403, %v4473
    %vm4538 = vcmp.gt.f32.partialorder %v4474, 0.0
    %vm4539 = vcmp.gt.f32.partialorder %v4475, 0.0
    %vm4540 = vcmp.gt.f32.partialorder %v4476, 0.0
    %vm4541 = vcmp.gt.f32.partialorder %v4477, 0.0
    %vm4542 = vcmp.gt.f32.partialorder %v4478, 0.0
    %vm4543 = vcmp.gt.f32.partialorder %v4479, 0.0
    %vm4544 = vcmp.gt.f32.partialorder %v4480, 0.0
    %vm4545 = vcmp.gt.f32.partialorder %v4481, 0.0
    %vm4546 = vcmp.gt.f32.partialorder %v4482, 0.0
    %vm4547 = vcmp.gt.f32.partialorder %v4483, 0.0
    %vm4548 = vcmp.gt.f32.partialorder %v4484, 0.0
    %vm4549 = vcmp.gt.f32.partialorder %v4485, 0.0
    %vm4550 = vcmp.gt.f32.partialorder %v4486, 0.0
    %vm4551 = vcmp.gt.f32.partialorder %v4487, 0.0
    %vm4552 = vcmp.gt.f32.partialorder %v4488, 0.0
    %vm4553 = vcmp.gt.f32.partialorder %v4489, 0.0
    %vm4554 = vcmp.gt.f32.partialorder %v4490, 0.0
    %vm4555 = vcmp.gt.f32.partialorder %v4491, 0.0
    %vm4556 = vcmp.gt.f32.partialorder %v4492, 0.0
    %vm4557 = vcmp.gt.f32.partialorder %v4493, 0.0
    %vm4558 = vcmp.gt.f32.partialorder %v4494, 0.0
    %vm4559 = vcmp.gt.f32.partialorder %v4495, 0.0
    %vm4560 = vcmp.gt.f32.partialorder %v4496, 0.0
    %vm4561 = vcmp.gt.f32.partialorder %v4497, 0.0
    %vm4562 = vcmp.gt.f32.partialorder %v4498, 0.0
    %vm4563 = vcmp.gt.f32.partialorder %v4499, 0.0
    %vm4564 = vcmp.gt.f32.partialorder %v4500, 0.0
    %vm4565 = vcmp.gt.f32.partialorder %v4501, 0.0
    %vm4566 = vcmp.gt.f32.partialorder %v4502, 0.0
    %vm4567 = vcmp.gt.f32.partialorder %v4503, 0.0
    %vm4568 = vcmp.gt.f32.partialorder %v4504, 0.0
    %vm4569 = vcmp.gt.f32.partialorder %v4505, 0.0
    %vm4570 = vcmp.gt.f32.partialorder %v4506, 0.0
    %vm4571 = vcmp.gt.f32.partialorder %v4507, 0.0
    %vm4572 = vcmp.gt.f32.partialorder %v4508, 0.0
    %vm4573 = vcmp.gt.f32.partialorder %v4509, 0.0
    %vm4574 = vcmp.gt.f32.partialorder %v4510, 0.0
    %vm4575 = vcmp.gt.f32.partialorder %v4511, 0.0
    %vm4576 = vcmp.gt.f32.partialorder %v4512, 0.0
    %vm4577 = vcmp.gt.f32.partialorder %v4513, 0.0
    %vm4578 = vcmp.gt.f32.partialorder %v4514, 0.0
    %vm4579 = vcmp.gt.f32.partialorder %v4515, 0.0
    %vm4580 = vcmp.gt.f32.partialorder %v4516, 0.0
    %vm4581 = vcmp.gt.f32.partialorder %v4517, 0.0
    %vm4582 = vcmp.gt.f32.partialorder %v4518, 0.0
    %vm4583 = vcmp.gt.f32.partialorder %v4519, 0.0
    %vm4584 = vcmp.gt.f32.partialorder %v4520, 0.0
    %vm4585 = vcmp.gt.f32.partialorder %v4521, 0.0
    %vm4586 = vcmp.gt.f32.partialorder %v4522, 0.0
    %vm4587 = vcmp.gt.f32.partialorder %v4523, 0.0
    %vm4588 = vcmp.gt.f32.partialorder %v4524, 0.0
    %vm4589 = vcmp.gt.f32.partialorder %v4525, 0.0
    %vm4590 = vcmp.gt.f32.partialorder %v4526, 0.0
    %vm4591 = vcmp.gt.f32.partialorder %v4527, 0.0
    %vm4592 = vcmp.gt.f32.partialorder %v4528, 0.0
    %vm4593 = vcmp.gt.f32.partialorder %v4529, 0.0
    %vm4594 = vcmp.gt.f32.partialorder %v4530, 0.0
    %vm4595 = vcmp.gt.f32.partialorder %v4531, 0.0
    %vm4596 = vcmp.gt.f32.partialorder %v4532, 0.0
    %vm4597 = vcmp.gt.f32.partialorder %v4533, 0.0
    %vm4598 = vcmp.gt.f32.partialorder %v4534, 0.0
    %vm4599 = vcmp.gt.f32.partialorder %v4535, 0.0
    %vm4600 = vcmp.gt.f32.partialorder %v4536, 0.0
    %vm4601 = vcmp.gt.f32.partialorder %v4537, 0.0
    %v4602 = vmul.f32 %v4474, 0.2
    %v4603 = vmul.f32 %v4475, 0.2
    %v4604 = vmul.f32 %v4476, 0.2
    %v4605 = vmul.f32 %v4477, 0.2
    %v4606 = vmul.f32 %v4478, 0.2
    %v4607 = vmul.f32 %v4479, 0.2
    %v4608 = vmul.f32 %v4480, 0.2
    %v4609 = vmul.f32 %v4481, 0.2
    %v4610 = vmul.f32 %v4482, 0.2
    %v4611 = vmul.f32 %v4483, 0.2
    %v4612 = vmul.f32 %v4484, 0.2
    %v4613 = vmul.f32 %v4485, 0.2
    %v4614 = vmul.f32 %v4486, 0.2
    %v4615 = vmul.f32 %v4487, 0.2
    %v4616 = vmul.f32 %v4488, 0.2
    %v4617 = vmul.f32 %v4489, 0.2
    %v4618 = vmul.f32 %v4490, 0.2
    %v4619 = vmul.f32 %v4491, 0.2
    %v4620 = vmul.f32 %v4492, 0.2
    %v4621 = vmul.f32 %v4493, 0.2
    %v4622 = vmul.f32 %v4494, 0.2
    %v4623 = vmul.f32 %v4495, 0.2
    %v4624 = vmul.f32 %v4496, 0.2
    %v4625 = vmul.f32 %v4497, 0.2
    %v4626 = vmul.f32 %v4498, 0.2
    %v4627 = vmul.f32 %v4499, 0.2
    %v4628 = vmul.f32 %v4500, 0.2
    %v4629 = vmul.f32 %v4501, 0.2
    %v4630 = vmul.f32 %v4502, 0.2
    %v4631 = vmul.f32 %v4503, 0.2
    %v4632 = vmul.f32 %v4504, 0.2
    %v4633 = vmul.f32 %v4505, 0.2
    %v4634 = vmul.f32 %v4506, 0.2
    %v4635 = vmul.f32 %v4507, 0.2
    %v4636 = vmul.f32 %v4508, 0.2
    %v4637 = vmul.f32 %v4509, 0.2
    %v4638 = vmul.f32 %v4510, 0.2
    %v4639 = vmul.f32 %v4511, 0.2
    %v4640 = vmul.f32 %v4512, 0.2
    %v4641 = vmul.f32 %v4513, 0.2
    %v4642 = vmul.f32 %v4514, 0.2
    %v4643 = vmul.f32 %v4515, 0.2
    %v4644 = vmul.f32 %v4516, 0.2
    %v4645 = vmul.f32 %v4517, 0.2
    %v4646 = vmul.f32 %v4518, 0.2
    %v4647 = vmul.f32 %v4519, 0.2
    %v4648 = vmul.f32 %v4520, 0.2
    %v4649 = vmul.f32 %v4521, 0.2
    %v4650 = vmul.f32 %v4522, 0.2
    %v4651 = vmul.f32 %v4523, 0.2
    %v4652 = vmul.f32 %v4524, 0.2
    %v4653 = vmul.f32 %v4525, 0.2
    %v4654 = vmul.f32 %v4526, 0.2
    %v4655 = vmul.f32 %v4527, 0.2
    %v4656 = vmul.f32 %v4528, 0.2
    %v4657 = vmul.f32 %v4529, 0.2
    %v4658 = vmul.f32 %v4530, 0.2
    %v4659 = vmul.f32 %v4531, 0.2
    %v4660 = vmul.f32 %v4532, 0.2
    %v4661 = vmul.f32 %v4533, 0.2
    %v4662 = vmul.f32 %v4534, 0.2
    %v4663 = vmul.f32 %v4535, 0.2
    %v4664 = vmul.f32 %v4536, 0.2
    %v4665 = vmul.f32 %v4537, 0.2
    %v4666 = vsel %vm4538, %v4474, %v4602
    %v4667 = vsel %vm4539, %v4475, %v4603
    %v4668 = vsel %vm4540, %v4476, %v4604
    %v4669 = vsel %vm4541, %v4477, %v4605
    %v4670 = vsel %vm4542, %v4478, %v4606
    %v4671 = vsel %vm4543, %v4479, %v4607
    %v4672 = vsel %vm4544, %v4480, %v4608
    %v4673 = vsel %vm4545, %v4481, %v4609
    %v4674 = vsel %vm4546, %v4482, %v4610
    %v4675 = vsel %vm4547, %v4483, %v4611
    %v4676 = vsel %vm4548, %v4484, %v4612
    %v4677 = vsel %vm4549, %v4485, %v4613
    %v4678 = vsel %vm4550, %v4486, %v4614
    %v4679 = vsel %vm4551, %v4487, %v4615
    %v4680 = vsel %vm4552, %v4488, %v4616
    %v4681 = vsel %vm4553, %v4489, %v4617
    %v4682 = vsel %vm4554, %v4490, %v4618
    %v4683 = vsel %vm4555, %v4491, %v4619
    %v4684 = vsel %vm4556, %v4492, %v4620
    %v4685 = vsel %vm4557, %v4493, %v4621
    %v4686 = vsel %vm4558, %v4494, %v4622
    %v4687 = vsel %vm4559, %v4495, %v4623
    %v4688 = vsel %vm4560, %v4496, %v4624
    %v4689 = vsel %vm4561, %v4497, %v4625
    %v4690 = vsel %vm4562, %v4498, %v4626
    %v4691 = vsel %vm4563, %v4499, %v4627
    %v4692 = vsel %vm4564, %v4500, %v4628
    %v4693 = vsel %vm4565, %v4501, %v4629
    %v4694 = vsel %vm4566, %v4502, %v4630
    %v4695 = vsel %vm4567, %v4503, %v4631
    %v4696 = vsel %vm4568, %v4504, %v4632
    %v4697 = vsel %vm4569, %v4505, %v4633
    %v4698 = vsel %vm4570, %v4506, %v4634
    %v4699 = vsel %vm4571, %v4507, %v4635
    %v4700 = vsel %vm4572, %v4508, %v4636
    %v4701 = vsel %vm4573, %v4509, %v4637
    %v4702 = vsel %vm4574, %v4510, %v4638
    %v4703 = vsel %vm4575, %v4511, %v4639
    %v4704 = vsel %vm4576, %v4512, %v4640
    %v4705 = vsel %vm4577, %v4513, %v4641
    %v4706 = vsel %vm4578, %v4514, %v4642
    %v4707 = vsel %vm4579, %v4515, %v4643
    %v4708 = vsel %vm4580, %v4516, %v4644
    %v4709 = vsel %vm4581, %v4517, %v4645
    %v4710 = vsel %vm4582, %v4518, %v4646
    %v4711 = vsel %vm4583, %v4519, %v4647
    %v4712 = vsel %vm4584, %v4520, %v4648
    %v4713 = vsel %vm4585, %v4521, %v4649
    %v4714 = vsel %vm4586, %v4522, %v4650
    %v4715 = vsel %vm4587, %v4523, %v4651
    %v4716 = vsel %vm4588, %v4524, %v4652
    %v4717 = vsel %vm4589, %v4525, %v4653
    %v4718 = vsel %vm4590, %v4526, %v4654
    %v4719 = vsel %vm4591, %v4527, %v4655
    %v4720 = vsel %vm4592, %v4528, %v4656
    %v4721 = vsel %vm4593, %v4529, %v4657
    %v4722 = vsel %vm4594, %v4530, %v4658
    %v4723 = vsel %vm4595, %v4531, %v4659
    %v4724 = vsel %vm4596, %v4532, %v4660
    %v4725 = vsel %vm4597, %v4533, %v4661
    %v4726 = vsel %vm4598, %v4534, %v4662
    %v4727 = vsel %vm4599, %v4535, %v4663
    %v4728 = vsel %vm4600, %v4536, %v4664
    %v4729 = vsel %vm4601, %v4537, %v4665
    %v4732 = vperm.slane %v72, 0
    %v4733 = vperm.slane %v73, 0
    %v4736 = vmul.f32 %v4666, %v4732
    %v4737 = vmul.f32 %v4667, %v4732
    %v4738 = vmul.f32 %v4668, %v4732
    %v4739 = vmul.f32 %v4669, %v4732
    %v4740 = vmul.f32 %v4670, %v4732
    %v4741 = vmul.f32 %v4671, %v4732
    %v4742 = vmul.f32 %v4672, %v4732
    %v4743 = vmul.f32 %v4673, %v4732
    %v4744 = vmul.f32 %v4674, %v4732
    %v4745 = vmul.f32 %v4675, %v4732
    %v4746 = vmul.f32 %v4676, %v4732
    %v4747 = vmul.f32 %v4677, %v4732
    %v4748 = vmul.f32 %v4678, %v4732
    %v4749 = vmul.f32 %v4679, %v4732
    %v4750 = vmul.f32 %v4680, %v4732
    %v4751 = vmul.f32 %v4681, %v4732
    %v4752 = vmul.f32 %v4682, %v4732
    %v4753 = vmul.f32 %v4683, %v4732
    %v4754 = vmul.f32 %v4684, %v4732
    %v4755 = vmul.f32 %v4685, %v4732
    %v4756 = vmul.f32 %v4686, %v4732
    %v4757 = vmul.f32 %v4687, %v4732
    %v4758 = vmul.f32 %v4688, %v4732
    %v4759 = vmul.f32 %v4689, %v4732
    %v4760 = vmul.f32 %v4690, %v4732
    %v4761 = vmul.f32 %v4691, %v4732
    %v4762 = vmul.f32 %v4692, %v4732
    %v4763 = vmul.f32 %v4693, %v4732
    %v4764 = vmul.f32 %v4694, %v4732
    %v4765 = vmul.f32 %v4695, %v4732
    %v4766 = vmul.f32 %v4696, %v4732
    %v4767 = vmul.f32 %v4697, %v4732
    %v4768 = vmul.f32 %v4698, %v4733
    %v4769 = vmul.f32 %v4699, %v4733
    %v4770 = vmul.f32 %v4700, %v4733
    %v4771 = vmul.f32 %v4701, %v4733
    %v4772 = vmul.f32 %v4702, %v4733
    %v4773 = vmul.f32 %v4703, %v4733
    %v4774 = vmul.f32 %v4704, %v4733
    %v4775 = vmul.f32 %v4705, %v4733
    %v4776 = vmul.f32 %v4706, %v4733
    %v4777 = vmul.f32 %v4707, %v4733
    %v4778 = vmul.f32 %v4708, %v4733
    %v4779 = vmul.f32 %v4709, %v4733
    %v4780 = vmul.f32 %v4710, %v4733
    %v4781 = vmul.f32 %v4711, %v4733
    %v4782 = vmul.f32 %v4712, %v4733
    %v4783 = vmul.f32 %v4713, %v4733
    %v4784 = vmul.f32 %v4714, %v4733
    %v4785 = vmul.f32 %v4715, %v4733
    %v4786 = vmul.f32 %v4716, %v4733
    %v4787 = vmul.f32 %v4717, %v4733
    %v4788 = vmul.f32 %v4718, %v4733
    %v4789 = vmul.f32 %v4719, %v4733
    %v4790 = vmul.f32 %v4720, %v4733
    %v4791 = vmul.f32 %v4721, %v4733
    %v4792 = vmul.f32 %v4722, %v4733
    %v4793 = vmul.f32 %v4723, %v4733
    %v4794 = vmul.f32 %v4724, %v4733
    %v4795 = vmul.f32 %v4725, %v4733
    %v4796 = vmul.f32 %v4726, %v4733
    %v4797 = vmul.f32 %v4727, %v4733
    %v4798 = vmul.f32 %v4728, %v4733
    %v4799 = vmul.f32 %v4729, %v4733
    %4800 = vadd.xlane.f32.xlu0 %v4736
    %v4801 = vpop.xlane.xlu0 %4800
    %4802 = vadd.xlane.f32.xlu0 %v4737
    %v4803 = vpop.xlane.xlu0 %4802
    %4804 = vadd.xlane.f32.xlu0 %v4738
    %v4805 = vpop.xlane.xlu0 %4804
    %4806 = vadd.xlane.f32.xlu0 %v4739
    %v4807 = vpop.xlane.xlu0 %4806
    %4808 = vadd.xlane.f32.xlu0 %v4740
    %v4809 = vpop.xlane.xlu0 %4808
    %4810 = vadd.xlane.f32.xlu0 %v4741
    %v4811 = vpop.xlane.xlu0 %4810
    %4812 = vadd.xlane.f32.xlu0 %v4742
    %v4813 = vpop.xlane.xlu0 %4812
    %4814 = vadd.xlane.f32.xlu0 %v4743
    %v4815 = vpop.xlane.xlu0 %4814
    %4816 = vadd.xlane.f32.xlu0 %v4744
    %v4817 = vpop.xlane.xlu0 %4816
    %4818 = vadd.xlane.f32.xlu0 %v4745
    %v4819 = vpop.xlane.xlu0 %4818
    %4820 = vadd.xlane.f32.xlu0 %v4746
    %v4821 = vpop.xlane.xlu0 %4820
    %4822 = vadd.xlane.f32.xlu0 %v4747
    %v4823 = vpop.xlane.xlu0 %4822
    %4824 = vadd.xlane.f32.xlu0 %v4748
    %v4825 = vpop.xlane.xlu0 %4824
    %4826 = vadd.xlane.f32.xlu0 %v4749
    %v4827 = vpop.xlane.xlu0 %4826
    %4828 = vadd.xlane.f32.xlu0 %v4750
    %v4829 = vpop.xlane.xlu0 %4828
    %4830 = vadd.xlane.f32.xlu0 %v4751
    %v4831 = vpop.xlane.xlu0 %4830
    %4832 = vadd.xlane.f32.xlu0 %v4752
    %v4833 = vpop.xlane.xlu0 %4832
    %4834 = vadd.xlane.f32.xlu0 %v4753
    %v4835 = vpop.xlane.xlu0 %4834
    %4836 = vadd.xlane.f32.xlu0 %v4754
    %v4837 = vpop.xlane.xlu0 %4836
    %4838 = vadd.xlane.f32.xlu0 %v4755
    %v4839 = vpop.xlane.xlu0 %4838
    %4840 = vadd.xlane.f32.xlu0 %v4756
    %v4841 = vpop.xlane.xlu0 %4840
    %4842 = vadd.xlane.f32.xlu0 %v4757
    %v4843 = vpop.xlane.xlu0 %4842
    %4844 = vadd.xlane.f32.xlu0 %v4758
    %v4845 = vpop.xlane.xlu0 %4844
    %4846 = vadd.xlane.f32.xlu0 %v4759
    %v4847 = vpop.xlane.xlu0 %4846
    %4848 = vadd.xlane.f32.xlu0 %v4760
    %v4849 = vpop.xlane.xlu0 %4848
    %4850 = vadd.xlane.f32.xlu0 %v4761
    %v4851 = vpop.xlane.xlu0 %4850
    %4852 = vadd.xlane.f32.xlu0 %v4762
    %v4853 = vpop.xlane.xlu0 %4852
    %4854 = vadd.xlane.f32.xlu0 %v4763
    %v4855 = vpop.xlane.xlu0 %4854
    %4856 = vadd.xlane.f32.xlu0 %v4764
    %v4857 = vpop.xlane.xlu0 %4856
    %4858 = vadd.xlane.f32.xlu0 %v4765
    %v4859 = vpop.xlane.xlu0 %4858
    %4860 = vadd.xlane.f32.xlu0 %v4766
    %v4861 = vpop.xlane.xlu0 %4860
    %4862 = vadd.xlane.f32.xlu0 %v4767
    %v4863 = vpop.xlane.xlu0 %4862
    %4864 = vadd.xlane.f32.xlu0 %v4768
    %v4865 = vpop.xlane.xlu0 %4864
    %4866 = vadd.xlane.f32.xlu0 %v4769
    %v4867 = vpop.xlane.xlu0 %4866
    %4868 = vadd.xlane.f32.xlu0 %v4770
    %v4869 = vpop.xlane.xlu0 %4868
    %4870 = vadd.xlane.f32.xlu0 %v4771
    %v4871 = vpop.xlane.xlu0 %4870
    %4872 = vadd.xlane.f32.xlu0 %v4772
    %v4873 = vpop.xlane.xlu0 %4872
    %4874 = vadd.xlane.f32.xlu0 %v4773
    %v4875 = vpop.xlane.xlu0 %4874
    %4876 = vadd.xlane.f32.xlu0 %v4774
    %v4877 = vpop.xlane.xlu0 %4876
    %4878 = vadd.xlane.f32.xlu0 %v4775
    %v4879 = vpop.xlane.xlu0 %4878
    %4880 = vadd.xlane.f32.xlu0 %v4776
    %v4881 = vpop.xlane.xlu0 %4880
    %4882 = vadd.xlane.f32.xlu0 %v4777
    %v4883 = vpop.xlane.xlu0 %4882
    %4884 = vadd.xlane.f32.xlu0 %v4778
    %v4885 = vpop.xlane.xlu0 %4884
    %4886 = vadd.xlane.f32.xlu0 %v4779
    %v4887 = vpop.xlane.xlu0 %4886
    %4888 = vadd.xlane.f32.xlu0 %v4780
    %v4889 = vpop.xlane.xlu0 %4888
    %4890 = vadd.xlane.f32.xlu0 %v4781
    %v4891 = vpop.xlane.xlu0 %4890
    %4892 = vadd.xlane.f32.xlu0 %v4782
    %v4893 = vpop.xlane.xlu0 %4892
    %4894 = vadd.xlane.f32.xlu0 %v4783
    %v4895 = vpop.xlane.xlu0 %4894
    %4896 = vadd.xlane.f32.xlu0 %v4784
    %v4897 = vpop.xlane.xlu0 %4896
    %4898 = vadd.xlane.f32.xlu0 %v4785
    %v4899 = vpop.xlane.xlu0 %4898
    %4900 = vadd.xlane.f32.xlu0 %v4786
    %v4901 = vpop.xlane.xlu0 %4900
    %4902 = vadd.xlane.f32.xlu0 %v4787
    %v4903 = vpop.xlane.xlu0 %4902
    %4904 = vadd.xlane.f32.xlu0 %v4788
    %v4905 = vpop.xlane.xlu0 %4904
    %4906 = vadd.xlane.f32.xlu0 %v4789
    %v4907 = vpop.xlane.xlu0 %4906
    %4908 = vadd.xlane.f32.xlu0 %v4790
    %v4909 = vpop.xlane.xlu0 %4908
    %4910 = vadd.xlane.f32.xlu0 %v4791
    %v4911 = vpop.xlane.xlu0 %4910
    %4912 = vadd.xlane.f32.xlu0 %v4792
    %v4913 = vpop.xlane.xlu0 %4912
    %4914 = vadd.xlane.f32.xlu0 %v4793
    %v4915 = vpop.xlane.xlu0 %4914
    %4916 = vadd.xlane.f32.xlu0 %v4794
    %v4917 = vpop.xlane.xlu0 %4916
    %4918 = vadd.xlane.f32.xlu0 %v4795
    %v4919 = vpop.xlane.xlu0 %4918
    %4920 = vadd.xlane.f32.xlu0 %v4796
    %v4921 = vpop.xlane.xlu0 %4920
    %4922 = vadd.xlane.f32.xlu0 %v4797
    %v4923 = vpop.xlane.xlu0 %4922
    %4924 = vadd.xlane.f32.xlu0 %v4798
    %v4925 = vpop.xlane.xlu0 %4924
    %4926 = vadd.xlane.f32.xlu0 %v4799
    %v4927 = vpop.xlane.xlu0 %4926
    %v4928 = vadd.f32 %v4801, %v1562
    %v4929 = vadd.f32 %v4803, %v1568
    %v4930 = vadd.f32 %v4805, %v1575
    %v4931 = vadd.f32 %v4807, %v1581
    %v4932 = vadd.f32 %v4809, %v1588
    %v4933 = vadd.f32 %v4811, %v1594
    %v4934 = vadd.f32 %v4813, %v1601
    %v4935 = vadd.f32 %v4815, %v1607
    %v4936 = vadd.f32 %v4817, %v1614
    %v4937 = vadd.f32 %v4819, %v1620
    %v4938 = vadd.f32 %v4821, %v1627
    %v4939 = vadd.f32 %v4823, %v1633
    %v4940 = vadd.f32 %v4825, %v1640
    %v4941 = vadd.f32 %v4827, %v1646
    %v4942 = vadd.f32 %v4829, %v1653
    %v4943 = vadd.f32 %v4831, %v1659
    %v4944 = vadd.f32 %v4833, %v1666
    %v4945 = vadd.f32 %v4835, %v1672
    %v4946 = vadd.f32 %v4837, %v1679
    %v4947 = vadd.f32 %v4839, %v1685
    %v4948 = vadd.f32 %v4841, %v1692
    %v4949 = vadd.f32 %v4843, %v1698
    %v4950 = vadd.f32 %v4845, %v1705
    %v4951 = vadd.f32 %v4847, %v1711
    %v4952 = vadd.f32 %v4849, %v1718
    %v4953 = vadd.f32 %v4851, %v1724
    %v4954 = vadd.f32 %v4853, %v1731
    %v4955 = vadd.f32 %v4855, %v1737
    %v4956 = vadd.f32 %v4857, %v1744
    %v4957 = vadd.f32 %v4859, %v1750
    %v4958 = vadd.f32 %v4861, %v1757
    %v4959 = vadd.f32 %v4863, %v1763
    %v4960 = vadd.f32 %v4865, %v1562
    %v4961 = vadd.f32 %v4867, %v1568
    %v4962 = vadd.f32 %v4869, %v1575
    %v4963 = vadd.f32 %v4871, %v1581
    %v4964 = vadd.f32 %v4873, %v1588
    %v4965 = vadd.f32 %v4875, %v1594
    %v4966 = vadd.f32 %v4877, %v1601
    %v4967 = vadd.f32 %v4879, %v1607
    %v4968 = vadd.f32 %v4881, %v1614
    %v4969 = vadd.f32 %v4883, %v1620
    %v4970 = vadd.f32 %v4885, %v1627
    %v4971 = vadd.f32 %v4887, %v1633
    %v4972 = vadd.f32 %v4889, %v1640
    %v4973 = vadd.f32 %v4891, %v1646
    %v4974 = vadd.f32 %v4893, %v1653
    %v4975 = vadd.f32 %v4895, %v1659
    %v4976 = vadd.f32 %v4897, %v1666
    %v4977 = vadd.f32 %v4899, %v1672
    %v4978 = vadd.f32 %v4901, %v1679
    %v4979 = vadd.f32 %v4903, %v1685
    %v4980 = vadd.f32 %v4905, %v1692
    %v4981 = vadd.f32 %v4907, %v1698
    %v4982 = vadd.f32 %v4909, %v1705
    %v4983 = vadd.f32 %v4911, %v1711
    %v4984 = vadd.f32 %v4913, %v1718
    %v4985 = vadd.f32 %v4915, %v1724
    %v4986 = vadd.f32 %v4917, %v1731
    %v4987 = vadd.f32 %v4919, %v1737
    %v4988 = vadd.f32 %v4921, %v1744
    %v4989 = vadd.f32 %v4923, %v1750
    %v4990 = vadd.f32 %v4925, %v1757
    %v4991 = vadd.f32 %v4927, %v1763
    %5056 = vset.pattern.permute.xlu0 0
    %5057 = vperm.xlu0 %5056, %v4928
    %v5058 = vpop.permute.xlu0 %5057
    %5059 = vset.pattern.permute.xlu0 0
    %5060 = vperm.xlu0 %5059, %v4929
    %v5061 = vpop.permute.xlu0 %5060
    %5062 = vset.pattern.permute.xlu0 0
    %5063 = vperm.xlu0 %5062, %v4930
    %v5064 = vpop.permute.xlu0 %5063
    %5065 = vset.pattern.permute.xlu0 0
    %5066 = vperm.xlu0 %5065, %v4931
    %v5067 = vpop.permute.xlu0 %5066
    %5068 = vset.pattern.permute.xlu0 0
    %5069 = vperm.xlu0 %5068, %v4932
    %v5070 = vpop.permute.xlu0 %5069
    %5071 = vset.pattern.permute.xlu0 0
    %5072 = vperm.xlu0 %5071, %v4933
    %v5073 = vpop.permute.xlu0 %5072
    %5074 = vset.pattern.permute.xlu0 0
    %5075 = vperm.xlu0 %5074, %v4934
    %v5076 = vpop.permute.xlu0 %5075
    %5077 = vset.pattern.permute.xlu0 0
    %5078 = vperm.xlu0 %5077, %v4935
    %v5079 = vpop.permute.xlu0 %5078
    %5080 = vset.pattern.permute.xlu0 0
    %5081 = vperm.xlu0 %5080, %v4936
    %v5082 = vpop.permute.xlu0 %5081
    %5083 = vset.pattern.permute.xlu0 0
    %5084 = vperm.xlu0 %5083, %v4937
    %v5085 = vpop.permute.xlu0 %5084
    %5086 = vset.pattern.permute.xlu0 0
    %5087 = vperm.xlu0 %5086, %v4938
    %v5088 = vpop.permute.xlu0 %5087
    %5089 = vset.pattern.permute.xlu0 0
    %5090 = vperm.xlu0 %5089, %v4939
    %v5091 = vpop.permute.xlu0 %5090
    %5092 = vset.pattern.permute.xlu0 0
    %5093 = vperm.xlu0 %5092, %v4940
    %v5094 = vpop.permute.xlu0 %5093
    %5095 = vset.pattern.permute.xlu0 0
    %5096 = vperm.xlu0 %5095, %v4941
    %v5097 = vpop.permute.xlu0 %5096
    %5098 = vset.pattern.permute.xlu0 0
    %5099 = vperm.xlu0 %5098, %v4942
    %v5100 = vpop.permute.xlu0 %5099
    %5101 = vset.pattern.permute.xlu0 0
    %5102 = vperm.xlu0 %5101, %v4943
    %v5103 = vpop.permute.xlu0 %5102
    %5104 = vset.pattern.permute.xlu0 0
    %5105 = vperm.xlu0 %5104, %v4944
    %v5106 = vpop.permute.xlu0 %5105
    %5107 = vset.pattern.permute.xlu0 0
    %5108 = vperm.xlu0 %5107, %v4945
    %v5109 = vpop.permute.xlu0 %5108
    %5110 = vset.pattern.permute.xlu0 0
    %5111 = vperm.xlu0 %5110, %v4946
    %v5112 = vpop.permute.xlu0 %5111
    %5113 = vset.pattern.permute.xlu0 0
    %5114 = vperm.xlu0 %5113, %v4947
    %v5115 = vpop.permute.xlu0 %5114
    %5116 = vset.pattern.permute.xlu0 0
    %5117 = vperm.xlu0 %5116, %v4948
    %v5118 = vpop.permute.xlu0 %5117
    %5119 = vset.pattern.permute.xlu0 0
    %5120 = vperm.xlu0 %5119, %v4949
    %v5121 = vpop.permute.xlu0 %5120
    %5122 = vset.pattern.permute.xlu0 0
    %5123 = vperm.xlu0 %5122, %v4950
    %v5124 = vpop.permute.xlu0 %5123
    %5125 = vset.pattern.permute.xlu0 0
    %5126 = vperm.xlu0 %5125, %v4951
    %v5127 = vpop.permute.xlu0 %5126
    %5128 = vset.pattern.permute.xlu0 0
    %5129 = vperm.xlu0 %5128, %v4952
    %v5130 = vpop.permute.xlu0 %5129
    %5131 = vset.pattern.permute.xlu0 0
    %5132 = vperm.xlu0 %5131, %v4953
    %v5133 = vpop.permute.xlu0 %5132
    %5134 = vset.pattern.permute.xlu0 0
    %5135 = vperm.xlu0 %5134, %v4954
    %v5136 = vpop.permute.xlu0 %5135
    %5137 = vset.pattern.permute.xlu0 0
    %5138 = vperm.xlu0 %5137, %v4955
    %v5139 = vpop.permute.xlu0 %5138
    %5140 = vset.pattern.permute.xlu0 0
    %5141 = vperm.xlu0 %5140, %v4956
    %v5142 = vpop.permute.xlu0 %5141
    %5143 = vset.pattern.permute.xlu0 0
    %5144 = vperm.xlu0 %5143, %v4957
    %v5145 = vpop.permute.xlu0 %5144
    %5146 = vset.pattern.permute.xlu0 0
    %5147 = vperm.xlu0 %5146, %v4958
    %v5148 = vpop.permute.xlu0 %5147
    %5149 = vset.pattern.permute.xlu0 0
    %5150 = vperm.xlu0 %5149, %v4959
    %v5151 = vpop.permute.xlu0 %5150
    %5152 = vset.pattern.permute.xlu0 0
    %5153 = vperm.xlu0 %5152, %v4960
    %v5154 = vpop.permute.xlu0 %5153
    %5155 = vset.pattern.permute.xlu0 0
    %5156 = vperm.xlu0 %5155, %v4961
    %v5157 = vpop.permute.xlu0 %5156
    %5158 = vset.pattern.permute.xlu0 0
    %5159 = vperm.xlu0 %5158, %v4962
    %v5160 = vpop.permute.xlu0 %5159
    %5161 = vset.pattern.permute.xlu0 0
    %5162 = vperm.xlu0 %5161, %v4963
    %v5163 = vpop.permute.xlu0 %5162
    %5164 = vset.pattern.permute.xlu0 0
    %5165 = vperm.xlu0 %5164, %v4964
    %v5166 = vpop.permute.xlu0 %5165
    %5167 = vset.pattern.permute.xlu0 0
    %5168 = vperm.xlu0 %5167, %v4965
    %v5169 = vpop.permute.xlu0 %5168
    %5170 = vset.pattern.permute.xlu0 0
    %5171 = vperm.xlu0 %5170, %v4966
    %v5172 = vpop.permute.xlu0 %5171
    %5173 = vset.pattern.permute.xlu0 0
    %5174 = vperm.xlu0 %5173, %v4967
    %v5175 = vpop.permute.xlu0 %5174
    %5176 = vset.pattern.permute.xlu0 0
    %5177 = vperm.xlu0 %5176, %v4968
    %v5178 = vpop.permute.xlu0 %5177
    %5179 = vset.pattern.permute.xlu0 0
    %5180 = vperm.xlu0 %5179, %v4969
    %v5181 = vpop.permute.xlu0 %5180
    %5182 = vset.pattern.permute.xlu0 0
    %5183 = vperm.xlu0 %5182, %v4970
    %v5184 = vpop.permute.xlu0 %5183
    %5185 = vset.pattern.permute.xlu0 0
    %5186 = vperm.xlu0 %5185, %v4971
    %v5187 = vpop.permute.xlu0 %5186
    %5188 = vset.pattern.permute.xlu0 0
    %5189 = vperm.xlu0 %5188, %v4972
    %v5190 = vpop.permute.xlu0 %5189
    %5191 = vset.pattern.permute.xlu0 0
    %5192 = vperm.xlu0 %5191, %v4973
    %v5193 = vpop.permute.xlu0 %5192
    %5194 = vset.pattern.permute.xlu0 0
    %5195 = vperm.xlu0 %5194, %v4974
    %v5196 = vpop.permute.xlu0 %5195
    %5197 = vset.pattern.permute.xlu0 0
    %5198 = vperm.xlu0 %5197, %v4975
    %v5199 = vpop.permute.xlu0 %5198
    %5200 = vset.pattern.permute.xlu0 0
    %5201 = vperm.xlu0 %5200, %v4976
    %v5202 = vpop.permute.xlu0 %5201
    %5203 = vset.pattern.permute.xlu0 0
    %5204 = vperm.xlu0 %5203, %v4977
    %v5205 = vpop.permute.xlu0 %5204
    %5206 = vset.pattern.permute.xlu0 0
    %5207 = vperm.xlu0 %5206, %v4978
    %v5208 = vpop.permute.xlu0 %5207
    %5209 = vset.pattern.permute.xlu0 0
    %5210 = vperm.xlu0 %5209, %v4979
    %v5211 = vpop.permute.xlu0 %5210
    %5212 = vset.pattern.permute.xlu0 0
    %5213 = vperm.xlu0 %5212, %v4980
    %v5214 = vpop.permute.xlu0 %5213
    %5215 = vset.pattern.permute.xlu0 0
    %5216 = vperm.xlu0 %5215, %v4981
    %v5217 = vpop.permute.xlu0 %5216
    %5218 = vset.pattern.permute.xlu0 0
    %5219 = vperm.xlu0 %5218, %v4982
    %v5220 = vpop.permute.xlu0 %5219
    %5221 = vset.pattern.permute.xlu0 0
    %5222 = vperm.xlu0 %5221, %v4983
    %v5223 = vpop.permute.xlu0 %5222
    %5224 = vset.pattern.permute.xlu0 0
    %5225 = vperm.xlu0 %5224, %v4984
    %v5226 = vpop.permute.xlu0 %5225
    %5227 = vset.pattern.permute.xlu0 0
    %5228 = vperm.xlu0 %5227, %v4985
    %v5229 = vpop.permute.xlu0 %5228
    %5230 = vset.pattern.permute.xlu0 0
    %5231 = vperm.xlu0 %5230, %v4986
    %v5232 = vpop.permute.xlu0 %5231
    %5233 = vset.pattern.permute.xlu0 0
    %5234 = vperm.xlu0 %5233, %v4987
    %v5235 = vpop.permute.xlu0 %5234
    %5236 = vset.pattern.permute.xlu0 0
    %5237 = vperm.xlu0 %5236, %v4988
    %v5238 = vpop.permute.xlu0 %5237
    %5239 = vset.pattern.permute.xlu0 0
    %5240 = vperm.xlu0 %5239, %v4989
    %v5241 = vpop.permute.xlu0 %5240
    %5242 = vset.pattern.permute.xlu0 0
    %5243 = vperm.xlu0 %5242, %v4990
    %v5244 = vpop.permute.xlu0 %5243
    %5245 = vset.pattern.permute.xlu0 0
    %5246 = vperm.xlu0 %5245, %v4991
    %v5247 = vpop.permute.xlu0 %5246
    %v5248 = vperm.slane %v5058, %v2117
    %v5249 = vperm.slane %v5061, %v2119
    %v5250 = vsel %vm2121, %v5249, %v5248
    %v5251 = vperm.slane %v5064, %v2117
    %v5252 = vperm.slane %v5067, %v2119
    %v5253 = vsel %vm2121, %v5252, %v5251
    %v5254 = vperm.slane %v5070, %v2117
    %v5255 = vperm.slane %v5073, %v2119
    %v5256 = vsel %vm2121, %v5255, %v5254
    %v5257 = vperm.slane %v5076, %v2117
    %v5258 = vperm.slane %v5079, %v2119
    %v5259 = vsel %vm2121, %v5258, %v5257
    %v5260 = vperm.slane %v5082, %v2117
    %v5261 = vperm.slane %v5085, %v2119
    %v5262 = vsel %vm2121, %v5261, %v5260
    %v5263 = vperm.slane %v5088, %v2117
    %v5264 = vperm.slane %v5091, %v2119
    %v5265 = vsel %vm2121, %v5264, %v5263
    %v5266 = vperm.slane %v5094, %v2117
    %v5267 = vperm.slane %v5097, %v2119
    %v5268 = vsel %vm2121, %v5267, %v5266
    %v5269 = vperm.slane %v5100, %v2117
    %v5270 = vperm.slane %v5103, %v2119
    %v5271 = vsel %vm2121, %v5270, %v5269
    %v5272 = vperm.slane %v5106, %v2117
    %v5273 = vperm.slane %v5109, %v2119
    %v5274 = vsel %vm2121, %v5273, %v5272
    %v5275 = vperm.slane %v5112, %v2117
    %v5276 = vperm.slane %v5115, %v2119
    %v5277 = vsel %vm2121, %v5276, %v5275
    %v5278 = vperm.slane %v5118, %v2117
    %v5279 = vperm.slane %v5121, %v2119
    %v5280 = vsel %vm2121, %v5279, %v5278
    %v5281 = vperm.slane %v5124, %v2117
    %v5282 = vperm.slane %v5127, %v2119
    %v5283 = vsel %vm2121, %v5282, %v5281
    %v5284 = vperm.slane %v5130, %v2117
    %v5285 = vperm.slane %v5133, %v2119
    %v5286 = vsel %vm2121, %v5285, %v5284
    %v5287 = vperm.slane %v5136, %v2117
    %v5288 = vperm.slane %v5139, %v2119
    %v5289 = vsel %vm2121, %v5288, %v5287
    %v5290 = vperm.slane %v5142, %v2117
    %v5291 = vperm.slane %v5145, %v2119
    %v5292 = vsel %vm2121, %v5291, %v5290
    %v5293 = vperm.slane %v5148, %v2117
    %v5294 = vperm.slane %v5151, %v2119
    %v5295 = vsel %vm2121, %v5294, %v5293
    %v5296 = vperm.slane %v5154, %v2117
    %v5297 = vperm.slane %v5157, %v2119
    %v5298 = vsel %vm2121, %v5297, %v5296
    %v5299 = vperm.slane %v5160, %v2117
    %v5300 = vperm.slane %v5163, %v2119
    %v5301 = vsel %vm2121, %v5300, %v5299
    %v5302 = vperm.slane %v5166, %v2117
    %v5303 = vperm.slane %v5169, %v2119
    %v5304 = vsel %vm2121, %v5303, %v5302
    %v5305 = vperm.slane %v5172, %v2117
    %v5306 = vperm.slane %v5175, %v2119
    %v5307 = vsel %vm2121, %v5306, %v5305
    %v5308 = vperm.slane %v5178, %v2117
    %v5309 = vperm.slane %v5181, %v2119
    %v5310 = vsel %vm2121, %v5309, %v5308
    %v5311 = vperm.slane %v5184, %v2117
    %v5312 = vperm.slane %v5187, %v2119
    %v5313 = vsel %vm2121, %v5312, %v5311
    %v5314 = vperm.slane %v5190, %v2117
    %v5315 = vperm.slane %v5193, %v2119
    %v5316 = vsel %vm2121, %v5315, %v5314
    %v5317 = vperm.slane %v5196, %v2117
    %v5318 = vperm.slane %v5199, %v2119
    %v5319 = vsel %vm2121, %v5318, %v5317
    %v5320 = vperm.slane %v5202, %v2117
    %v5321 = vperm.slane %v5205, %v2119
    %v5322 = vsel %vm2121, %v5321, %v5320
    %v5323 = vperm.slane %v5208, %v2117
    %v5324 = vperm.slane %v5211, %v2119
    %v5325 = vsel %vm2121, %v5324, %v5323
    %v5326 = vperm.slane %v5214, %v2117
    %v5327 = vperm.slane %v5217, %v2119
    %v5328 = vsel %vm2121, %v5327, %v5326
    %v5329 = vperm.slane %v5220, %v2117
    %v5330 = vperm.slane %v5223, %v2119
    %v5331 = vsel %vm2121, %v5330, %v5329
    %v5332 = vperm.slane %v5226, %v2117
    %v5333 = vperm.slane %v5229, %v2119
    %v5334 = vsel %vm2121, %v5333, %v5332
    %v5335 = vperm.slane %v5232, %v2117
    %v5336 = vperm.slane %v5235, %v2119
    %v5337 = vsel %vm2121, %v5336, %v5335
    %v5338 = vperm.slane %v5238, %v2117
    %v5339 = vperm.slane %v5241, %v2119
    %v5340 = vsel %vm2121, %v5339, %v5338
    %v5341 = vperm.slane %v5244, %v2117
    %v5342 = vperm.slane %v5247, %v2119
    %v5343 = vsel %vm2121, %v5342, %v5341
    %v5344 = vsel %vm2216, %v5253, %v5250
    %v5345 = vsel %vm2218, %v5256, %v5344
    %v5346 = vsel %vm2220, %v5259, %v5345
    %v5347 = vsel %vm2222, %v5262, %v5346
    %v5348 = vsel %vm2224, %v5265, %v5347
    %v5349 = vsel %vm2226, %v5268, %v5348
    %v5350 = vsel %vm2228, %v5271, %v5349
    %v5351 = vsel %vm2216, %v5277, %v5274
    %v5352 = vsel %vm2218, %v5280, %v5351
    %v5353 = vsel %vm2220, %v5283, %v5352
    %v5354 = vsel %vm2222, %v5286, %v5353
    %v5355 = vsel %vm2224, %v5289, %v5354
    %v5356 = vsel %vm2226, %v5292, %v5355
    %v5357 = vsel %vm2228, %v5295, %v5356
    %v5358 = vsel %vm2216, %v5301, %v5298
    %v5359 = vsel %vm2218, %v5304, %v5358
    %v5360 = vsel %vm2220, %v5307, %v5359
    %v5361 = vsel %vm2222, %v5310, %v5360
    %v5362 = vsel %vm2224, %v5313, %v5361
    %v5363 = vsel %vm2226, %v5316, %v5362
    %v5364 = vsel %vm2228, %v5319, %v5363
    %v5365 = vsel %vm2216, %v5325, %v5322
    %v5366 = vsel %vm2218, %v5328, %v5365
    %v5367 = vsel %vm2220, %v5331, %v5366
    %v5368 = vsel %vm2222, %v5334, %v5367
    %v5369 = vsel %vm2224, %v5337, %v5368
    %v5370 = vsel %vm2226, %v5340, %v5369
    %v5371 = vsel %vm2228, %v5343, %v5370
    %v5376 = vsel %vm2255, %v5350, -inf
    %5377 = vmax.xlane.f32.xlu0 %v5376
    %v5378 = vpop.xlane.xlu0 %5377
    %v5379 = vsel %vm2255, %v5357, -inf
    %5380 = vmax.xlane.f32.xlu0 %v5379
    %v5381 = vpop.xlane.xlu0 %5380
    %v5382 = vsel %vm2255, %v5364, -inf
    %5383 = vmax.xlane.f32.xlu0 %v5382
    %v5384 = vpop.xlane.xlu0 %5383
    %v5385 = vsel %vm2255, %v5371, -inf
    %5386 = vmax.xlane.f32.xlu0 %v5385
    %v5387 = vpop.xlane.xlu0 %5386
    %v5392 = vperm.slane %v5378, 0
    %v5393 = vperm.slane %v5378, 1
    %v5394 = vperm.slane %v5378, 2
    %v5395 = vperm.slane %v5378, 3
    %v5396 = vperm.slane %v5378, 4
    %v5397 = vperm.slane %v5378, 5
    %v5398 = vperm.slane %v5378, 6
    %v5399 = vperm.slane %v5378, 7
    %v5400 = vperm.slane %v5381, 0
    %v5401 = vperm.slane %v5381, 1
    %v5402 = vperm.slane %v5381, 2
    %v5403 = vperm.slane %v5381, 3
    %v5404 = vperm.slane %v5381, 4
    %v5405 = vperm.slane %v5381, 5
    %v5406 = vperm.slane %v5381, 6
    %v5407 = vperm.slane %v5381, 7
    %v5408 = vperm.slane %v5384, 0
    %v5409 = vperm.slane %v5384, 1
    %v5410 = vperm.slane %v5384, 2
    %v5411 = vperm.slane %v5384, 3
    %v5412 = vperm.slane %v5384, 4
    %v5413 = vperm.slane %v5384, 5
    %v5414 = vperm.slane %v5384, 6
    %v5415 = vperm.slane %v5384, 7
    %v5416 = vperm.slane %v5387, 0
    %v5417 = vperm.slane %v5387, 1
    %v5418 = vperm.slane %v5387, 2
    %v5419 = vperm.slane %v5387, 3
    %v5420 = vperm.slane %v5387, 4
    %v5421 = vperm.slane %v5387, 5
    %v5422 = vperm.slane %v5387, 6
    %v5423 = vperm.slane %v5387, 7
    %v5456 = vsub.f32 %v4928, %v5392
    %v5457 = vsub.f32 %v4929, %v5392
    %v5458 = vsub.f32 %v4930, %v5393
    %v5459 = vsub.f32 %v4931, %v5393
    %v5460 = vsub.f32 %v4932, %v5394
    %v5461 = vsub.f32 %v4933, %v5394
    %v5462 = vsub.f32 %v4934, %v5395
    %v5463 = vsub.f32 %v4935, %v5395
    %v5464 = vsub.f32 %v4936, %v5396
    %v5465 = vsub.f32 %v4937, %v5396
    %v5466 = vsub.f32 %v4938, %v5397
    %v5467 = vsub.f32 %v4939, %v5397
    %v5468 = vsub.f32 %v4940, %v5398
    %v5469 = vsub.f32 %v4941, %v5398
    %v5470 = vsub.f32 %v4942, %v5399
    %v5471 = vsub.f32 %v4943, %v5399
    %v5472 = vsub.f32 %v4944, %v5400
    %v5473 = vsub.f32 %v4945, %v5400
    %v5474 = vsub.f32 %v4946, %v5401
    %v5475 = vsub.f32 %v4947, %v5401
    %v5476 = vsub.f32 %v4948, %v5402
    %v5477 = vsub.f32 %v4949, %v5402
    %v5478 = vsub.f32 %v4950, %v5403
    %v5479 = vsub.f32 %v4951, %v5403
    %v5480 = vsub.f32 %v4952, %v5404
    %v5481 = vsub.f32 %v4953, %v5404
    %v5482 = vsub.f32 %v4954, %v5405
    %v5483 = vsub.f32 %v4955, %v5405
    %v5484 = vsub.f32 %v4956, %v5406
    %v5485 = vsub.f32 %v4957, %v5406
    %v5486 = vsub.f32 %v4958, %v5407
    %v5487 = vsub.f32 %v4959, %v5407
    %v5488 = vsub.f32 %v4960, %v5408
    %v5489 = vsub.f32 %v4961, %v5408
    %v5490 = vsub.f32 %v4962, %v5409
    %v5491 = vsub.f32 %v4963, %v5409
    %v5492 = vsub.f32 %v4964, %v5410
    %v5493 = vsub.f32 %v4965, %v5410
    %v5494 = vsub.f32 %v4966, %v5411
    %v5495 = vsub.f32 %v4967, %v5411
    %v5496 = vsub.f32 %v4968, %v5412
    %v5497 = vsub.f32 %v4969, %v5412
    %v5498 = vsub.f32 %v4970, %v5413
    %v5499 = vsub.f32 %v4971, %v5413
    %v5500 = vsub.f32 %v4972, %v5414
    %v5501 = vsub.f32 %v4973, %v5414
    %v5502 = vsub.f32 %v4974, %v5415
    %v5503 = vsub.f32 %v4975, %v5415
    %v5504 = vsub.f32 %v4976, %v5416
    %v5505 = vsub.f32 %v4977, %v5416
    %v5506 = vsub.f32 %v4978, %v5417
    %v5507 = vsub.f32 %v4979, %v5417
    %v5508 = vsub.f32 %v4980, %v5418
    %v5509 = vsub.f32 %v4981, %v5418
    %v5510 = vsub.f32 %v4982, %v5419
    %v5511 = vsub.f32 %v4983, %v5419
    %v5512 = vsub.f32 %v4984, %v5420
    %v5513 = vsub.f32 %v4985, %v5420
    %v5514 = vsub.f32 %v4986, %v5421
    %v5515 = vsub.f32 %v4987, %v5421
    %v5516 = vsub.f32 %v4988, %v5422
    %v5517 = vsub.f32 %v4989, %v5422
    %v5518 = vsub.f32 %v4990, %v5423
    %v5519 = vsub.f32 %v4991, %v5423
    %v5520 = vmul.f32 %v5456, 1.442695
    %v5521 = vpow.pop %v5520
    %v5522 = vmul.f32 %v5457, 1.442695
    %v5523 = vpow.pop %v5522
    %v5524 = vmul.f32 %v5458, 1.442695
    %v5525 = vpow.pop %v5524
    %v5526 = vmul.f32 %v5459, 1.442695
    %v5527 = vpow.pop %v5526
    %v5528 = vmul.f32 %v5460, 1.442695
    %v5529 = vpow.pop %v5528
    %v5530 = vmul.f32 %v5461, 1.442695
    %v5531 = vpow.pop %v5530
    %v5532 = vmul.f32 %v5462, 1.442695
    %v5533 = vpow.pop %v5532
    %v5534 = vmul.f32 %v5463, 1.442695
    %v5535 = vpow.pop %v5534
    %v5536 = vmul.f32 %v5464, 1.442695
    %v5537 = vpow.pop %v5536
    %v5538 = vmul.f32 %v5465, 1.442695
    %v5539 = vpow.pop %v5538
    %v5540 = vmul.f32 %v5466, 1.442695
    %v5541 = vpow.pop %v5540
    %v5542 = vmul.f32 %v5467, 1.442695
    %v5543 = vpow.pop %v5542
    %v5544 = vmul.f32 %v5468, 1.442695
    %v5545 = vpow.pop %v5544
    %v5546 = vmul.f32 %v5469, 1.442695
    %v5547 = vpow.pop %v5546
    %v5548 = vmul.f32 %v5470, 1.442695
    %v5549 = vpow.pop %v5548
    %v5550 = vmul.f32 %v5471, 1.442695
    %v5551 = vpow.pop %v5550
    %v5552 = vmul.f32 %v5472, 1.442695
    %v5553 = vpow.pop %v5552
    %v5554 = vmul.f32 %v5473, 1.442695
    %v5555 = vpow.pop %v5554
    %v5556 = vmul.f32 %v5474, 1.442695
    %v5557 = vpow.pop %v5556
    %v5558 = vmul.f32 %v5475, 1.442695
    %v5559 = vpow.pop %v5558
    %v5560 = vmul.f32 %v5476, 1.442695
    %v5561 = vpow.pop %v5560
    %v5562 = vmul.f32 %v5477, 1.442695
    %v5563 = vpow.pop %v5562
    %v5564 = vmul.f32 %v5478, 1.442695
    %v5565 = vpow.pop %v5564
    %v5566 = vmul.f32 %v5479, 1.442695
    %v5567 = vpow.pop %v5566
    %v5568 = vmul.f32 %v5480, 1.442695
    %v5569 = vpow.pop %v5568
    %v5570 = vmul.f32 %v5481, 1.442695
    %v5571 = vpow.pop %v5570
    %v5572 = vmul.f32 %v5482, 1.442695
    %v5573 = vpow.pop %v5572
    %v5574 = vmul.f32 %v5483, 1.442695
    %v5575 = vpow.pop %v5574
    %v5576 = vmul.f32 %v5484, 1.442695
    %v5577 = vpow.pop %v5576
    %v5578 = vmul.f32 %v5485, 1.442695
    %v5579 = vpow.pop %v5578
    %v5580 = vmul.f32 %v5486, 1.442695
    %v5581 = vpow.pop %v5580
    %v5582 = vmul.f32 %v5487, 1.442695
    %v5583 = vpow.pop %v5582
    %v5584 = vmul.f32 %v5488, 1.442695
    %v5585 = vpow.pop %v5584
    %v5586 = vmul.f32 %v5489, 1.442695
    %v5587 = vpow.pop %v5586
    %v5588 = vmul.f32 %v5490, 1.442695
    %v5589 = vpow.pop %v5588
    %v5590 = vmul.f32 %v5491, 1.442695
    %v5591 = vpow.pop %v5590
    %v5592 = vmul.f32 %v5492, 1.442695
    %v5593 = vpow.pop %v5592
    %v5594 = vmul.f32 %v5493, 1.442695
    %v5595 = vpow.pop %v5594
    %v5596 = vmul.f32 %v5494, 1.442695
    %v5597 = vpow.pop %v5596
    %v5598 = vmul.f32 %v5495, 1.442695
    %v5599 = vpow.pop %v5598
    %v5600 = vmul.f32 %v5496, 1.442695
    %v5601 = vpow.pop %v5600
    %v5602 = vmul.f32 %v5497, 1.442695
    %v5603 = vpow.pop %v5602
    %v5604 = vmul.f32 %v5498, 1.442695
    %v5605 = vpow.pop %v5604
    %v5606 = vmul.f32 %v5499, 1.442695
    %v5607 = vpow.pop %v5606
    %v5608 = vmul.f32 %v5500, 1.442695
    %v5609 = vpow.pop %v5608
    %v5610 = vmul.f32 %v5501, 1.442695
    %v5611 = vpow.pop %v5610
    %v5612 = vmul.f32 %v5502, 1.442695
    %v5613 = vpow.pop %v5612
    %v5614 = vmul.f32 %v5503, 1.442695
    %v5615 = vpow.pop %v5614
    %v5616 = vmul.f32 %v5504, 1.442695
    %v5617 = vpow.pop %v5616
    %v5618 = vmul.f32 %v5505, 1.442695
    %v5619 = vpow.pop %v5618
    %v5620 = vmul.f32 %v5506, 1.442695
    %v5621 = vpow.pop %v5620
    %v5622 = vmul.f32 %v5507, 1.442695
    %v5623 = vpow.pop %v5622
    %v5624 = vmul.f32 %v5508, 1.442695
    %v5625 = vpow.pop %v5624
    %v5626 = vmul.f32 %v5509, 1.442695
    %v5627 = vpow.pop %v5626
    %v5628 = vmul.f32 %v5510, 1.442695
    %v5629 = vpow.pop %v5628
    %v5630 = vmul.f32 %v5511, 1.442695
    %v5631 = vpow.pop %v5630
    %v5632 = vmul.f32 %v5512, 1.442695
    %v5633 = vpow.pop %v5632
    %v5634 = vmul.f32 %v5513, 1.442695
    %v5635 = vpow.pop %v5634
    %v5636 = vmul.f32 %v5514, 1.442695
    %v5637 = vpow.pop %v5636
    %v5638 = vmul.f32 %v5515, 1.442695
    %v5639 = vpow.pop %v5638
    %v5640 = vmul.f32 %v5516, 1.442695
    %v5641 = vpow.pop %v5640
    %v5642 = vmul.f32 %v5517, 1.442695
    %v5643 = vpow.pop %v5642
    %v5644 = vmul.f32 %v5518, 1.442695
    %v5645 = vpow.pop %v5644
    %v5646 = vmul.f32 %v5519, 1.442695
    %v5647 = vpow.pop %v5646
    %v5648 = vmul.f32 %v5521, %v2536
    %v5649 = vmul.f32 %v5523, %v2542
    %v5650 = vmul.f32 %v5525, %v2549
    %v5651 = vmul.f32 %v5527, %v2555
    %v5652 = vmul.f32 %v5529, %v2562
    %v5653 = vmul.f32 %v5531, %v2568
    %v5654 = vmul.f32 %v5533, %v2575
    %v5655 = vmul.f32 %v5535, %v2581
    %v5656 = vmul.f32 %v5537, %v2588
    %v5657 = vmul.f32 %v5539, %v2594
    %v5658 = vmul.f32 %v5541, %v2601
    %v5659 = vmul.f32 %v5543, %v2607
    %v5660 = vmul.f32 %v5545, %v2614
    %v5661 = vmul.f32 %v5547, %v2620
    %v5662 = vmul.f32 %v5549, %v2627
    %v5663 = vmul.f32 %v5551, %v2633
    %v5664 = vmul.f32 %v5553, %v2640
    %v5665 = vmul.f32 %v5555, %v2646
    %v5666 = vmul.f32 %v5557, %v2653
    %v5667 = vmul.f32 %v5559, %v2659
    %v5668 = vmul.f32 %v5561, %v2666
    %v5669 = vmul.f32 %v5563, %v2672
    %v5670 = vmul.f32 %v5565, %v2679
    %v5671 = vmul.f32 %v5567, %v2685
    %v5672 = vmul.f32 %v5569, %v2692
    %v5673 = vmul.f32 %v5571, %v2698
    %v5674 = vmul.f32 %v5573, %v2705
    %v5675 = vmul.f32 %v5575, %v2711
    %v5676 = vmul.f32 %v5577, %v2718
    %v5677 = vmul.f32 %v5579, %v2724
    %v5678 = vmul.f32 %v5581, %v2731
    %v5679 = vmul.f32 %v5583, %v2737
    %v5680 = vmul.f32 %v5585, %v2536
    %v5681 = vmul.f32 %v5587, %v2542
    %v5682 = vmul.f32 %v5589, %v2549
    %v5683 = vmul.f32 %v5591, %v2555
    %v5684 = vmul.f32 %v5593, %v2562
    %v5685 = vmul.f32 %v5595, %v2568
    %v5686 = vmul.f32 %v5597, %v2575
    %v5687 = vmul.f32 %v5599, %v2581
    %v5688 = vmul.f32 %v5601, %v2588
    %v5689 = vmul.f32 %v5603, %v2594
    %v5690 = vmul.f32 %v5605, %v2601
    %v5691 = vmul.f32 %v5607, %v2607
    %v5692 = vmul.f32 %v5609, %v2614
    %v5693 = vmul.f32 %v5611, %v2620
    %v5694 = vmul.f32 %v5613, %v2627
    %v5695 = vmul.f32 %v5615, %v2633
    %v5696 = vmul.f32 %v5617, %v2640
    %v5697 = vmul.f32 %v5619, %v2646
    %v5698 = vmul.f32 %v5621, %v2653
    %v5699 = vmul.f32 %v5623, %v2659
    %v5700 = vmul.f32 %v5625, %v2666
    %v5701 = vmul.f32 %v5627, %v2672
    %v5702 = vmul.f32 %v5629, %v2679
    %v5703 = vmul.f32 %v5631, %v2685
    %v5704 = vmul.f32 %v5633, %v2692
    %v5705 = vmul.f32 %v5635, %v2698
    %v5706 = vmul.f32 %v5637, %v2705
    %v5707 = vmul.f32 %v5639, %v2711
    %v5708 = vmul.f32 %v5641, %v2718
    %v5709 = vmul.f32 %v5643, %v2724
    %v5710 = vmul.f32 %v5645, %v2731
    %v5711 = vmul.f32 %v5647, %v2737
    %5776 = vset.pattern.permute.xlu0 0
    %5777 = vperm.xlu0 %5776, %v5648
    %v5778 = vpop.permute.xlu0 %5777
    %5779 = vset.pattern.permute.xlu0 0
    %5780 = vperm.xlu0 %5779, %v5649
    %v5781 = vpop.permute.xlu0 %5780
    %5782 = vset.pattern.permute.xlu0 0
    %5783 = vperm.xlu0 %5782, %v5650
    %v5784 = vpop.permute.xlu0 %5783
    %5785 = vset.pattern.permute.xlu0 0
    %5786 = vperm.xlu0 %5785, %v5651
    %v5787 = vpop.permute.xlu0 %5786
    %5788 = vset.pattern.permute.xlu0 0
    %5789 = vperm.xlu0 %5788, %v5652
    %v5790 = vpop.permute.xlu0 %5789
    %5791 = vset.pattern.permute.xlu0 0
    %5792 = vperm.xlu0 %5791, %v5653
    %v5793 = vpop.permute.xlu0 %5792
    %5794 = vset.pattern.permute.xlu0 0
    %5795 = vperm.xlu0 %5794, %v5654
    %v5796 = vpop.permute.xlu0 %5795
    %5797 = vset.pattern.permute.xlu0 0
    %5798 = vperm.xlu0 %5797, %v5655
    %v5799 = vpop.permute.xlu0 %5798
    %5800 = vset.pattern.permute.xlu0 0
    %5801 = vperm.xlu0 %5800, %v5656
    %v5802 = vpop.permute.xlu0 %5801
    %5803 = vset.pattern.permute.xlu0 0
    %5804 = vperm.xlu0 %5803, %v5657
    %v5805 = vpop.permute.xlu0 %5804
    %5806 = vset.pattern.permute.xlu0 0
    %5807 = vperm.xlu0 %5806, %v5658
    %v5808 = vpop.permute.xlu0 %5807
    %5809 = vset.pattern.permute.xlu0 0
    %5810 = vperm.xlu0 %5809, %v5659
    %v5811 = vpop.permute.xlu0 %5810
    %5812 = vset.pattern.permute.xlu0 0
    %5813 = vperm.xlu0 %5812, %v5660
    %v5814 = vpop.permute.xlu0 %5813
    %5815 = vset.pattern.permute.xlu0 0
    %5816 = vperm.xlu0 %5815, %v5661
    %v5817 = vpop.permute.xlu0 %5816
    %5818 = vset.pattern.permute.xlu0 0
    %5819 = vperm.xlu0 %5818, %v5662
    %v5820 = vpop.permute.xlu0 %5819
    %5821 = vset.pattern.permute.xlu0 0
    %5822 = vperm.xlu0 %5821, %v5663
    %v5823 = vpop.permute.xlu0 %5822
    %5824 = vset.pattern.permute.xlu0 0
    %5825 = vperm.xlu0 %5824, %v5664
    %v5826 = vpop.permute.xlu0 %5825
    %5827 = vset.pattern.permute.xlu0 0
    %5828 = vperm.xlu0 %5827, %v5665
    %v5829 = vpop.permute.xlu0 %5828
    %5830 = vset.pattern.permute.xlu0 0
    %5831 = vperm.xlu0 %5830, %v5666
    %v5832 = vpop.permute.xlu0 %5831
    %5833 = vset.pattern.permute.xlu0 0
    %5834 = vperm.xlu0 %5833, %v5667
    %v5835 = vpop.permute.xlu0 %5834
    %5836 = vset.pattern.permute.xlu0 0
    %5837 = vperm.xlu0 %5836, %v5668
    %v5838 = vpop.permute.xlu0 %5837
    %5839 = vset.pattern.permute.xlu0 0
    %5840 = vperm.xlu0 %5839, %v5669
    %v5841 = vpop.permute.xlu0 %5840
    %5842 = vset.pattern.permute.xlu0 0
    %5843 = vperm.xlu0 %5842, %v5670
    %v5844 = vpop.permute.xlu0 %5843
    %5845 = vset.pattern.permute.xlu0 0
    %5846 = vperm.xlu0 %5845, %v5671
    %v5847 = vpop.permute.xlu0 %5846
    %5848 = vset.pattern.permute.xlu0 0
    %5849 = vperm.xlu0 %5848, %v5672
    %v5850 = vpop.permute.xlu0 %5849
    %5851 = vset.pattern.permute.xlu0 0
    %5852 = vperm.xlu0 %5851, %v5673
    %v5853 = vpop.permute.xlu0 %5852
    %5854 = vset.pattern.permute.xlu0 0
    %5855 = vperm.xlu0 %5854, %v5674
    %v5856 = vpop.permute.xlu0 %5855
    %5857 = vset.pattern.permute.xlu0 0
    %5858 = vperm.xlu0 %5857, %v5675
    %v5859 = vpop.permute.xlu0 %5858
    %5860 = vset.pattern.permute.xlu0 0
    %5861 = vperm.xlu0 %5860, %v5676
    %v5862 = vpop.permute.xlu0 %5861
    %5863 = vset.pattern.permute.xlu0 0
    %5864 = vperm.xlu0 %5863, %v5677
    %v5865 = vpop.permute.xlu0 %5864
    %5866 = vset.pattern.permute.xlu0 0
    %5867 = vperm.xlu0 %5866, %v5678
    %v5868 = vpop.permute.xlu0 %5867
    %5869 = vset.pattern.permute.xlu0 0
    %5870 = vperm.xlu0 %5869, %v5679
    %v5871 = vpop.permute.xlu0 %5870
    %5872 = vset.pattern.permute.xlu0 0
    %5873 = vperm.xlu0 %5872, %v5680
    %v5874 = vpop.permute.xlu0 %5873
    %5875 = vset.pattern.permute.xlu0 0
    %5876 = vperm.xlu0 %5875, %v5681
    %v5877 = vpop.permute.xlu0 %5876
    %5878 = vset.pattern.permute.xlu0 0
    %5879 = vperm.xlu0 %5878, %v5682
    %v5880 = vpop.permute.xlu0 %5879
    %5881 = vset.pattern.permute.xlu0 0
    %5882 = vperm.xlu0 %5881, %v5683
    %v5883 = vpop.permute.xlu0 %5882
    %5884 = vset.pattern.permute.xlu0 0
    %5885 = vperm.xlu0 %5884, %v5684
    %v5886 = vpop.permute.xlu0 %5885
    %5887 = vset.pattern.permute.xlu0 0
    %5888 = vperm.xlu0 %5887, %v5685
    %v5889 = vpop.permute.xlu0 %5888
    %5890 = vset.pattern.permute.xlu0 0
    %5891 = vperm.xlu0 %5890, %v5686
    %v5892 = vpop.permute.xlu0 %5891
    %5893 = vset.pattern.permute.xlu0 0
    %5894 = vperm.xlu0 %5893, %v5687
    %v5895 = vpop.permute.xlu0 %5894
    %5896 = vset.pattern.permute.xlu0 0
    %5897 = vperm.xlu0 %5896, %v5688
    %v5898 = vpop.permute.xlu0 %5897
    %5899 = vset.pattern.permute.xlu0 0
    %5900 = vperm.xlu0 %5899, %v5689
    %v5901 = vpop.permute.xlu0 %5900
    %5902 = vset.pattern.permute.xlu0 0
    %5903 = vperm.xlu0 %5902, %v5690
    %v5904 = vpop.permute.xlu0 %5903
    %5905 = vset.pattern.permute.xlu0 0
    %5906 = vperm.xlu0 %5905, %v5691
    %v5907 = vpop.permute.xlu0 %5906
    %5908 = vset.pattern.permute.xlu0 0
    %5909 = vperm.xlu0 %5908, %v5692
    %v5910 = vpop.permute.xlu0 %5909
    %5911 = vset.pattern.permute.xlu0 0
    %5912 = vperm.xlu0 %5911, %v5693
    %v5913 = vpop.permute.xlu0 %5912
    %5914 = vset.pattern.permute.xlu0 0
    %5915 = vperm.xlu0 %5914, %v5694
    %v5916 = vpop.permute.xlu0 %5915
    %5917 = vset.pattern.permute.xlu0 0
    %5918 = vperm.xlu0 %5917, %v5695
    %v5919 = vpop.permute.xlu0 %5918
    %5920 = vset.pattern.permute.xlu0 0
    %5921 = vperm.xlu0 %5920, %v5696
    %v5922 = vpop.permute.xlu0 %5921
    %5923 = vset.pattern.permute.xlu0 0
    %5924 = vperm.xlu0 %5923, %v5697
    %v5925 = vpop.permute.xlu0 %5924
    %5926 = vset.pattern.permute.xlu0 0
    %5927 = vperm.xlu0 %5926, %v5698
    %v5928 = vpop.permute.xlu0 %5927
    %5929 = vset.pattern.permute.xlu0 0
    %5930 = vperm.xlu0 %5929, %v5699
    %v5931 = vpop.permute.xlu0 %5930
    %5932 = vset.pattern.permute.xlu0 0
    %5933 = vperm.xlu0 %5932, %v5700
    %v5934 = vpop.permute.xlu0 %5933
    %5935 = vset.pattern.permute.xlu0 0
    %5936 = vperm.xlu0 %5935, %v5701
    %v5937 = vpop.permute.xlu0 %5936
    %5938 = vset.pattern.permute.xlu0 0
    %5939 = vperm.xlu0 %5938, %v5702
    %v5940 = vpop.permute.xlu0 %5939
    %5941 = vset.pattern.permute.xlu0 0
    %5942 = vperm.xlu0 %5941, %v5703
    %v5943 = vpop.permute.xlu0 %5942
    %5944 = vset.pattern.permute.xlu0 0
    %5945 = vperm.xlu0 %5944, %v5704
    %v5946 = vpop.permute.xlu0 %5945
    %5947 = vset.pattern.permute.xlu0 0
    %5948 = vperm.xlu0 %5947, %v5705
    %v5949 = vpop.permute.xlu0 %5948
    %5950 = vset.pattern.permute.xlu0 0
    %5951 = vperm.xlu0 %5950, %v5706
    %v5952 = vpop.permute.xlu0 %5951
    %5953 = vset.pattern.permute.xlu0 0
    %5954 = vperm.xlu0 %5953, %v5707
    %v5955 = vpop.permute.xlu0 %5954
    %5956 = vset.pattern.permute.xlu0 0
    %5957 = vperm.xlu0 %5956, %v5708
    %v5958 = vpop.permute.xlu0 %5957
    %5959 = vset.pattern.permute.xlu0 0
    %5960 = vperm.xlu0 %5959, %v5709
    %v5961 = vpop.permute.xlu0 %5960
    %5962 = vset.pattern.permute.xlu0 0
    %5963 = vperm.xlu0 %5962, %v5710
    %v5964 = vpop.permute.xlu0 %5963
    %5965 = vset.pattern.permute.xlu0 0
    %5966 = vperm.xlu0 %5965, %v5711
    %v5967 = vpop.permute.xlu0 %5966
    %v5968 = vperm.slane %v5778, %v2117
    %v5969 = vperm.slane %v5781, %v2119
    %v5970 = vsel %vm2121, %v5969, %v5968
    %v5971 = vperm.slane %v5784, %v2117
    %v5972 = vperm.slane %v5787, %v2119
    %v5973 = vsel %vm2121, %v5972, %v5971
    %v5974 = vperm.slane %v5790, %v2117
    %v5975 = vperm.slane %v5793, %v2119
    %v5976 = vsel %vm2121, %v5975, %v5974
    %v5977 = vperm.slane %v5796, %v2117
    %v5978 = vperm.slane %v5799, %v2119
    %v5979 = vsel %vm2121, %v5978, %v5977
    %v5980 = vperm.slane %v5802, %v2117
    %v5981 = vperm.slane %v5805, %v2119
    %v5982 = vsel %vm2121, %v5981, %v5980
    %v5983 = vperm.slane %v5808, %v2117
    %v5984 = vperm.slane %v5811, %v2119
    %v5985 = vsel %vm2121, %v5984, %v5983
    %v5986 = vperm.slane %v5814, %v2117
    %v5987 = vperm.slane %v5817, %v2119
    %v5988 = vsel %vm2121, %v5987, %v5986
    %v5989 = vperm.slane %v5820, %v2117
    %v5990 = vperm.slane %v5823, %v2119
    %v5991 = vsel %vm2121, %v5990, %v5989
    %v5992 = vperm.slane %v5826, %v2117
    %v5993 = vperm.slane %v5829, %v2119
    %v5994 = vsel %vm2121, %v5993, %v5992
    %v5995 = vperm.slane %v5832, %v2117
    %v5996 = vperm.slane %v5835, %v2119
    %v5997 = vsel %vm2121, %v5996, %v5995
    %v5998 = vperm.slane %v5838, %v2117
    %v5999 = vperm.slane %v5841, %v2119
    %v6000 = vsel %vm2121, %v5999, %v5998
    %v6001 = vperm.slane %v5844, %v2117
    %v6002 = vperm.slane %v5847, %v2119
    %v6003 = vsel %vm2121, %v6002, %v6001
    %v6004 = vperm.slane %v5850, %v2117
    %v6005 = vperm.slane %v5853, %v2119
    %v6006 = vsel %vm2121, %v6005, %v6004
    %v6007 = vperm.slane %v5856, %v2117
    %v6008 = vperm.slane %v5859, %v2119
    %v6009 = vsel %vm2121, %v6008, %v6007
    %v6010 = vperm.slane %v5862, %v2117
    %v6011 = vperm.slane %v5865, %v2119
    %v6012 = vsel %vm2121, %v6011, %v6010
    %v6013 = vperm.slane %v5868, %v2117
    %v6014 = vperm.slane %v5871, %v2119
    %v6015 = vsel %vm2121, %v6014, %v6013
    %v6016 = vperm.slane %v5874, %v2117
    %v6017 = vperm.slane %v5877, %v2119
    %v6018 = vsel %vm2121, %v6017, %v6016
    %v6019 = vperm.slane %v5880, %v2117
    %v6020 = vperm.slane %v5883, %v2119
    %v6021 = vsel %vm2121, %v6020, %v6019
    %v6022 = vperm.slane %v5886, %v2117
    %v6023 = vperm.slane %v5889, %v2119
    %v6024 = vsel %vm2121, %v6023, %v6022
    %v6025 = vperm.slane %v5892, %v2117
    %v6026 = vperm.slane %v5895, %v2119
    %v6027 = vsel %vm2121, %v6026, %v6025
    %v6028 = vperm.slane %v5898, %v2117
    %v6029 = vperm.slane %v5901, %v2119
    %v6030 = vsel %vm2121, %v6029, %v6028
    %v6031 = vperm.slane %v5904, %v2117
    %v6032 = vperm.slane %v5907, %v2119
    %v6033 = vsel %vm2121, %v6032, %v6031
    %v6034 = vperm.slane %v5910, %v2117
    %v6035 = vperm.slane %v5913, %v2119
    %v6036 = vsel %vm2121, %v6035, %v6034
    %v6037 = vperm.slane %v5916, %v2117
    %v6038 = vperm.slane %v5919, %v2119
    %v6039 = vsel %vm2121, %v6038, %v6037
    %v6040 = vperm.slane %v5922, %v2117
    %v6041 = vperm.slane %v5925, %v2119
    %v6042 = vsel %vm2121, %v6041, %v6040
    %v6043 = vperm.slane %v5928, %v2117
    %v6044 = vperm.slane %v5931, %v2119
    %v6045 = vsel %vm2121, %v6044, %v6043
    %v6046 = vperm.slane %v5934, %v2117
    %v6047 = vperm.slane %v5937, %v2119
    %v6048 = vsel %vm2121, %v6047, %v6046
    %v6049 = vperm.slane %v5940, %v2117
    %v6050 = vperm.slane %v5943, %v2119
    %v6051 = vsel %vm2121, %v6050, %v6049
    %v6052 = vperm.slane %v5946, %v2117
    %v6053 = vperm.slane %v5949, %v2119
    %v6054 = vsel %vm2121, %v6053, %v6052
    %v6055 = vperm.slane %v5952, %v2117
    %v6056 = vperm.slane %v5955, %v2119
    %v6057 = vsel %vm2121, %v6056, %v6055
    %v6058 = vperm.slane %v5958, %v2117
    %v6059 = vperm.slane %v5961, %v2119
    %v6060 = vsel %vm2121, %v6059, %v6058
    %v6061 = vperm.slane %v5964, %v2117
    %v6062 = vperm.slane %v5967, %v2119
    %v6063 = vsel %vm2121, %v6062, %v6061
    %v6064 = vsel %vm2216, %v5973, %v5970
    %v6065 = vsel %vm2218, %v5976, %v6064
    %v6066 = vsel %vm2220, %v5979, %v6065
    %v6067 = vsel %vm2222, %v5982, %v6066
    %v6068 = vsel %vm2224, %v5985, %v6067
    %v6069 = vsel %vm2226, %v5988, %v6068
    %v6070 = vsel %vm2228, %v5991, %v6069
    %v6071 = vsel %vm2216, %v5997, %v5994
    %v6072 = vsel %vm2218, %v6000, %v6071
    %v6073 = vsel %vm2220, %v6003, %v6072
    %v6074 = vsel %vm2222, %v6006, %v6073
    %v6075 = vsel %vm2224, %v6009, %v6074
    %v6076 = vsel %vm2226, %v6012, %v6075
    %v6077 = vsel %vm2228, %v6015, %v6076
    %v6078 = vsel %vm2216, %v6021, %v6018
    %v6079 = vsel %vm2218, %v6024, %v6078
    %v6080 = vsel %vm2220, %v6027, %v6079
    %v6081 = vsel %vm2222, %v6030, %v6080
    %v6082 = vsel %vm2224, %v6033, %v6081
    %v6083 = vsel %vm2226, %v6036, %v6082
    %v6084 = vsel %vm2228, %v6039, %v6083
    %v6085 = vsel %vm2216, %v6045, %v6042
    %v6086 = vsel %vm2218, %v6048, %v6085
    %v6087 = vsel %vm2220, %v6051, %v6086
    %v6088 = vsel %vm2222, %v6054, %v6087
    %v6089 = vsel %vm2224, %v6057, %v6088
    %v6090 = vsel %vm2226, %v6060, %v6089
    %v6091 = vsel %vm2228, %v6063, %v6090
    %v6096 = vsel %vm2255, %v6070, 0.0
    %6097 = vadd.xlane.f32.xlu0 %v6096
    %v6098 = vpop.xlane.xlu0 %6097
    %v6099 = vsel %vm2255, %v6077, 0.0
    %6100 = vadd.xlane.f32.xlu0 %v6099
    %v6101 = vpop.xlane.xlu0 %6100
    %v6102 = vsel %vm2255, %v6084, 0.0
    %6103 = vadd.xlane.f32.xlu0 %v6102
    %v6104 = vpop.xlane.xlu0 %6103
    %v6105 = vsel %vm2255, %v6091, 0.0
    %6106 = vadd.xlane.f32.xlu0 %v6105
    %v6107 = vpop.xlane.xlu0 %6106
    %v6108 = vmax.f32 %v6098, 1e-30
    %v6109 = vmax.f32 %v6101, 1e-30
    %v6110 = vmax.f32 %v6104, 1e-30
    %v6111 = vmax.f32 %v6107, 1e-30
    %v6112 = vrcp.pop %v6108
    %v6113 = vrcp.pop %v6109
    %v6114 = vrcp.pop %v6110
    %v6115 = vrcp.pop %v6111
    %v6120 = vperm.slane %v6112, 0
    %v6121 = vperm.slane %v6112, 1
    %v6122 = vperm.slane %v6112, 2
    %v6123 = vperm.slane %v6112, 3
    %v6124 = vperm.slane %v6112, 4
    %v6125 = vperm.slane %v6112, 5
    %v6126 = vperm.slane %v6112, 6
    %v6127 = vperm.slane %v6112, 7
    %v6128 = vperm.slane %v6113, 0
    %v6129 = vperm.slane %v6113, 1
    %v6130 = vperm.slane %v6113, 2
    %v6131 = vperm.slane %v6113, 3
    %v6132 = vperm.slane %v6113, 4
    %v6133 = vperm.slane %v6113, 5
    %v6134 = vperm.slane %v6113, 6
    %v6135 = vperm.slane %v6113, 7
    %v6136 = vperm.slane %v6114, 0
    %v6137 = vperm.slane %v6114, 1
    %v6138 = vperm.slane %v6114, 2
    %v6139 = vperm.slane %v6114, 3
    %v6140 = vperm.slane %v6114, 4
    %v6141 = vperm.slane %v6114, 5
    %v6142 = vperm.slane %v6114, 6
    %v6143 = vperm.slane %v6114, 7
    %v6144 = vperm.slane %v6115, 0
    %v6145 = vperm.slane %v6115, 1
    %v6146 = vperm.slane %v6115, 2
    %v6147 = vperm.slane %v6115, 3
    %v6148 = vperm.slane %v6115, 4
    %v6149 = vperm.slane %v6115, 5
    %v6150 = vperm.slane %v6115, 6
    %v6151 = vperm.slane %v6115, 7
    %v6184 = vmul.f32 %v5648, %v6120
    %v6185 = vmul.f32 %v5649, %v6120
    %v6186 = vmul.f32 %v5650, %v6121
    %v6187 = vmul.f32 %v5651, %v6121
    %v6188 = vmul.f32 %v5652, %v6122
    %v6189 = vmul.f32 %v5653, %v6122
    %v6190 = vmul.f32 %v5654, %v6123
    %v6191 = vmul.f32 %v5655, %v6123
    %v6192 = vmul.f32 %v5656, %v6124
    %v6193 = vmul.f32 %v5657, %v6124
    %v6194 = vmul.f32 %v5658, %v6125
    %v6195 = vmul.f32 %v5659, %v6125
    %v6196 = vmul.f32 %v5660, %v6126
    %v6197 = vmul.f32 %v5661, %v6126
    %v6198 = vmul.f32 %v5662, %v6127
    %v6199 = vmul.f32 %v5663, %v6127
    %v6200 = vmul.f32 %v5664, %v6128
    %v6201 = vmul.f32 %v5665, %v6128
    %v6202 = vmul.f32 %v5666, %v6129
    %v6203 = vmul.f32 %v5667, %v6129
    %v6204 = vmul.f32 %v5668, %v6130
    %v6205 = vmul.f32 %v5669, %v6130
    %v6206 = vmul.f32 %v5670, %v6131
    %v6207 = vmul.f32 %v5671, %v6131
    %v6208 = vmul.f32 %v5672, %v6132
    %v6209 = vmul.f32 %v5673, %v6132
    %v6210 = vmul.f32 %v5674, %v6133
    %v6211 = vmul.f32 %v5675, %v6133
    %v6212 = vmul.f32 %v5676, %v6134
    %v6213 = vmul.f32 %v5677, %v6134
    %v6214 = vmul.f32 %v5678, %v6135
    %v6215 = vmul.f32 %v5679, %v6135
    %v6216 = vmul.f32 %v5680, %v6136
    %v6217 = vmul.f32 %v5681, %v6136
    %v6218 = vmul.f32 %v5682, %v6137
    %v6219 = vmul.f32 %v5683, %v6137
    %v6220 = vmul.f32 %v5684, %v6138
    %v6221 = vmul.f32 %v5685, %v6138
    %v6222 = vmul.f32 %v5686, %v6139
    %v6223 = vmul.f32 %v5687, %v6139
    %v6224 = vmul.f32 %v5688, %v6140
    %v6225 = vmul.f32 %v5689, %v6140
    %v6226 = vmul.f32 %v5690, %v6141
    %v6227 = vmul.f32 %v5691, %v6141
    %v6228 = vmul.f32 %v5692, %v6142
    %v6229 = vmul.f32 %v5693, %v6142
    %v6230 = vmul.f32 %v5694, %v6143
    %v6231 = vmul.f32 %v5695, %v6143
    %v6232 = vmul.f32 %v5696, %v6144
    %v6233 = vmul.f32 %v5697, %v6144
    %v6234 = vmul.f32 %v5698, %v6145
    %v6235 = vmul.f32 %v5699, %v6145
    %v6236 = vmul.f32 %v5700, %v6146
    %v6237 = vmul.f32 %v5701, %v6146
    %v6238 = vmul.f32 %v5702, %v6147
    %v6239 = vmul.f32 %v5703, %v6147
    %v6240 = vmul.f32 %v5704, %v6148
    %v6241 = vmul.f32 %v5705, %v6148
    %v6242 = vmul.f32 %v5706, %v6149
    %v6243 = vmul.f32 %v5707, %v6149
    %v6244 = vmul.f32 %v5708, %v6150
    %v6245 = vmul.f32 %v5709, %v6150
    %v6246 = vmul.f32 %v5710, %v6151
    %v6247 = vmul.f32 %v5711, %v6151
    %6280 = vset.pattern.permute.xlu0 0
    %6281 = vperm.xlu0 %6280, %v6184
    %v6282 = vpop.permute.xlu0 %6281
    %6283 = vset.pattern.permute.xlu0 0
    %6284 = vperm.xlu0 %6283, %v6185
    %v6285 = vpop.permute.xlu0 %6284
    %6286 = vset.pattern.permute.xlu0 0
    %6287 = vperm.xlu0 %6286, %v6186
    %v6288 = vpop.permute.xlu0 %6287
    %6289 = vset.pattern.permute.xlu0 0
    %6290 = vperm.xlu0 %6289, %v6187
    %v6291 = vpop.permute.xlu0 %6290
    %6292 = vset.pattern.permute.xlu0 0
    %6293 = vperm.xlu0 %6292, %v6188
    %v6294 = vpop.permute.xlu0 %6293
    %6295 = vset.pattern.permute.xlu0 0
    %6296 = vperm.xlu0 %6295, %v6189
    %v6297 = vpop.permute.xlu0 %6296
    %6298 = vset.pattern.permute.xlu0 0
    %6299 = vperm.xlu0 %6298, %v6190
    %v6300 = vpop.permute.xlu0 %6299
    %6301 = vset.pattern.permute.xlu0 0
    %6302 = vperm.xlu0 %6301, %v6191
    %v6303 = vpop.permute.xlu0 %6302
    %6304 = vset.pattern.permute.xlu0 0
    %6305 = vperm.xlu0 %6304, %v6192
    %v6306 = vpop.permute.xlu0 %6305
    %6307 = vset.pattern.permute.xlu0 0
    %6308 = vperm.xlu0 %6307, %v6193
    %v6309 = vpop.permute.xlu0 %6308
    %6310 = vset.pattern.permute.xlu0 0
    %6311 = vperm.xlu0 %6310, %v6194
    %v6312 = vpop.permute.xlu0 %6311
    %6313 = vset.pattern.permute.xlu0 0
    %6314 = vperm.xlu0 %6313, %v6195
    %v6315 = vpop.permute.xlu0 %6314
    %6316 = vset.pattern.permute.xlu0 0
    %6317 = vperm.xlu0 %6316, %v6196
    %v6318 = vpop.permute.xlu0 %6317
    %6319 = vset.pattern.permute.xlu0 0
    %6320 = vperm.xlu0 %6319, %v6197
    %v6321 = vpop.permute.xlu0 %6320
    %6322 = vset.pattern.permute.xlu0 0
    %6323 = vperm.xlu0 %6322, %v6198
    %v6324 = vpop.permute.xlu0 %6323
    %6325 = vset.pattern.permute.xlu0 0
    %6326 = vperm.xlu0 %6325, %v6199
    %v6327 = vpop.permute.xlu0 %6326
    %6328 = vset.pattern.permute.xlu0 0
    %6329 = vperm.xlu0 %6328, %v6200
    %v6330 = vpop.permute.xlu0 %6329
    %6331 = vset.pattern.permute.xlu0 0
    %6332 = vperm.xlu0 %6331, %v6201
    %v6333 = vpop.permute.xlu0 %6332
    %6334 = vset.pattern.permute.xlu0 0
    %6335 = vperm.xlu0 %6334, %v6202
    %v6336 = vpop.permute.xlu0 %6335
    %6337 = vset.pattern.permute.xlu0 0
    %6338 = vperm.xlu0 %6337, %v6203
    %v6339 = vpop.permute.xlu0 %6338
    %6340 = vset.pattern.permute.xlu0 0
    %6341 = vperm.xlu0 %6340, %v6204
    %v6342 = vpop.permute.xlu0 %6341
    %6343 = vset.pattern.permute.xlu0 0
    %6344 = vperm.xlu0 %6343, %v6205
    %v6345 = vpop.permute.xlu0 %6344
    %6346 = vset.pattern.permute.xlu0 0
    %6347 = vperm.xlu0 %6346, %v6206
    %v6348 = vpop.permute.xlu0 %6347
    %6349 = vset.pattern.permute.xlu0 0
    %6350 = vperm.xlu0 %6349, %v6207
    %v6351 = vpop.permute.xlu0 %6350
    %6352 = vset.pattern.permute.xlu0 0
    %6353 = vperm.xlu0 %6352, %v6208
    %v6354 = vpop.permute.xlu0 %6353
    %6355 = vset.pattern.permute.xlu0 0
    %6356 = vperm.xlu0 %6355, %v6209
    %v6357 = vpop.permute.xlu0 %6356
    %6358 = vset.pattern.permute.xlu0 0
    %6359 = vperm.xlu0 %6358, %v6210
    %v6360 = vpop.permute.xlu0 %6359
    %6361 = vset.pattern.permute.xlu0 0
    %6362 = vperm.xlu0 %6361, %v6211
    %v6363 = vpop.permute.xlu0 %6362
    %6364 = vset.pattern.permute.xlu0 0
    %6365 = vperm.xlu0 %6364, %v6212
    %v6366 = vpop.permute.xlu0 %6365
    %6367 = vset.pattern.permute.xlu0 0
    %6368 = vperm.xlu0 %6367, %v6213
    %v6369 = vpop.permute.xlu0 %6368
    %6370 = vset.pattern.permute.xlu0 0
    %6371 = vperm.xlu0 %6370, %v6214
    %v6372 = vpop.permute.xlu0 %6371
    %6373 = vset.pattern.permute.xlu0 0
    %6374 = vperm.xlu0 %6373, %v6215
    %v6375 = vpop.permute.xlu0 %6374
    %v6376 = vperm.slane %v6282, %v2117
    %v6377 = vperm.slane %v6285, %v2119
    %v6378 = vsel %vm2121, %v6377, %v6376
    %v6379 = vperm.slane %v6288, %v2117
    %v6380 = vperm.slane %v6291, %v2119
    %v6381 = vsel %vm2121, %v6380, %v6379
    %v6382 = vperm.slane %v6294, %v2117
    %v6383 = vperm.slane %v6297, %v2119
    %v6384 = vsel %vm2121, %v6383, %v6382
    %v6385 = vperm.slane %v6300, %v2117
    %v6386 = vperm.slane %v6303, %v2119
    %v6387 = vsel %vm2121, %v6386, %v6385
    %v6388 = vperm.slane %v6306, %v2117
    %v6389 = vperm.slane %v6309, %v2119
    %v6390 = vsel %vm2121, %v6389, %v6388
    %v6391 = vperm.slane %v6312, %v2117
    %v6392 = vperm.slane %v6315, %v2119
    %v6393 = vsel %vm2121, %v6392, %v6391
    %v6394 = vperm.slane %v6318, %v2117
    %v6395 = vperm.slane %v6321, %v2119
    %v6396 = vsel %vm2121, %v6395, %v6394
    %v6397 = vperm.slane %v6324, %v2117
    %v6398 = vperm.slane %v6327, %v2119
    %v6399 = vsel %vm2121, %v6398, %v6397
    %v6400 = vperm.slane %v6330, %v2117
    %v6401 = vperm.slane %v6333, %v2119
    %v6402 = vsel %vm2121, %v6401, %v6400
    %v6403 = vperm.slane %v6336, %v2117
    %v6404 = vperm.slane %v6339, %v2119
    %v6405 = vsel %vm2121, %v6404, %v6403
    %v6406 = vperm.slane %v6342, %v2117
    %v6407 = vperm.slane %v6345, %v2119
    %v6408 = vsel %vm2121, %v6407, %v6406
    %v6409 = vperm.slane %v6348, %v2117
    %v6410 = vperm.slane %v6351, %v2119
    %v6411 = vsel %vm2121, %v6410, %v6409
    %v6412 = vperm.slane %v6354, %v2117
    %v6413 = vperm.slane %v6357, %v2119
    %v6414 = vsel %vm2121, %v6413, %v6412
    %v6415 = vperm.slane %v6360, %v2117
    %v6416 = vperm.slane %v6363, %v2119
    %v6417 = vsel %vm2121, %v6416, %v6415
    %v6418 = vperm.slane %v6366, %v2117
    %v6419 = vperm.slane %v6369, %v2119
    %v6420 = vsel %vm2121, %v6419, %v6418
    %v6421 = vperm.slane %v6372, %v2117
    %v6422 = vperm.slane %v6375, %v2119
    %v6423 = vsel %vm2121, %v6422, %v6421
    %v6424 = vsel %vm2216, %v6381, %v6378
    %v6425 = vsel %vm2218, %v6384, %v6424
    %v6426 = vsel %vm2220, %v6387, %v6425
    %v6427 = vsel %vm2222, %v6390, %v6426
    %v6428 = vsel %vm2224, %v6393, %v6427
    %v6429 = vsel %vm2226, %v6396, %v6428
    %v6430 = vsel %vm2228, %v6399, %v6429
    %v6431 = vsel %vm2216, %v6405, %v6402
    %v6432 = vsel %vm2218, %v6408, %v6431
    %v6433 = vsel %vm2220, %v6411, %v6432
    %v6434 = vsel %vm2222, %v6414, %v6433
    %v6435 = vsel %vm2224, %v6417, %v6434
    %v6436 = vsel %vm2226, %v6420, %v6435
    %v6437 = vsel %vm2228, %v6423, %v6436
    %v6438 = vsel %vm2255, %v6430, 0
    %v6440 = vsel %vm2255, %v6437, 0
    %6442 = vmatpush.msra.mxu0 0.0
    %6443 = vmatpush.msra.mxu0 0.0
    %6444 = vmatpush.msra.mxu0 0.0
    %6445 = vmatpush.msra.mxu0 0.0
    %6446 = vmatpush.msra.mxu0 0.0
    %6447 = vmatpush.msra.mxu0 0.0
    %6448 = vmatpush.msra.mxu0 0.0
    %6449 = vmatpush.msra.mxu0 0.0
    %6450 = vmatpush.msra.mxu0 0.0
    %6451 = vmatpush.msra.mxu0 0.0
    %6452 = vmatpush.msra.mxu0 0.0
    %6453 = vmatpush.msra.mxu0 0.0
    %6454 = vmatpush.msra.mxu0 0.0
    %6455 = vmatpush.msra.mxu0 0.0
    %6456 = vmatpush.msra.mxu0 %v3905
    %6457 = vmatpush.msra.mxu0 %v3902
    %6458 = vmatmul.f32.gmra.mxu0 %v6438
    %v6459 = vpop.f32.mrf.mxu0
    %v6460 = vadd.f32 0.0, %v6459
    %6461 = vmatmul.f32.gmra.mxu0 %v6440
    %v6462 = vpop.f32.mrf.mxu0
    %v6463 = vadd.f32 0.0, %v6462
    %6464 = vdwg.mxu0
    %6497 = vset.pattern.permute.xlu0 0
    %6498 = vperm.xlu0 %6497, %v6216
    %v6499 = vpop.permute.xlu0 %6498
    %6500 = vset.pattern.permute.xlu0 0
    %6501 = vperm.xlu0 %6500, %v6217
    %v6502 = vpop.permute.xlu0 %6501
    %6503 = vset.pattern.permute.xlu0 0
    %6504 = vperm.xlu0 %6503, %v6218
    %v6505 = vpop.permute.xlu0 %6504
    %6506 = vset.pattern.permute.xlu0 0
    %6507 = vperm.xlu0 %6506, %v6219
    %v6508 = vpop.permute.xlu0 %6507
    %6509 = vset.pattern.permute.xlu0 0
    %6510 = vperm.xlu0 %6509, %v6220
    %v6511 = vpop.permute.xlu0 %6510
    %6512 = vset.pattern.permute.xlu0 0
    %6513 = vperm.xlu0 %6512, %v6221
    %v6514 = vpop.permute.xlu0 %6513
    %6515 = vset.pattern.permute.xlu0 0
    %6516 = vperm.xlu0 %6515, %v6222
    %v6517 = vpop.permute.xlu0 %6516
    %6518 = vset.pattern.permute.xlu0 0
    %6519 = vperm.xlu0 %6518, %v6223
    %v6520 = vpop.permute.xlu0 %6519
    %6521 = vset.pattern.permute.xlu0 0
    %6522 = vperm.xlu0 %6521, %v6224
    %v6523 = vpop.permute.xlu0 %6522
    %6524 = vset.pattern.permute.xlu0 0
    %6525 = vperm.xlu0 %6524, %v6225
    %v6526 = vpop.permute.xlu0 %6525
    %6527 = vset.pattern.permute.xlu0 0
    %6528 = vperm.xlu0 %6527, %v6226
    %v6529 = vpop.permute.xlu0 %6528
    %6530 = vset.pattern.permute.xlu0 0
    %6531 = vperm.xlu0 %6530, %v6227
    %v6532 = vpop.permute.xlu0 %6531
    %6533 = vset.pattern.permute.xlu0 0
    %6534 = vperm.xlu0 %6533, %v6228
    %v6535 = vpop.permute.xlu0 %6534
    %6536 = vset.pattern.permute.xlu0 0
    %6537 = vperm.xlu0 %6536, %v6229
    %v6538 = vpop.permute.xlu0 %6537
    %6539 = vset.pattern.permute.xlu0 0
    %6540 = vperm.xlu0 %6539, %v6230
    %v6541 = vpop.permute.xlu0 %6540
    %6542 = vset.pattern.permute.xlu0 0
    %6543 = vperm.xlu0 %6542, %v6231
    %v6544 = vpop.permute.xlu0 %6543
    %6545 = vset.pattern.permute.xlu0 0
    %6546 = vperm.xlu0 %6545, %v6232
    %v6547 = vpop.permute.xlu0 %6546
    %6548 = vset.pattern.permute.xlu0 0
    %6549 = vperm.xlu0 %6548, %v6233
    %v6550 = vpop.permute.xlu0 %6549
    %6551 = vset.pattern.permute.xlu0 0
    %6552 = vperm.xlu0 %6551, %v6234
    %v6553 = vpop.permute.xlu0 %6552
    %6554 = vset.pattern.permute.xlu0 0
    %6555 = vperm.xlu0 %6554, %v6235
    %v6556 = vpop.permute.xlu0 %6555
    %6557 = vset.pattern.permute.xlu0 0
    %6558 = vperm.xlu0 %6557, %v6236
    %v6559 = vpop.permute.xlu0 %6558
    %6560 = vset.pattern.permute.xlu0 0
    %6561 = vperm.xlu0 %6560, %v6237
    %v6562 = vpop.permute.xlu0 %6561
    %6563 = vset.pattern.permute.xlu0 0
    %6564 = vperm.xlu0 %6563, %v6238
    %v6565 = vpop.permute.xlu0 %6564
    %6566 = vset.pattern.permute.xlu0 0
    %6567 = vperm.xlu0 %6566, %v6239
    %v6568 = vpop.permute.xlu0 %6567
    %6569 = vset.pattern.permute.xlu0 0
    %6570 = vperm.xlu0 %6569, %v6240
    %v6571 = vpop.permute.xlu0 %6570
    %6572 = vset.pattern.permute.xlu0 0
    %6573 = vperm.xlu0 %6572, %v6241
    %v6574 = vpop.permute.xlu0 %6573
    %6575 = vset.pattern.permute.xlu0 0
    %6576 = vperm.xlu0 %6575, %v6242
    %v6577 = vpop.permute.xlu0 %6576
    %6578 = vset.pattern.permute.xlu0 0
    %6579 = vperm.xlu0 %6578, %v6243
    %v6580 = vpop.permute.xlu0 %6579
    %6581 = vset.pattern.permute.xlu0 0
    %6582 = vperm.xlu0 %6581, %v6244
    %v6583 = vpop.permute.xlu0 %6582
    %6584 = vset.pattern.permute.xlu0 0
    %6585 = vperm.xlu0 %6584, %v6245
    %v6586 = vpop.permute.xlu0 %6585
    %6587 = vset.pattern.permute.xlu0 0
    %6588 = vperm.xlu0 %6587, %v6246
    %v6589 = vpop.permute.xlu0 %6588
    %6590 = vset.pattern.permute.xlu0 0
    %6591 = vperm.xlu0 %6590, %v6247
    %v6592 = vpop.permute.xlu0 %6591
    %v6593 = vperm.slane %v6499, %v2117
    %v6594 = vperm.slane %v6502, %v2119
    %v6595 = vsel %vm2121, %v6594, %v6593
    %v6596 = vperm.slane %v6505, %v2117
    %v6597 = vperm.slane %v6508, %v2119
    %v6598 = vsel %vm2121, %v6597, %v6596
    %v6599 = vperm.slane %v6511, %v2117
    %v6600 = vperm.slane %v6514, %v2119
    %v6601 = vsel %vm2121, %v6600, %v6599
    %v6602 = vperm.slane %v6517, %v2117
    %v6603 = vperm.slane %v6520, %v2119
    %v6604 = vsel %vm2121, %v6603, %v6602
    %v6605 = vperm.slane %v6523, %v2117
    %v6606 = vperm.slane %v6526, %v2119
    %v6607 = vsel %vm2121, %v6606, %v6605
    %v6608 = vperm.slane %v6529, %v2117
    %v6609 = vperm.slane %v6532, %v2119
    %v6610 = vsel %vm2121, %v6609, %v6608
    %v6611 = vperm.slane %v6535, %v2117
    %v6612 = vperm.slane %v6538, %v2119
    %v6613 = vsel %vm2121, %v6612, %v6611
    %v6614 = vperm.slane %v6541, %v2117
    %v6615 = vperm.slane %v6544, %v2119
    %v6616 = vsel %vm2121, %v6615, %v6614
    %v6617 = vperm.slane %v6547, %v2117
    %v6618 = vperm.slane %v6550, %v2119
    %v6619 = vsel %vm2121, %v6618, %v6617
    %v6620 = vperm.slane %v6553, %v2117
    %v6621 = vperm.slane %v6556, %v2119
    %v6622 = vsel %vm2121, %v6621, %v6620
    %v6623 = vperm.slane %v6559, %v2117
    %v6624 = vperm.slane %v6562, %v2119
    %v6625 = vsel %vm2121, %v6624, %v6623
    %v6626 = vperm.slane %v6565, %v2117
    %v6627 = vperm.slane %v6568, %v2119
    %v6628 = vsel %vm2121, %v6627, %v6626
    %v6629 = vperm.slane %v6571, %v2117
    %v6630 = vperm.slane %v6574, %v2119
    %v6631 = vsel %vm2121, %v6630, %v6629
    %v6632 = vperm.slane %v6577, %v2117
    %v6633 = vperm.slane %v6580, %v2119
    %v6634 = vsel %vm2121, %v6633, %v6632
    %v6635 = vperm.slane %v6583, %v2117
    %v6636 = vperm.slane %v6586, %v2119
    %v6637 = vsel %vm2121, %v6636, %v6635
    %v6638 = vperm.slane %v6589, %v2117
    %v6639 = vperm.slane %v6592, %v2119
    %v6640 = vsel %vm2121, %v6639, %v6638
    %v6641 = vsel %vm2216, %v6598, %v6595
    %v6642 = vsel %vm2218, %v6601, %v6641
    %v6643 = vsel %vm2220, %v6604, %v6642
    %v6644 = vsel %vm2222, %v6607, %v6643
    %v6645 = vsel %vm2224, %v6610, %v6644
    %v6646 = vsel %vm2226, %v6613, %v6645
    %v6647 = vsel %vm2228, %v6616, %v6646
    %v6648 = vsel %vm2216, %v6622, %v6619
    %v6649 = vsel %vm2218, %v6625, %v6648
    %v6650 = vsel %vm2220, %v6628, %v6649
    %v6651 = vsel %vm2222, %v6631, %v6650
    %v6652 = vsel %vm2224, %v6634, %v6651
    %v6653 = vsel %vm2226, %v6637, %v6652
    %v6654 = vsel %vm2228, %v6640, %v6653
    %v6655 = vsel %vm2255, %v6647, 0
    %v6657 = vsel %vm2255, %v6654, 0
    %6659 = vmatpush.msra.mxu0 0.0
    %6660 = vmatpush.msra.mxu0 0.0
    %6661 = vmatpush.msra.mxu0 0.0
    %6662 = vmatpush.msra.mxu0 0.0
    %6663 = vmatpush.msra.mxu0 0.0
    %6664 = vmatpush.msra.mxu0 0.0
    %6665 = vmatpush.msra.mxu0 0.0
    %6666 = vmatpush.msra.mxu0 0.0
    %6667 = vmatpush.msra.mxu0 0.0
    %6668 = vmatpush.msra.mxu0 0.0
    %6669 = vmatpush.msra.mxu0 0.0
    %6670 = vmatpush.msra.mxu0 0.0
    %6671 = vmatpush.msra.mxu0 0.0
    %6672 = vmatpush.msra.mxu0 0.0
    %6673 = vmatpush.msra.mxu0 %v3928
    %6674 = vmatpush.msra.mxu0 %v3925
    %6675 = vmatmul.f32.gmra.mxu0 %v6655
    %v6676 = vpop.f32.mrf.mxu0
    %v6677 = vadd.f32 0.0, %v6676
    %6678 = vmatmul.f32.gmra.mxu0 %v6657
    %v6679 = vpop.f32.mrf.mxu0
    %v6680 = vadd.f32 0.0, %v6679
    %6681 = vdwg.mxu0
    %v6682 = vadd.f32 %v6460, %v6677
    %v6683 = vadd.f32 %v6463, %v6680
    %v6684 = vmul.f32 %v6682, %v3812
    %v6685 = vmul.f32 %v6683, %v3812
    %v6687 = vperm.slane %v75, 0
    %v6689 = vadd.f32 %v6684, %v6687
    %v6690 = vadd.f32 %v6685, %v6687
    %vm6691 = vcmp.gt.f32.partialorder %v6689, 0.0
    %vm6692 = vcmp.gt.f32.partialorder %v6690, 0.0
    %v6694 = vperm.slane %v76, 0
    %v6696 = vmul.f32 %v6694, %v6689
    %v6697 = vmul.f32 %v6694, %v6690
    %v6698 = vsel %vm6691, %v6689, %v6696
    %v6699 = vsel %vm6692, %v6690, %v6697
    %6700 = vst [vmem:[#allocation2] sm:$0xff] %v6698
    %6701 = vst [vmem:[#allocation2 + $0x8] sm:$0xff] %v6699
    // Predicated region
    $region26: #{encoder_forward.1} parent=1 // pred_check
      _
    $region27: #{encoder_forward.1} parent=1 // pred_check_branch
      %6703 = sbr.rel (0) target = $region29
    $region28: #{encoder_forward.1} parent=1 // pred_region
      %6705 = vsyncadd [#allocation3], 0
      %s6706 = sshll.u32 [#allocation2], 4
      %s6707 = int_to_ptr.vmem [resolvable:$true] %s6706
      %s6708 = sshll.u32 %s6, 4
      %s6709 = int_to_ptr.hbm [resolvable:$true] %s6708
      %6714 = dma.vmem_to_hbm [thread:$0]  %s6707, 256, %s6709, [#allocation3], 128, 128, 8
    $region29: #{encoder_forward.1} parent=1 // pred_fallthru
      _
    // Predicated region
    $region30: #{encoder_forward.1} parent=1 // pred_check
      _
    $region31: #{encoder_forward.1} parent=1 // pred_check_branch
      %6716 = sbr.rel (0) target = $region33
    $region32: #{encoder_forward.1} parent=1 // pred_region
      %6718 = dma.done [#allocation3], 256
    $region33: #{encoder_forward.1} parent=1 // pred_fallthru
      _
    %6719 = vsyncpa [#allocation3], 1

</llo_original>
